<compile_context>
chip_gen: v5e
topology: v5e:2x2
jax: 0.10.0
libtpu: 0.0.40
codegen_flags: <defaults>
</compile_context>

<pallas_src>
import functools

import jax
import jax.numpy as jnp
from jax import lax
from jax.experimental import pallas as pl
from jax.experimental.pallas import tpu as pltpu


# ----------------------------------------------------------------------------
# In-kernel helpers
# ----------------------------------------------------------------------------

def _shift_prev(x):
    """Row i gets x[i-1]; row 0 is zero ('same' padding, left tap)."""
    zero = jnp.zeros((1, x.shape[1]), x.dtype)
    return jnp.concatenate([zero, x[:-1]], axis=0)


def _shift_next(x):
    """Row i gets x[i+1]; last row is zero ('same' padding, right tap)."""
    zero = jnp.zeros((1, x.shape[1]), x.dtype)
    return jnp.concatenate([x[1:], zero], axis=0)


def _downsample2(y):
    """Select even rows (stride-2 subsample) via a tiny selection-matrix matmul."""
    full = y.shape[0]
    half = full // 2
    rows = lax.broadcasted_iota(jnp.int32, (half, full), 0)
    cols = lax.broadcasted_iota(jnp.int32, (half, full), 1)
    sel = (cols == 2 * rows).astype(y.dtype)
    return jnp.dot(sel, y, preferred_element_type=jnp.float32)


# ----------------------------------------------------------------------------
# The fused whole-network kernel (one batch element per grid step)
# ----------------------------------------------------------------------------

def mobilenet_kernel(block_strides, xs_ref, *args):
    """Entire MobileNet1D forward for one batch element, fully VMEM-resident.

    xs_ref : (1, L, 3*Cin)  im2col-stacked input (taps k=0,1,2 along lanes)
    args   : conv1_w, conv1_b,
             [dw_w, dw_b, pw_w, pw_b] x (num depthwise-separable blocks),
             fc_w, fc_b,  o_ref
    """
    o_ref = args[-1]
    it = iter(args[:-1])

    # --- conv1: dense k=3, stride=2, pad=1, fused ReLU, single K=3*Cin matmul ---
    w1 = next(it)   # (3*Cin, C0)
    b1 = next(it)   # (1, C0)
    y = jnp.dot(xs_ref[0], w1[...], preferred_element_type=jnp.float32) + b1[...]
    y = jnp.maximum(y, 0.0)
    y = _downsample2(y)                         # stride=2 folded in-kernel

    # --- depthwise-separable blocks (dw -> [stride] -> pw + ReLU), all fused ---
    for s in block_strides:
        dw_w = next(it)   # (3, 1, C) ref
        dw_b = next(it)   # (1, C)
        pw_w = next(it)   # (C, Cout)
        pw_b = next(it)   # (1, Cout)
        z = (_shift_prev(y) * dw_w[0]
             + y * dw_w[1]
             + _shift_next(y) * dw_w[2]
             + dw_b[...])
        if s == 2:
            z = _downsample2(z)
        y = jnp.maximum(
            jnp.dot(z, pw_w[...], preferred_element_type=jnp.float32) + pw_b[...],
            0.0)

    # --- fused mean-pool + FC: only the (1, num_classes) logits leave VMEM ---
    fc_w = next(it)   # (C_last, num_classes)
    fc_b = next(it)   # (1, num_classes)
    pooled = jnp.mean(y, axis=0, keepdims=True)           # (1, C_last)
    o_ref[0] = jnp.dot(pooled, fc_w[...],
                       preferred_element_type=jnp.float32) + fc_b[...]


# ----------------------------------------------------------------------------
# Wrapper
# ----------------------------------------------------------------------------

def _replicated_spec(shape):
    n = len(shape)
    return pl.BlockSpec(tuple(shape), lambda i, _n=n: (0,) * _n)


def mobilenet1d_forward(x_ncl, params):
    # (B, C, L) -> (B, L, C) channels-last layout.
    x = jnp.transpose(x_ncl, (0, 2, 1)).astype(jnp.float32)
    B, L, Cin = x.shape
    c0 = params["conv1_w"].shape[-1]
    num_classes = params["fc_w"].shape[-1]

    # im2col stack of the network input: lanes = [x[i-1] | x[i] | x[i+1]] (3*Cin).
    xp = jnp.pad(x, ((0, 0), (1, 1), (0, 0)))
    x_stack = jnp.concatenate([xp[:, :-2], xp[:, 1:-1], xp[:, 2:]], axis=-1)

    # Flatten parameters in the order the kernel consumes them.
    flat = [params["conv1_w"].reshape(3 * Cin, c0), params["conv1_b"]]
    block_strides = []
    for blk in params["layers"]:
        for ds, s in ((blk["ds1"], blk["stride"]), (blk["ds2"], 1)):
            block_strides.append(s)
            flat += [ds["dw_w"], ds["dw_b"], ds["pw_w"], ds["pw_b"]]
    flat += [params["fc_w"], params["fc_b"]]

    in_specs = [pl.BlockSpec((1, L, 3 * Cin), lambda i: (i, 0, 0))]
    in_specs += [_replicated_spec(a.shape) for a in flat]

    out = pl.pallas_call(
        functools.partial(mobilenet_kernel, tuple(block_strides)),
        out_shape=jax.ShapeDtypeStruct((B, 1, num_classes), jnp.float32),
        grid=(B,),
        in_specs=in_specs,
        out_specs=pl.BlockSpec((1, 1, num_classes), lambda i: (i, 0, 0)),
        compiler_params=pltpu.CompilerParams(
            dimension_semantics=("parallel",)),   # v7x: shard batch over 2 TCs
    )(x_stack, *flat)
    return out.reshape(B, num_classes)


# ----------------------------------------------------------------------------
# Model: parameter init
# ----------------------------------------------------------------------------

BASE_CHANNELS = [32, 64, 128, 128, 256, 256, 512]


def init_params(key, input_channels, num_classes, width_multiplier):
    channels = [int(c * width_multiplier) for c in BASE_CHANNELS]
    keys = jax.random.split(key, 64)
    kit = iter(range(64))

    def nrm(shape, scale=0.1):
        return (scale * jax.random.normal(keys[next(kit)], shape)).astype(jnp.float32)

    params = {
        "conv1_w": nrm((3, input_channels, channels[0])),
        "conv1_b": nrm((1, channels[0])),
        "layers": [],
        "fc_w": nrm((channels[-1], num_classes)),
        "fc_b": nrm((1, num_classes)),
    }
    for i in range(1, len(channels)):
        cin, cout = channels[i - 1], channels[i]
        stride = 2 if i == 1 else 1
        params["layers"].append({
            "stride": stride,
            "ds1": dict(dw_w=nrm((3, 1, cin)), dw_b=nrm((1, cin)),
                        pw_w=nrm((cin, cout)), pw_b=nrm((1, cout))),
            "ds2": dict(dw_w=nrm((3, 1, cout)), dw_b=nrm((1, cout)),
                        pw_w=nrm((cout, cout)), pw_b=nrm((1, cout))),
        })
    return params


# ----------------------------------------------------------------------------
# Pure-JAX reference (numerical sanity check)
# ----------------------------------------------------------------------------

def _ref_conv3(x, w, b, stride):          # x: (B, L, Cin), w: (3, Cin, Cout)
    xp = jnp.pad(x, ((0, 0), (1, 1), (0, 0)))
    L = x.shape[1]
    Lout = (L + 2 - 3) // stride + 1
    out = 0.0
    for k in range(3):
        xs = lax.slice(xp, (0, k, 0),
                       (xp.shape[0], k + (Lout - 1) * stride + 1, xp.shape[2]),
                       (1, stride, 1))
        out = out + jnp.einsum("blc,cd->bld", xs, w[k])
    return out + b


def _ref_dw3(x, w, b, stride):            # x: (B, L, C), w: (3, 1, C)
    xp = jnp.pad(x, ((0, 0), (1, 1), (0, 0)))
    L = x.shape[1]
    Lout = (L + 2 - 3) // stride + 1
    out = 0.0
    for k in range(3):
        xs = lax.slice(xp, (0, k, 0),
                       (xp.shape[0], k + (Lout - 1) * stride + 1, xp.shape[2]),
                       (1, stride, 1))
        out = out + xs * w[k]
    return out + b


def ref_forward(x_ncl, params):
    x = jnp.transpose(x_ncl, (0, 2, 1)).astype(jnp.float32)
    x = jax.nn.relu(_ref_conv3(x, params["conv1_w"], params["conv1_b"], 2))
    for blk in params["layers"]:
        for ds, s in ((blk["ds1"], blk["stride"]), (blk["ds2"], 1)):
            x = _ref_dw3(x, ds["dw_w"], ds["dw_b"], s)
            x = jax.nn.relu(jnp.einsum("blc,cd->bld", x, ds["pw_w"]) + ds["pw_b"])
    x = jnp.mean(x, axis=1)
    return x @ params["fc_w"] + params["fc_b"]


# ----------------------------------------------------------------------------
# Main
# ----------------------------------------------------------------------------

if __name__ == "__main__":
    key = jax.random.PRNGKey(0)
    k_x, k_p = jax.random.split(key)

    # Small config: MobileNet1D(input_channels=4, num_classes=16, width_multiplier=0.25)
    input_channels, num_classes, width_multiplier = 4, 16, 0.25
    B, L = 2, 64

    x = jax.random.normal(k_x, (B, input_channels, L), dtype=jnp.float32)
    params = init_params(k_p, input_channels, num_classes, width_multiplier)

    out = mobilenet1d_forward(x, params)
    out = jax.block_until_ready(out)
    assert out.shape == (B, num_classes), out.shape

    ref = jax.block_until_ready(ref_forward(x, params))
    if not jnp.allclose(out, ref, atol=1e-2, rtol=1e-2):
        raise AssertionError(
            f"mismatch vs reference: max abs diff {float(jnp.max(jnp.abs(out - ref)))}")

    print("KERNEL_OK")
</pallas_src>

<mosaic_0001>
module attributes {stable_mosaic.version = 11 : i64} {
  func.func @mobilenet_kernel(%arg0: i32, %arg1: memref<1x64x12xf32, #tpu.memory_space<vmem>>, %arg2: memref<12x8xf32, #tpu.memory_space<vmem>>, %arg3: memref<1x8xf32, #tpu.memory_space<vmem>>, %arg4: memref<3x1x8xf32, #tpu.memory_space<vmem>>, %arg5: memref<1x8xf32, #tpu.memory_space<vmem>>, %arg6: memref<8x16xf32, #tpu.memory_space<vmem>>, %arg7: memref<1x16xf32, #tpu.memory_space<vmem>>, %arg8: memref<3x1x16xf32, #tpu.memory_space<vmem>>, %arg9: memref<1x16xf32, #tpu.memory_space<vmem>>, %arg10: memref<16x16xf32, #tpu.memory_space<vmem>>, %arg11: memref<1x16xf32, #tpu.memory_space<vmem>>, %arg12: memref<3x1x16xf32, #tpu.memory_space<vmem>>, %arg13: memref<1x16xf32, #tpu.memory_space<vmem>>, %arg14: memref<16x32xf32, #tpu.memory_space<vmem>>, %arg15: memref<1x32xf32, #tpu.memory_space<vmem>>, %arg16: memref<3x1x32xf32, #tpu.memory_space<vmem>>, %arg17: memref<1x32xf32, #tpu.memory_space<vmem>>, %arg18: memref<32x32xf32, #tpu.memory_space<vmem>>, %arg19: memref<1x32xf32, #tpu.memory_space<vmem>>, %arg20: memref<3x1x32xf32, #tpu.memory_space<vmem>>, %arg21: memref<1x32xf32, #tpu.memory_space<vmem>>, %arg22: memref<32x32xf32, #tpu.memory_space<vmem>>, %arg23: memref<1x32xf32, #tpu.memory_space<vmem>>, %arg24: memref<3x1x32xf32, #tpu.memory_space<vmem>>, %arg25: memref<1x32xf32, #tpu.memory_space<vmem>>, %arg26: memref<32x32xf32, #tpu.memory_space<vmem>>, %arg27: memref<1x32xf32, #tpu.memory_space<vmem>>, %arg28: memref<3x1x32xf32, #tpu.memory_space<vmem>>, %arg29: memref<1x32xf32, #tpu.memory_space<vmem>>, %arg30: memref<32x64xf32, #tpu.memory_space<vmem>>, %arg31: memref<1x64xf32, #tpu.memory_space<vmem>>, %arg32: memref<3x1x64xf32, #tpu.memory_space<vmem>>, %arg33: memref<1x64xf32, #tpu.memory_space<vmem>>, %arg34: memref<64x64xf32, #tpu.memory_space<vmem>>, %arg35: memref<1x64xf32, #tpu.memory_space<vmem>>, %arg36: memref<3x1x64xf32, #tpu.memory_space<vmem>>, %arg37: memref<1x64xf32, #tpu.memory_space<vmem>>, %arg38: memref<64x64xf32, #tpu.memory_space<vmem>>, %arg39: memref<1x64xf32, #tpu.memory_space<vmem>>, %arg40: memref<3x1x64xf32, #tpu.memory_space<vmem>>, %arg41: memref<1x64xf32, #tpu.memory_space<vmem>>, %arg42: memref<64x64xf32, #tpu.memory_space<vmem>>, %arg43: memref<1x64xf32, #tpu.memory_space<vmem>>, %arg44: memref<3x1x64xf32, #tpu.memory_space<vmem>>, %arg45: memref<1x64xf32, #tpu.memory_space<vmem>>, %arg46: memref<64x128xf32, #tpu.memory_space<vmem>>, %arg47: memref<1x128xf32, #tpu.memory_space<vmem>>, %arg48: memref<3x1x128xf32, #tpu.memory_space<vmem>>, %arg49: memref<1x128xf32, #tpu.memory_space<vmem>>, %arg50: memref<128x128xf32, #tpu.memory_space<vmem>>, %arg51: memref<1x128xf32, #tpu.memory_space<vmem>>, %arg52: memref<128x16xf32, #tpu.memory_space<vmem>>, %arg53: memref<1x16xf32, #tpu.memory_space<vmem>>, %arg54: memref<1x1x16xf32, #tpu.memory_space<vmem>>) attributes {dimension_semantics = [#tpu.dimension_semantics<parallel>], iteration_bounds = array<i64: 2>, scalar_prefetch = 0 : i64, scratch_operands = 0 : i64, tpu.core_type = #tpu.core_type<tc>, window_params = [{transform_indices = @transform_0, window_bounds = array<i64: 1, 64, 12>}, {pipeline_mode = #tpu.pipeline_mode<synchronous>, transform_indices = @transform_1, window_bounds = array<i64: 12, 8>}, {pipeline_mode = #tpu.pipeline_mode<synchronous>, transform_indices = @transform_2, window_bounds = array<i64: 1, 8>}, {pipeline_mode = #tpu.pipeline_mode<synchronous>, transform_indices = @transform_3, window_bounds = array<i64: 3, 1, 8>}, {pipeline_mode = #tpu.pipeline_mode<synchronous>, transform_indices = @transform_4, window_bounds = array<i64: 1, 8>}, {pipeline_mode = #tpu.pipeline_mode<synchronous>, transform_indices = @transform_5, window_bounds = array<i64: 8, 16>}, {pipeline_mode = #tpu.pipeline_mode<synchronous>, transform_indices = @transform_6, window_bounds = array<i64: 1, 16>}, {pipeline_mode = #tpu.pipeline_mode<synchronous>, transform_indices = @transform_7, window_bounds = array<i64: 3, 1, 16>}, {pipeline_mode = #tpu.pipeline_mode<synchronous>, transform_indices = @transform_8, window_bounds = array<i64: 1, 16>}, {pipeline_mode = #tpu.pipeline_mode<synchronous>, transform_indices = @transform_9, window_bounds = array<i64: 16, 16>}, {pipeline_mode = #tpu.pipeline_mode<synchronous>, transform_indices = @transform_10, window_bounds = array<i64: 1, 16>}, {pipeline_mode = #tpu.pipeline_mode<synchronous>, transform_indices = @transform_11, window_bounds = array<i64: 3, 1, 16>}, {pipeline_mode = #tpu.pipeline_mode<synchronous>, transform_indices = @transform_12, window_bounds = array<i64: 1, 16>}, {pipeline_mode = #tpu.pipeline_mode<synchronous>, transform_indices = @transform_13, window_bounds = array<i64: 16, 32>}, {pipeline_mode = #tpu.pipeline_mode<synchronous>, transform_indices = @transform_14, window_bounds = array<i64: 1, 32>}, {pipeline_mode = #tpu.pipeline_mode<synchronous>, transform_indices = @transform_15, window_bounds = array<i64: 3, 1, 32>}, {pipeline_mode = #tpu.pipeline_mode<synchronous>, transform_indices = @transform_16, window_bounds = array<i64: 1, 32>}, {pipeline_mode = #tpu.pipeline_mode<synchronous>, transform_indices = @transform_17, window_bounds = array<i64: 32, 32>}, {pipeline_mode = #tpu.pipeline_mode<synchronous>, transform_indices = @transform_18, window_bounds = array<i64: 1, 32>}, {pipeline_mode = #tpu.pipeline_mode<synchronous>, transform_indices = @transform_19, window_bounds = array<i64: 3, 1, 32>}, {pipeline_mode = #tpu.pipeline_mode<synchronous>, transform_indices = @transform_20, window_bounds = array<i64: 1, 32>}, {pipeline_mode = #tpu.pipeline_mode<synchronous>, transform_indices = @transform_21, window_bounds = array<i64: 32, 32>}, {pipeline_mode = #tpu.pipeline_mode<synchronous>, transform_indices = @transform_22, window_bounds = array<i64: 1, 32>}, {pipeline_mode = #tpu.pipeline_mode<synchronous>, transform_indices = @transform_23, window_bounds = array<i64: 3, 1, 32>}, {pipeline_mode = #tpu.pipeline_mode<synchronous>, transform_indices = @transform_24, window_bounds = array<i64: 1, 32>}, {pipeline_mode = #tpu.pipeline_mode<synchronous>, transform_indices = @transform_25, window_bounds = array<i64: 32, 32>}, {pipeline_mode = #tpu.pipeline_mode<synchronous>, transform_indices = @transform_26, window_bounds = array<i64: 1, 32>}, {pipeline_mode = #tpu.pipeline_mode<synchronous>, transform_indices = @transform_27, window_bounds = array<i64: 3, 1, 32>}, {pipeline_mode = #tpu.pipeline_mode<synchronous>, transform_indices = @transform_28, window_bounds = array<i64: 1, 32>}, {pipeline_mode = #tpu.pipeline_mode<synchronous>, transform_indices = @transform_29, window_bounds = array<i64: 32, 64>}, {pipeline_mode = #tpu.pipeline_mode<synchronous>, transform_indices = @transform_30, window_bounds = array<i64: 1, 64>}, {pipeline_mode = #tpu.pipeline_mode<synchronous>, transform_indices = @transform_31, window_bounds = array<i64: 3, 1, 64>}, {pipeline_mode = #tpu.pipeline_mode<synchronous>, transform_indices = @transform_32, window_bounds = array<i64: 1, 64>}, {pipeline_mode = #tpu.pipeline_mode<synchronous>, transform_indices = @transform_33, window_bounds = array<i64: 64, 64>}, {pipeline_mode = #tpu.pipeline_mode<synchronous>, transform_indices = @transform_34, window_bounds = array<i64: 1, 64>}, {pipeline_mode = #tpu.pipeline_mode<synchronous>, transform_indices = @transform_35, window_bounds = array<i64: 3, 1, 64>}, {pipeline_mode = #tpu.pipeline_mode<synchronous>, transform_indices = @transform_36, window_bounds = array<i64: 1, 64>}, {pipeline_mode = #tpu.pipeline_mode<synchronous>, transform_indices = @transform_37, window_bounds = array<i64: 64, 64>}, {pipeline_mode = #tpu.pipeline_mode<synchronous>, transform_indices = @transform_38, window_bounds = array<i64: 1, 64>}, {pipeline_mode = #tpu.pipeline_mode<synchronous>, transform_indices = @transform_39, window_bounds = array<i64: 3, 1, 64>}, {pipeline_mode = #tpu.pipeline_mode<synchronous>, transform_indices = @transform_40, window_bounds = array<i64: 1, 64>}, {pipeline_mode = #tpu.pipeline_mode<synchronous>, transform_indices = @transform_41, window_bounds = array<i64: 64, 64>}, {pipeline_mode = #tpu.pipeline_mode<synchronous>, transform_indices = @transform_42, window_bounds = array<i64: 1, 64>}, {pipeline_mode = #tpu.pipeline_mode<synchronous>, transform_indices = @transform_43, window_bounds = array<i64: 3, 1, 64>}, {pipeline_mode = #tpu.pipeline_mode<synchronous>, transform_indices = @transform_44, window_bounds = array<i64: 1, 64>}, {pipeline_mode = #tpu.pipeline_mode<synchronous>, transform_indices = @transform_45, window_bounds = array<i64: 64, 128>}, {pipeline_mode = #tpu.pipeline_mode<synchronous>, transform_indices = @transform_46, window_bounds = array<i64: 1, 128>}, {pipeline_mode = #tpu.pipeline_mode<synchronous>, transform_indices = @transform_47, window_bounds = array<i64: 3, 1, 128>}, {pipeline_mode = #tpu.pipeline_mode<synchronous>, transform_indices = @transform_48, window_bounds = array<i64: 1, 128>}, {pipeline_mode = #tpu.pipeline_mode<synchronous>, transform_indices = @transform_49, window_bounds = array<i64: 128, 128>}, {pipeline_mode = #tpu.pipeline_mode<synchronous>, transform_indices = @transform_50, window_bounds = array<i64: 1, 128>}, {pipeline_mode = #tpu.pipeline_mode<synchronous>, transform_indices = @transform_51, window_bounds = array<i64: 128, 16>}, {pipeline_mode = #tpu.pipeline_mode<synchronous>, transform_indices = @transform_52, window_bounds = array<i64: 1, 16>}, {transform_indices = @transform_53, window_bounds = array<i64: 1, 1, 16>}]} {
    %c0 = arith.constant 0 : index
    %c0_0 = arith.constant 0 : index
    %c0_1 = arith.constant 0 : index
    %0 = vector.load %arg1[%c0, %c0_0, %c0_1] : memref<1x64x12xf32, #tpu.memory_space<vmem>>, vector<1x64x12xf32>
    %1 = vector.shape_cast %0 : vector<1x64x12xf32> to vector<64x12xf32>
    %c0_2 = arith.constant 0 : index
    %c0_3 = arith.constant 0 : index
    %2 = vector.load %arg2[%c0_2, %c0_3] : memref<12x8xf32, #tpu.memory_space<vmem>>, vector<12x8xf32>
    %cst = arith.constant dense<0.000000e+00> : vector<64x8xf32>
    %3 = tpu.matmul %1, %2, %cst {dimension_numbers = #tpu.dot_dimension_numbers<[1], [0], [0], [1], [0, 0, 1, 1], [], []>} : vector<64x12xf32>, vector<12x8xf32>, vector<64x8xf32> -> vector<64x8xf32>
    %c0_4 = arith.constant 0 : index
    %c0_5 = arith.constant 0 : index
    %4 = vector.load %arg3[%c0_4, %c0_5] : memref<1x8xf32, #tpu.memory_space<vmem>>, vector<1x8xf32>
    %5 = vector.broadcast %4 : vector<1x8xf32> to vector<64x8xf32>
    %6 = arith.addf %3, %5 : vector<64x8xf32>
    %cst_6 = arith.constant 0.000000e+00 : f32
    %7 = vector.broadcast %cst_6 : f32 to vector<64x8xf32>
    %8 = arith.maximumf %6, %7 : vector<64x8xf32>
    %9 = tpu.iota {dimensions = array<i32: 0>} : vector<32x64xi32>
    %10 = tpu.iota {dimensions = array<i32: 1>} : vector<32x64xi32>
    %c2_i32 = arith.constant 2 : i32
    %11 = vector.broadcast %c2_i32 : i32 to vector<32x64xi32>
    %12 = arith.muli %11, %9 : vector<32x64xi32>
    %13 = arith.cmpi eq, %10, %12 : vector<32x64xi32>
    %14 = arith.extui %13 : vector<32x64xi1> to vector<32x64xi32>
    %15 = arith.sitofp %14 : vector<32x64xi32> to vector<32x64xf32>
    %cst_7 = arith.constant dense<0.000000e+00> : vector<32x8xf32>
    %16 = tpu.matmul %15, %8, %cst_7 {dimension_numbers = #tpu.dot_dimension_numbers<[1], [0], [0], [1], [0, 0, 1, 1], [], []>} : vector<32x64xf32>, vector<64x8xf32>, vector<32x8xf32> -> vector<32x8xf32>
    %cst_8 = arith.constant 0.000000e+00 : f32
    %17 = vector.broadcast %cst_8 : f32 to vector<1x8xf32>
    %18 = vector.extract_strided_slice %16 {offsets = [0, 0], sizes = [31, 8], strides = [1, 1]} : vector<32x8xf32> to vector<31x8xf32>
    %19 = tpu.concatenate %17, %18 in 0 : vector<1x8xf32>, vector<31x8xf32> -> vector<32x8xf32>
    %c0_9 = arith.constant 0 : index
    %c0_10 = arith.constant 0 : index
    %c0_11 = arith.constant 0 : index
    %20 = vector.load %arg4[%c0_9, %c0_10, %c0_11] : memref<3x1x8xf32, #tpu.memory_space<vmem>>, vector<1x1x8xf32>
    %21 = vector.shape_cast %20 : vector<1x1x8xf32> to vector<1x8xf32>
    %22 = vector.broadcast %21 : vector<1x8xf32> to vector<32x8xf32>
    %23 = arith.mulf %19, %22 : vector<32x8xf32>
    %c1 = arith.constant 1 : index
    %c0_12 = arith.constant 0 : index
    %c0_13 = arith.constant 0 : index
    %24 = vector.load %arg4[%c1, %c0_12, %c0_13] : memref<3x1x8xf32, #tpu.memory_space<vmem>>, vector<1x1x8xf32>
    %25 = vector.shape_cast %24 : vector<1x1x8xf32> to vector<1x8xf32>
    %26 = vector.broadcast %25 : vector<1x8xf32> to vector<32x8xf32>
    %27 = arith.mulf %16, %26 : vector<32x8xf32>
    %28 = arith.addf %23, %27 : vector<32x8xf32>
    %cst_14 = arith.constant 0.000000e+00 : f32
    %29 = vector.broadcast %cst_14 : f32 to vector<1x8xf32>
    %30 = vector.extract_strided_slice %16 {offsets = [1, 0], sizes = [31, 8], strides = [1, 1]} : vector<32x8xf32> to vector<31x8xf32>
    %31 = tpu.concatenate %30, %29 in 0 : vector<31x8xf32>, vector<1x8xf32> -> vector<32x8xf32>
    %c2 = arith.constant 2 : index
    %c0_15 = arith.constant 0 : index
    %c0_16 = arith.constant 0 : index
    %32 = vector.load %arg4[%c2, %c0_15, %c0_16] : memref<3x1x8xf32, #tpu.memory_space<vmem>>, vector<1x1x8xf32>
    %33 = vector.shape_cast %32 : vector<1x1x8xf32> to vector<1x8xf32>
    %34 = vector.broadcast %33 : vector<1x8xf32> to vector<32x8xf32>
    %35 = arith.mulf %31, %34 : vector<32x8xf32>
    %36 = arith.addf %28, %35 : vector<32x8xf32>
    %c0_17 = arith.constant 0 : index
    %c0_18 = arith.constant 0 : index
    %37 = vector.load %arg5[%c0_17, %c0_18] : memref<1x8xf32, #tpu.memory_space<vmem>>, vector<1x8xf32>
    %38 = vector.broadcast %37 : vector<1x8xf32> to vector<32x8xf32>
    %39 = arith.addf %36, %38 : vector<32x8xf32>
    %40 = tpu.iota {dimensions = array<i32: 0>} : vector<16x32xi32>
    %41 = tpu.iota {dimensions = array<i32: 1>} : vector<16x32xi32>
    %c2_i32_19 = arith.constant 2 : i32
    %42 = vector.broadcast %c2_i32_19 : i32 to vector<16x32xi32>
    %43 = arith.muli %42, %40 : vector<16x32xi32>
    %44 = arith.cmpi eq, %41, %43 : vector<16x32xi32>
    %45 = arith.extui %44 : vector<16x32xi1> to vector<16x32xi32>
    %46 = arith.sitofp %45 : vector<16x32xi32> to vector<16x32xf32>
    %cst_20 = arith.constant dense<0.000000e+00> : vector<16x8xf32>
    %47 = tpu.matmul %46, %39, %cst_20 {dimension_numbers = #tpu.dot_dimension_numbers<[1], [0], [0], [1], [0, 0, 1, 1], [], []>} : vector<16x32xf32>, vector<32x8xf32>, vector<16x8xf32> -> vector<16x8xf32>
    %c0_21 = arith.constant 0 : index
    %c0_22 = arith.constant 0 : index
    %48 = vector.load %arg6[%c0_21, %c0_22] : memref<8x16xf32, #tpu.memory_space<vmem>>, vector<8x16xf32>
    %cst_23 = arith.constant dense<0.000000e+00> : vector<16x16xf32>
    %49 = tpu.matmul %47, %48, %cst_23 {dimension_numbers = #tpu.dot_dimension_numbers<[1], [0], [0], [1], [0, 0, 1, 1], [], []>} : vector<16x8xf32>, vector<8x16xf32>, vector<16x16xf32> -> vector<16x16xf32>
    %c0_24 = arith.constant 0 : index
    %c0_25 = arith.constant 0 : index
    %50 = vector.load %arg7[%c0_24, %c0_25] : memref<1x16xf32, #tpu.memory_space<vmem>>, vector<1x16xf32>
    %51 = vector.broadcast %50 : vector<1x16xf32> to vector<16x16xf32>
    %52 = arith.addf %49, %51 : vector<16x16xf32>
    %cst_26 = arith.constant 0.000000e+00 : f32
    %53 = vector.broadcast %cst_26 : f32 to vector<16x16xf32>
    %54 = arith.maximumf %52, %53 : vector<16x16xf32>
    %cst_27 = arith.constant 0.000000e+00 : f32
    %55 = vector.broadcast %cst_27 : f32 to vector<1x16xf32>
    %56 = vector.extract_strided_slice %54 {offsets = [0, 0], sizes = [15, 16], strides = [1, 1]} : vector<16x16xf32> to vector<15x16xf32>
    %57 = tpu.concatenate %55, %56 in 0 : vector<1x16xf32>, vector<15x16xf32> -> vector<16x16xf32>
    %c0_28 = arith.constant 0 : index
    %c0_29 = arith.constant 0 : index
    %c0_30 = arith.constant 0 : index
    %58 = vector.load %arg8[%c0_28, %c0_29, %c0_30] : memref<3x1x16xf32, #tpu.memory_space<vmem>>, vector<1x1x16xf32>
    %59 = vector.shape_cast %58 : vector<1x1x16xf32> to vector<1x16xf32>
    %60 = vector.broadcast %59 : vector<1x16xf32> to vector<16x16xf32>
    %61 = arith.mulf %57, %60 : vector<16x16xf32>
    %c1_31 = arith.constant 1 : index
    %c0_32 = arith.constant 0 : index
    %c0_33 = arith.constant 0 : index
    %62 = vector.load %arg8[%c1_31, %c0_32, %c0_33] : memref<3x1x16xf32, #tpu.memory_space<vmem>>, vector<1x1x16xf32>
    %63 = vector.shape_cast %62 : vector<1x1x16xf32> to vector<1x16xf32>
    %64 = vector.broadcast %63 : vector<1x16xf32> to vector<16x16xf32>
    %65 = arith.mulf %54, %64 : vector<16x16xf32>
    %66 = arith.addf %61, %65 : vector<16x16xf32>
    %cst_34 = arith.constant 0.000000e+00 : f32
    %67 = vector.broadcast %cst_34 : f32 to vector<1x16xf32>
    %68 = vector.extract_strided_slice %54 {offsets = [1, 0], sizes = [15, 16], strides = [1, 1]} : vector<16x16xf32> to vector<15x16xf32>
    %69 = tpu.concatenate %68, %67 in 0 : vector<15x16xf32>, vector<1x16xf32> -> vector<16x16xf32>
    %c2_35 = arith.constant 2 : index
    %c0_36 = arith.constant 0 : index
    %c0_37 = arith.constant 0 : index
    %70 = vector.load %arg8[%c2_35, %c0_36, %c0_37] : memref<3x1x16xf32, #tpu.memory_space<vmem>>, vector<1x1x16xf32>
    %71 = vector.shape_cast %70 : vector<1x1x16xf32> to vector<1x16xf32>
    %72 = vector.broadcast %71 : vector<1x16xf32> to vector<16x16xf32>
    %73 = arith.mulf %69, %72 : vector<16x16xf32>
    %74 = arith.addf %66, %73 : vector<16x16xf32>
    %c0_38 = arith.constant 0 : index
    %c0_39 = arith.constant 0 : index
    %75 = vector.load %arg9[%c0_38, %c0_39] : memref<1x16xf32, #tpu.memory_space<vmem>>, vector<1x16xf32>
    %76 = vector.broadcast %75 : vector<1x16xf32> to vector<16x16xf32>
    %77 = arith.addf %74, %76 : vector<16x16xf32>
    %c0_40 = arith.constant 0 : index
    %c0_41 = arith.constant 0 : index
    %78 = vector.load %arg10[%c0_40, %c0_41] : memref<16x16xf32, #tpu.memory_space<vmem>>, vector<16x16xf32>
    %cst_42 = arith.constant dense<0.000000e+00> : vector<16x16xf32>
    %79 = tpu.matmul %77, %78, %cst_42 {dimension_numbers = #tpu.dot_dimension_numbers<[1], [0], [0], [1], [0, 0, 1, 1], [], []>} : vector<16x16xf32>, vector<16x16xf32>, vector<16x16xf32> -> vector<16x16xf32>
    %c0_43 = arith.constant 0 : index
    %c0_44 = arith.constant 0 : index
    %80 = vector.load %arg11[%c0_43, %c0_44] : memref<1x16xf32, #tpu.memory_space<vmem>>, vector<1x16xf32>
    %81 = vector.broadcast %80 : vector<1x16xf32> to vector<16x16xf32>
    %82 = arith.addf %79, %81 : vector<16x16xf32>
    %cst_45 = arith.constant 0.000000e+00 : f32
    %83 = vector.broadcast %cst_45 : f32 to vector<16x16xf32>
    %84 = arith.maximumf %82, %83 : vector<16x16xf32>
    %cst_46 = arith.constant 0.000000e+00 : f32
    %85 = vector.broadcast %cst_46 : f32 to vector<1x16xf32>
    %86 = vector.extract_strided_slice %84 {offsets = [0, 0], sizes = [15, 16], strides = [1, 1]} : vector<16x16xf32> to vector<15x16xf32>
    %87 = tpu.concatenate %85, %86 in 0 : vector<1x16xf32>, vector<15x16xf32> -> vector<16x16xf32>
    %c0_47 = arith.constant 0 : index
    %c0_48 = arith.constant 0 : index
    %c0_49 = arith.constant 0 : index
    %88 = vector.load %arg12[%c0_47, %c0_48, %c0_49] : memref<3x1x16xf32, #tpu.memory_space<vmem>>, vector<1x1x16xf32>
    %89 = vector.shape_cast %88 : vector<1x1x16xf32> to vector<1x16xf32>
    %90 = vector.broadcast %89 : vector<1x16xf32> to vector<16x16xf32>
    %91 = arith.mulf %87, %90 : vector<16x16xf32>
    %c1_50 = arith.constant 1 : index
    %c0_51 = arith.constant 0 : index
    %c0_52 = arith.constant 0 : index
    %92 = vector.load %arg12[%c1_50, %c0_51, %c0_52] : memref<3x1x16xf32, #tpu.memory_space<vmem>>, vector<1x1x16xf32>
    %93 = vector.shape_cast %92 : vector<1x1x16xf32> to vector<1x16xf32>
    %94 = vector.broadcast %93 : vector<1x16xf32> to vector<16x16xf32>
    %95 = arith.mulf %84, %94 : vector<16x16xf32>
    %96 = arith.addf %91, %95 : vector<16x16xf32>
    %cst_53 = arith.constant 0.000000e+00 : f32
    %97 = vector.broadcast %cst_53 : f32 to vector<1x16xf32>
    %98 = vector.extract_strided_slice %84 {offsets = [1, 0], sizes = [15, 16], strides = [1, 1]} : vector<16x16xf32> to vector<15x16xf32>
    %99 = tpu.concatenate %98, %97 in 0 : vector<15x16xf32>, vector<1x16xf32> -> vector<16x16xf32>
    %c2_54 = arith.constant 2 : index
    %c0_55 = arith.constant 0 : index
    %c0_56 = arith.constant 0 : index
    %100 = vector.load %arg12[%c2_54, %c0_55, %c0_56] : memref<3x1x16xf32, #tpu.memory_space<vmem>>, vector<1x1x16xf32>
    %101 = vector.shape_cast %100 : vector<1x1x16xf32> to vector<1x16xf32>
    %102 = vector.broadcast %101 : vector<1x16xf32> to vector<16x16xf32>
    %103 = arith.mulf %99, %102 : vector<16x16xf32>
    %104 = arith.addf %96, %103 : vector<16x16xf32>
    %c0_57 = arith.constant 0 : index
    %c0_58 = arith.constant 0 : index
    %105 = vector.load %arg13[%c0_57, %c0_58] : memref<1x16xf32, #tpu.memory_space<vmem>>, vector<1x16xf32>
    %106 = vector.broadcast %105 : vector<1x16xf32> to vector<16x16xf32>
    %107 = arith.addf %104, %106 : vector<16x16xf32>
    %c0_59 = arith.constant 0 : index
    %c0_60 = arith.constant 0 : index
    %108 = vector.load %arg14[%c0_59, %c0_60] : memref<16x32xf32, #tpu.memory_space<vmem>>, vector<16x32xf32>
    %cst_61 = arith.constant dense<0.000000e+00> : vector<16x32xf32>
    %109 = tpu.matmul %107, %108, %cst_61 {dimension_numbers = #tpu.dot_dimension_numbers<[1], [0], [0], [1], [0, 0, 1, 1], [], []>} : vector<16x16xf32>, vector<16x32xf32>, vector<16x32xf32> -> vector<16x32xf32>
    %c0_62 = arith.constant 0 : index
    %c0_63 = arith.constant 0 : index
    %110 = vector.load %arg15[%c0_62, %c0_63] : memref<1x32xf32, #tpu.memory_space<vmem>>, vector<1x32xf32>
    %111 = vector.broadcast %110 : vector<1x32xf32> to vector<16x32xf32>
    %112 = arith.addf %109, %111 : vector<16x32xf32>
    %cst_64 = arith.constant 0.000000e+00 : f32
    %113 = vector.broadcast %cst_64 : f32 to vector<16x32xf32>
    %114 = arith.maximumf %112, %113 : vector<16x32xf32>
    %cst_65 = arith.constant 0.000000e+00 : f32
    %115 = vector.broadcast %cst_65 : f32 to vector<1x32xf32>
    %116 = vector.extract_strided_slice %114 {offsets = [0, 0], sizes = [15, 32], strides = [1, 1]} : vector<16x32xf32> to vector<15x32xf32>
    %117 = tpu.concatenate %115, %116 in 0 : vector<1x32xf32>, vector<15x32xf32> -> vector<16x32xf32>
    %c0_66 = arith.constant 0 : index
    %c0_67 = arith.constant 0 : index
    %c0_68 = arith.constant 0 : index
    %118 = vector.load %arg16[%c0_66, %c0_67, %c0_68] : memref<3x1x32xf32, #tpu.memory_space<vmem>>, vector<1x1x32xf32>
    %119 = vector.shape_cast %118 : vector<1x1x32xf32> to vector<1x32xf32>
    %120 = vector.broadcast %119 : vector<1x32xf32> to vector<16x32xf32>
    %121 = arith.mulf %117, %120 : vector<16x32xf32>
    %c1_69 = arith.constant 1 : index
    %c0_70 = arith.constant 0 : index
    %c0_71 = arith.constant 0 : index
    %122 = vector.load %arg16[%c1_69, %c0_70, %c0_71] : memref<3x1x32xf32, #tpu.memory_space<vmem>>, vector<1x1x32xf32>
    %123 = vector.shape_cast %122 : vector<1x1x32xf32> to vector<1x32xf32>
    %124 = vector.broadcast %123 : vector<1x32xf32> to vector<16x32xf32>
    %125 = arith.mulf %114, %124 : vector<16x32xf32>
    %126 = arith.addf %121, %125 : vector<16x32xf32>
    %cst_72 = arith.constant 0.000000e+00 : f32
    %127 = vector.broadcast %cst_72 : f32 to vector<1x32xf32>
    %128 = vector.extract_strided_slice %114 {offsets = [1, 0], sizes = [15, 32], strides = [1, 1]} : vector<16x32xf32> to vector<15x32xf32>
    %129 = tpu.concatenate %128, %127 in 0 : vector<15x32xf32>, vector<1x32xf32> -> vector<16x32xf32>
    %c2_73 = arith.constant 2 : index
    %c0_74 = arith.constant 0 : index
    %c0_75 = arith.constant 0 : index
    %130 = vector.load %arg16[%c2_73, %c0_74, %c0_75] : memref<3x1x32xf32, #tpu.memory_space<vmem>>, vector<1x1x32xf32>
    %131 = vector.shape_cast %130 : vector<1x1x32xf32> to vector<1x32xf32>
    %132 = vector.broadcast %131 : vector<1x32xf32> to vector<16x32xf32>
    %133 = arith.mulf %129, %132 : vector<16x32xf32>
    %134 = arith.addf %126, %133 : vector<16x32xf32>
    %c0_76 = arith.constant 0 : index
    %c0_77 = arith.constant 0 : index
    %135 = vector.load %arg17[%c0_76, %c0_77] : memref<1x32xf32, #tpu.memory_space<vmem>>, vector<1x32xf32>
    %136 = vector.broadcast %135 : vector<1x32xf32> to vector<16x32xf32>
    %137 = arith.addf %134, %136 : vector<16x32xf32>
    %c0_78 = arith.constant 0 : index
    %c0_79 = arith.constant 0 : index
    %138 = vector.load %arg18[%c0_78, %c0_79] : memref<32x32xf32, #tpu.memory_space<vmem>>, vector<32x32xf32>
    %cst_80 = arith.constant dense<0.000000e+00> : vector<16x32xf32>
    %139 = tpu.matmul %137, %138, %cst_80 {dimension_numbers = #tpu.dot_dimension_numbers<[1], [0], [0], [1], [0, 0, 1, 1], [], []>} : vector<16x32xf32>, vector<32x32xf32>, vector<16x32xf32> -> vector<16x32xf32>
    %c0_81 = arith.constant 0 : index
    %c0_82 = arith.constant 0 : index
    %140 = vector.load %arg19[%c0_81, %c0_82] : memref<1x32xf32, #tpu.memory_space<vmem>>, vector<1x32xf32>
    %141 = vector.broadcast %140 : vector<1x32xf32> to vector<16x32xf32>
    %142 = arith.addf %139, %141 : vector<16x32xf32>
    %cst_83 = arith.constant 0.000000e+00 : f32
    %143 = vector.broadcast %cst_83 : f32 to vector<16x32xf32>
    %144 = arith.maximumf %142, %143 : vector<16x32xf32>
    %cst_84 = arith.constant 0.000000e+00 : f32
    %145 = vector.broadcast %cst_84 : f32 to vector<1x32xf32>
    %146 = vector.extract_strided_slice %144 {offsets = [0, 0], sizes = [15, 32], strides = [1, 1]} : vector<16x32xf32> to vector<15x32xf32>
    %147 = tpu.concatenate %145, %146 in 0 : vector<1x32xf32>, vector<15x32xf32> -> vector<16x32xf32>
    %c0_85 = arith.constant 0 : index
    %c0_86 = arith.constant 0 : index
    %c0_87 = arith.constant 0 : index
    %148 = vector.load %arg20[%c0_85, %c0_86, %c0_87] : memref<3x1x32xf32, #tpu.memory_space<vmem>>, vector<1x1x32xf32>
    %149 = vector.shape_cast %148 : vector<1x1x32xf32> to vector<1x32xf32>
    %150 = vector.broadcast %149 : vector<1x32xf32> to vector<16x32xf32>
    %151 = arith.mulf %147, %150 : vector<16x32xf32>
    %c1_88 = arith.constant 1 : index
    %c0_89 = arith.constant 0 : index
    %c0_90 = arith.constant 0 : index
    %152 = vector.load %arg20[%c1_88, %c0_89, %c0_90] : memref<3x1x32xf32, #tpu.memory_space<vmem>>, vector<1x1x32xf32>
    %153 = vector.shape_cast %152 : vector<1x1x32xf32> to vector<1x32xf32>
    %154 = vector.broadcast %153 : vector<1x32xf32> to vector<16x32xf32>
    %155 = arith.mulf %144, %154 : vector<16x32xf32>
    %156 = arith.addf %151, %155 : vector<16x32xf32>
    %cst_91 = arith.constant 0.000000e+00 : f32
    %157 = vector.broadcast %cst_91 : f32 to vector<1x32xf32>
    %158 = vector.extract_strided_slice %144 {offsets = [1, 0], sizes = [15, 32], strides = [1, 1]} : vector<16x32xf32> to vector<15x32xf32>
    %159 = tpu.concatenate %158, %157 in 0 : vector<15x32xf32>, vector<1x32xf32> -> vector<16x32xf32>
    %c2_92 = arith.constant 2 : index
    %c0_93 = arith.constant 0 : index
    %c0_94 = arith.constant 0 : index
    %160 = vector.load %arg20[%c2_92, %c0_93, %c0_94] : memref<3x1x32xf32, #tpu.memory_space<vmem>>, vector<1x1x32xf32>
    %161 = vector.shape_cast %160 : vector<1x1x32xf32> to vector<1x32xf32>
    %162 = vector.broadcast %161 : vector<1x32xf32> to vector<16x32xf32>
    %163 = arith.mulf %159, %162 : vector<16x32xf32>
    %164 = arith.addf %156, %163 : vector<16x32xf32>
    %c0_95 = arith.constant 0 : index
    %c0_96 = arith.constant 0 : index
    %165 = vector.load %arg21[%c0_95, %c0_96] : memref<1x32xf32, #tpu.memory_space<vmem>>, vector<1x32xf32>
    %166 = vector.broadcast %165 : vector<1x32xf32> to vector<16x32xf32>
    %167 = arith.addf %164, %166 : vector<16x32xf32>
    %c0_97 = arith.constant 0 : index
    %c0_98 = arith.constant 0 : index
    %168 = vector.load %arg22[%c0_97, %c0_98] : memref<32x32xf32, #tpu.memory_space<vmem>>, vector<32x32xf32>
    %cst_99 = arith.constant dense<0.000000e+00> : vector<16x32xf32>
    %169 = tpu.matmul %167, %168, %cst_99 {dimension_numbers = #tpu.dot_dimension_numbers<[1], [0], [0], [1], [0, 0, 1, 1], [], []>} : vector<16x32xf32>, vector<32x32xf32>, vector<16x32xf32> -> vector<16x32xf32>
    %c0_100 = arith.constant 0 : index
    %c0_101 = arith.constant 0 : index
    %170 = vector.load %arg23[%c0_100, %c0_101] : memref<1x32xf32, #tpu.memory_space<vmem>>, vector<1x32xf32>
    %171 = vector.broadcast %170 : vector<1x32xf32> to vector<16x32xf32>
    %172 = arith.addf %169, %171 : vector<16x32xf32>
    %cst_102 = arith.constant 0.000000e+00 : f32
    %173 = vector.broadcast %cst_102 : f32 to vector<16x32xf32>
    %174 = arith.maximumf %172, %173 : vector<16x32xf32>
    %cst_103 = arith.constant 0.000000e+00 : f32
    %175 = vector.broadcast %cst_103 : f32 to vector<1x32xf32>
    %176 = vector.extract_strided_slice %174 {offsets = [0, 0], sizes = [15, 32], strides = [1, 1]} : vector<16x32xf32> to vector<15x32xf32>
    %177 = tpu.concatenate %175, %176 in 0 : vector<1x32xf32>, vector<15x32xf32> -> vector<16x32xf32>
    %c0_104 = arith.constant 0 : index
    %c0_105 = arith.constant 0 : index
    %c0_106 = arith.constant 0 : index
    %178 = vector.load %arg24[%c0_104, %c0_105, %c0_106] : memref<3x1x32xf32, #tpu.memory_space<vmem>>, vector<1x1x32xf32>
    %179 = vector.shape_cast %178 : vector<1x1x32xf32> to vector<1x32xf32>
    %180 = vector.broadcast %179 : vector<1x32xf32> to vector<16x32xf32>
    %181 = arith.mulf %177, %180 : vector<16x32xf32>
    %c1_107 = arith.constant 1 : index
    %c0_108 = arith.constant 0 : index
    %c0_109 = arith.constant 0 : index
    %182 = vector.load %arg24[%c1_107, %c0_108, %c0_109] : memref<3x1x32xf32, #tpu.memory_space<vmem>>, vector<1x1x32xf32>
    %183 = vector.shape_cast %182 : vector<1x1x32xf32> to vector<1x32xf32>
    %184 = vector.broadcast %183 : vector<1x32xf32> to vector<16x32xf32>
    %185 = arith.mulf %174, %184 : vector<16x32xf32>
    %186 = arith.addf %181, %185 : vector<16x32xf32>
    %cst_110 = arith.constant 0.000000e+00 : f32
    %187 = vector.broadcast %cst_110 : f32 to vector<1x32xf32>
    %188 = vector.extract_strided_slice %174 {offsets = [1, 0], sizes = [15, 32], strides = [1, 1]} : vector<16x32xf32> to vector<15x32xf32>
    %189 = tpu.concatenate %188, %187 in 0 : vector<15x32xf32>, vector<1x32xf32> -> vector<16x32xf32>
    %c2_111 = arith.constant 2 : index
    %c0_112 = arith.constant 0 : index
    %c0_113 = arith.constant 0 : index
    %190 = vector.load %arg24[%c2_111, %c0_112, %c0_113] : memref<3x1x32xf32, #tpu.memory_space<vmem>>, vector<1x1x32xf32>
    %191 = vector.shape_cast %190 : vector<1x1x32xf32> to vector<1x32xf32>
    %192 = vector.broadcast %191 : vector<1x32xf32> to vector<16x32xf32>
    %193 = arith.mulf %189, %192 : vector<16x32xf32>
    %194 = arith.addf %186, %193 : vector<16x32xf32>
    %c0_114 = arith.constant 0 : index
    %c0_115 = arith.constant 0 : index
    %195 = vector.load %arg25[%c0_114, %c0_115] : memref<1x32xf32, #tpu.memory_space<vmem>>, vector<1x32xf32>
    %196 = vector.broadcast %195 : vector<1x32xf32> to vector<16x32xf32>
    %197 = arith.addf %194, %196 : vector<16x32xf32>
    %c0_116 = arith.constant 0 : index
    %c0_117 = arith.constant 0 : index
    %198 = vector.load %arg26[%c0_116, %c0_117] : memref<32x32xf32, #tpu.memory_space<vmem>>, vector<32x32xf32>
    %cst_118 = arith.constant dense<0.000000e+00> : vector<16x32xf32>
    %199 = tpu.matmul %197, %198, %cst_118 {dimension_numbers = #tpu.dot_dimension_numbers<[1], [0], [0], [1], [0, 0, 1, 1], [], []>} : vector<16x32xf32>, vector<32x32xf32>, vector<16x32xf32> -> vector<16x32xf32>
    %c0_119 = arith.constant 0 : index
    %c0_120 = arith.constant 0 : index
    %200 = vector.load %arg27[%c0_119, %c0_120] : memref<1x32xf32, #tpu.memory_space<vmem>>, vector<1x32xf32>
    %201 = vector.broadcast %200 : vector<1x32xf32> to vector<16x32xf32>
    %202 = arith.addf %199, %201 : vector<16x32xf32>
    %cst_121 = arith.constant 0.000000e+00 : f32
    %203 = vector.broadcast %cst_121 : f32 to vector<16x32xf32>
    %204 = arith.maximumf %202, %203 : vector<16x32xf32>
    %cst_122 = arith.constant 0.000000e+00 : f32
    %205 = vector.broadcast %cst_122 : f32 to vector<1x32xf32>
    %206 = vector.extract_strided_slice %204 {offsets = [0, 0], sizes = [15, 32], strides = [1, 1]} : vector<16x32xf32> to vector<15x32xf32>
    %207 = tpu.concatenate %205, %206 in 0 : vector<1x32xf32>, vector<15x32xf32> -> vector<16x32xf32>
    %c0_123 = arith.constant 0 : index
    %c0_124 = arith.constant 0 : index
    %c0_125 = arith.constant 0 : index
    %208 = vector.load %arg28[%c0_123, %c0_124, %c0_125] : memref<3x1x32xf32, #tpu.memory_space<vmem>>, vector<1x1x32xf32>
    %209 = vector.shape_cast %208 : vector<1x1x32xf32> to vector<1x32xf32>
    %210 = vector.broadcast %209 : vector<1x32xf32> to vector<16x32xf32>
    %211 = arith.mulf %207, %210 : vector<16x32xf32>
    %c1_126 = arith.constant 1 : index
    %c0_127 = arith.constant 0 : index
    %c0_128 = arith.constant 0 : index
    %212 = vector.load %arg28[%c1_126, %c0_127, %c0_128] : memref<3x1x32xf32, #tpu.memory_space<vmem>>, vector<1x1x32xf32>
    %213 = vector.shape_cast %212 : vector<1x1x32xf32> to vector<1x32xf32>
    %214 = vector.broadcast %213 : vector<1x32xf32> to vector<16x32xf32>
    %215 = arith.mulf %204, %214 : vector<16x32xf32>
    %216 = arith.addf %211, %215 : vector<16x32xf32>
    %cst_129 = arith.constant 0.000000e+00 : f32
    %217 = vector.broadcast %cst_129 : f32 to vector<1x32xf32>
    %218 = vector.extract_strided_slice %204 {offsets = [1, 0], sizes = [15, 32], strides = [1, 1]} : vector<16x32xf32> to vector<15x32xf32>
    %219 = tpu.concatenate %218, %217 in 0 : vector<15x32xf32>, vector<1x32xf32> -> vector<16x32xf32>
    %c2_130 = arith.constant 2 : index
    %c0_131 = arith.constant 0 : index
    %c0_132 = arith.constant 0 : index
    %220 = vector.load %arg28[%c2_130, %c0_131, %c0_132] : memref<3x1x32xf32, #tpu.memory_space<vmem>>, vector<1x1x32xf32>
    %221 = vector.shape_cast %220 : vector<1x1x32xf32> to vector<1x32xf32>
    %222 = vector.broadcast %221 : vector<1x32xf32> to vector<16x32xf32>
    %223 = arith.mulf %219, %222 : vector<16x32xf32>
    %224 = arith.addf %216, %223 : vector<16x32xf32>
    %c0_133 = arith.constant 0 : index
    %c0_134 = arith.constant 0 : index
    %225 = vector.load %arg29[%c0_133, %c0_134] : memref<1x32xf32, #tpu.memory_space<vmem>>, vector<1x32xf32>
    %226 = vector.broadcast %225 : vector<1x32xf32> to vector<16x32xf32>
    %227 = arith.addf %224, %226 : vector<16x32xf32>
    %c0_135 = arith.constant 0 : index
    %c0_136 = arith.constant 0 : index
    %228 = vector.load %arg30[%c0_135, %c0_136] : memref<32x64xf32, #tpu.memory_space<vmem>>, vector<32x64xf32>
    %cst_137 = arith.constant dense<0.000000e+00> : vector<16x64xf32>
    %229 = tpu.matmul %227, %228, %cst_137 {dimension_numbers = #tpu.dot_dimension_numbers<[1], [0], [0], [1], [0, 0, 1, 1], [], []>} : vector<16x32xf32>, vector<32x64xf32>, vector<16x64xf32> -> vector<16x64xf32>
    %c0_138 = arith.constant 0 : index
    %c0_139 = arith.constant 0 : index
    %230 = vector.load %arg31[%c0_138, %c0_139] : memref<1x64xf32, #tpu.memory_space<vmem>>, vector<1x64xf32>
    %231 = vector.broadcast %230 : vector<1x64xf32> to vector<16x64xf32>
    %232 = arith.addf %229, %231 : vector<16x64xf32>
    %cst_140 = arith.constant 0.000000e+00 : f32
    %233 = vector.broadcast %cst_140 : f32 to vector<16x64xf32>
    %234 = arith.maximumf %232, %233 : vector<16x64xf32>
    %cst_141 = arith.constant 0.000000e+00 : f32
    %235 = vector.broadcast %cst_141 : f32 to vector<1x64xf32>
    %236 = vector.extract_strided_slice %234 {offsets = [0, 0], sizes = [15, 64], strides = [1, 1]} : vector<16x64xf32> to vector<15x64xf32>
    %237 = tpu.concatenate %235, %236 in 0 : vector<1x64xf32>, vector<15x64xf32> -> vector<16x64xf32>
    %c0_142 = arith.constant 0 : index
    %c0_143 = arith.constant 0 : index
    %c0_144 = arith.constant 0 : index
    %238 = vector.load %arg32[%c0_142, %c0_143, %c0_144] : memref<3x1x64xf32, #tpu.memory_space<vmem>>, vector<1x1x64xf32>
    %239 = vector.shape_cast %238 : vector<1x1x64xf32> to vector<1x64xf32>
    %240 = vector.broadcast %239 : vector<1x64xf32> to vector<16x64xf32>
    %241 = arith.mulf %237, %240 : vector<16x64xf32>
    %c1_145 = arith.constant 1 : index
    %c0_146 = arith.constant 0 : index
    %c0_147 = arith.constant 0 : index
    %242 = vector.load %arg32[%c1_145, %c0_146, %c0_147] : memref<3x1x64xf32, #tpu.memory_space<vmem>>, vector<1x1x64xf32>
    %243 = vector.shape_cast %242 : vector<1x1x64xf32> to vector<1x64xf32>
    %244 = vector.broadcast %243 : vector<1x64xf32> to vector<16x64xf32>
    %245 = arith.mulf %234, %244 : vector<16x64xf32>
    %246 = arith.addf %241, %245 : vector<16x64xf32>
    %cst_148 = arith.constant 0.000000e+00 : f32
    %247 = vector.broadcast %cst_148 : f32 to vector<1x64xf32>
    %248 = vector.extract_strided_slice %234 {offsets = [1, 0], sizes = [15, 64], strides = [1, 1]} : vector<16x64xf32> to vector<15x64xf32>
    %249 = tpu.concatenate %248, %247 in 0 : vector<15x64xf32>, vector<1x64xf32> -> vector<16x64xf32>
    %c2_149 = arith.constant 2 : index
    %c0_150 = arith.constant 0 : index
    %c0_151 = arith.constant 0 : index
    %250 = vector.load %arg32[%c2_149, %c0_150, %c0_151] : memref<3x1x64xf32, #tpu.memory_space<vmem>>, vector<1x1x64xf32>
    %251 = vector.shape_cast %250 : vector<1x1x64xf32> to vector<1x64xf32>
    %252 = vector.broadcast %251 : vector<1x64xf32> to vector<16x64xf32>
    %253 = arith.mulf %249, %252 : vector<16x64xf32>
    %254 = arith.addf %246, %253 : vector<16x64xf32>
    %c0_152 = arith.constant 0 : index
    %c0_153 = arith.constant 0 : index
    %255 = vector.load %arg33[%c0_152, %c0_153] : memref<1x64xf32, #tpu.memory_space<vmem>>, vector<1x64xf32>
    %256 = vector.broadcast %255 : vector<1x64xf32> to vector<16x64xf32>
    %257 = arith.addf %254, %256 : vector<16x64xf32>
    %c0_154 = arith.constant 0 : index
    %c0_155 = arith.constant 0 : index
    %258 = vector.load %arg34[%c0_154, %c0_155] : memref<64x64xf32, #tpu.memory_space<vmem>>, vector<64x64xf32>
    %cst_156 = arith.constant dense<0.000000e+00> : vector<16x64xf32>
    %259 = tpu.matmul %257, %258, %cst_156 {dimension_numbers = #tpu.dot_dimension_numbers<[1], [0], [0], [1], [0, 0, 1, 1], [], []>} : vector<16x64xf32>, vector<64x64xf32>, vector<16x64xf32> -> vector<16x64xf32>
    %c0_157 = arith.constant 0 : index
    %c0_158 = arith.constant 0 : index
    %260 = vector.load %arg35[%c0_157, %c0_158] : memref<1x64xf32, #tpu.memory_space<vmem>>, vector<1x64xf32>
    %261 = vector.broadcast %260 : vector<1x64xf32> to vector<16x64xf32>
    %262 = arith.addf %259, %261 : vector<16x64xf32>
    %cst_159 = arith.constant 0.000000e+00 : f32
    %263 = vector.broadcast %cst_159 : f32 to vector<16x64xf32>
    %264 = arith.maximumf %262, %263 : vector<16x64xf32>
    %cst_160 = arith.constant 0.000000e+00 : f32
    %265 = vector.broadcast %cst_160 : f32 to vector<1x64xf32>
    %266 = vector.extract_strided_slice %264 {offsets = [0, 0], sizes = [15, 64], strides = [1, 1]} : vector<16x64xf32> to vector<15x64xf32>
    %267 = tpu.concatenate %265, %266 in 0 : vector<1x64xf32>, vector<15x64xf32> -> vector<16x64xf32>
    %c0_161 = arith.constant 0 : index
    %c0_162 = arith.constant 0 : index
    %c0_163 = arith.constant 0 : index
    %268 = vector.load %arg36[%c0_161, %c0_162, %c0_163] : memref<3x1x64xf32, #tpu.memory_space<vmem>>, vector<1x1x64xf32>
    %269 = vector.shape_cast %268 : vector<1x1x64xf32> to vector<1x64xf32>
    %270 = vector.broadcast %269 : vector<1x64xf32> to vector<16x64xf32>
    %271 = arith.mulf %267, %270 : vector<16x64xf32>
    %c1_164 = arith.constant 1 : index
    %c0_165 = arith.constant 0 : index
    %c0_166 = arith.constant 0 : index
    %272 = vector.load %arg36[%c1_164, %c0_165, %c0_166] : memref<3x1x64xf32, #tpu.memory_space<vmem>>, vector<1x1x64xf32>
    %273 = vector.shape_cast %272 : vector<1x1x64xf32> to vector<1x64xf32>
    %274 = vector.broadcast %273 : vector<1x64xf32> to vector<16x64xf32>
    %275 = arith.mulf %264, %274 : vector<16x64xf32>
    %276 = arith.addf %271, %275 : vector<16x64xf32>
    %cst_167 = arith.constant 0.000000e+00 : f32
    %277 = vector.broadcast %cst_167 : f32 to vector<1x64xf32>
    %278 = vector.extract_strided_slice %264 {offsets = [1, 0], sizes = [15, 64], strides = [1, 1]} : vector<16x64xf32> to vector<15x64xf32>
    %279 = tpu.concatenate %278, %277 in 0 : vector<15x64xf32>, vector<1x64xf32> -> vector<16x64xf32>
    %c2_168 = arith.constant 2 : index
    %c0_169 = arith.constant 0 : index
    %c0_170 = arith.constant 0 : index
    %280 = vector.load %arg36[%c2_168, %c0_169, %c0_170] : memref<3x1x64xf32, #tpu.memory_space<vmem>>, vector<1x1x64xf32>
    %281 = vector.shape_cast %280 : vector<1x1x64xf32> to vector<1x64xf32>
    %282 = vector.broadcast %281 : vector<1x64xf32> to vector<16x64xf32>
    %283 = arith.mulf %279, %282 : vector<16x64xf32>
    %284 = arith.addf %276, %283 : vector<16x64xf32>
    %c0_171 = arith.constant 0 : index
    %c0_172 = arith.constant 0 : index
    %285 = vector.load %arg37[%c0_171, %c0_172] : memref<1x64xf32, #tpu.memory_space<vmem>>, vector<1x64xf32>
    %286 = vector.broadcast %285 : vector<1x64xf32> to vector<16x64xf32>
    %287 = arith.addf %284, %286 : vector<16x64xf32>
    %c0_173 = arith.constant 0 : index
    %c0_174 = arith.constant 0 : index
    %288 = vector.load %arg38[%c0_173, %c0_174] : memref<64x64xf32, #tpu.memory_space<vmem>>, vector<64x64xf32>
    %cst_175 = arith.constant dense<0.000000e+00> : vector<16x64xf32>
    %289 = tpu.matmul %287, %288, %cst_175 {dimension_numbers = #tpu.dot_dimension_numbers<[1], [0], [0], [1], [0, 0, 1, 1], [], []>} : vector<16x64xf32>, vector<64x64xf32>, vector<16x64xf32> -> vector<16x64xf32>
    %c0_176 = arith.constant 0 : index
    %c0_177 = arith.constant 0 : index
    %290 = vector.load %arg39[%c0_176, %c0_177] : memref<1x64xf32, #tpu.memory_space<vmem>>, vector<1x64xf32>
    %291 = vector.broadcast %290 : vector<1x64xf32> to vector<16x64xf32>
    %292 = arith.addf %289, %291 : vector<16x64xf32>
    %cst_178 = arith.constant 0.000000e+00 : f32
    %293 = vector.broadcast %cst_178 : f32 to vector<16x64xf32>
    %294 = arith.maximumf %292, %293 : vector<16x64xf32>
    %cst_179 = arith.constant 0.000000e+00 : f32
    %295 = vector.broadcast %cst_179 : f32 to vector<1x64xf32>
    %296 = vector.extract_strided_slice %294 {offsets = [0, 0], sizes = [15, 64], strides = [1, 1]} : vector<16x64xf32> to vector<15x64xf32>
    %297 = tpu.concatenate %295, %296 in 0 : vector<1x64xf32>, vector<15x64xf32> -> vector<16x64xf32>
    %c0_180 = arith.constant 0 : index
    %c0_181 = arith.constant 0 : index
    %c0_182 = arith.constant 0 : index
    %298 = vector.load %arg40[%c0_180, %c0_181, %c0_182] : memref<3x1x64xf32, #tpu.memory_space<vmem>>, vector<1x1x64xf32>
    %299 = vector.shape_cast %298 : vector<1x1x64xf32> to vector<1x64xf32>
    %300 = vector.broadcast %299 : vector<1x64xf32> to vector<16x64xf32>
    %301 = arith.mulf %297, %300 : vector<16x64xf32>
    %c1_183 = arith.constant 1 : index
    %c0_184 = arith.constant 0 : index
    %c0_185 = arith.constant 0 : index
    %302 = vector.load %arg40[%c1_183, %c0_184, %c0_185] : memref<3x1x64xf32, #tpu.memory_space<vmem>>, vector<1x1x64xf32>
    %303 = vector.shape_cast %302 : vector<1x1x64xf32> to vector<1x64xf32>
    %304 = vector.broadcast %303 : vector<1x64xf32> to vector<16x64xf32>
    %305 = arith.mulf %294, %304 : vector<16x64xf32>
    %306 = arith.addf %301, %305 : vector<16x64xf32>
    %cst_186 = arith.constant 0.000000e+00 : f32
    %307 = vector.broadcast %cst_186 : f32 to vector<1x64xf32>
    %308 = vector.extract_strided_slice %294 {offsets = [1, 0], sizes = [15, 64], strides = [1, 1]} : vector<16x64xf32> to vector<15x64xf32>
    %309 = tpu.concatenate %308, %307 in 0 : vector<15x64xf32>, vector<1x64xf32> -> vector<16x64xf32>
    %c2_187 = arith.constant 2 : index
    %c0_188 = arith.constant 0 : index
    %c0_189 = arith.constant 0 : index
    %310 = vector.load %arg40[%c2_187, %c0_188, %c0_189] : memref<3x1x64xf32, #tpu.memory_space<vmem>>, vector<1x1x64xf32>
    %311 = vector.shape_cast %310 : vector<1x1x64xf32> to vector<1x64xf32>
    %312 = vector.broadcast %311 : vector<1x64xf32> to vector<16x64xf32>
    %313 = arith.mulf %309, %312 : vector<16x64xf32>
    %314 = arith.addf %306, %313 : vector<16x64xf32>
    %c0_190 = arith.constant 0 : index
    %c0_191 = arith.constant 0 : index
    %315 = vector.load %arg41[%c0_190, %c0_191] : memref<1x64xf32, #tpu.memory_space<vmem>>, vector<1x64xf32>
    %316 = vector.broadcast %315 : vector<1x64xf32> to vector<16x64xf32>
    %317 = arith.addf %314, %316 : vector<16x64xf32>
    %c0_192 = arith.constant 0 : index
    %c0_193 = arith.constant 0 : index
    %318 = vector.load %arg42[%c0_192, %c0_193] : memref<64x64xf32, #tpu.memory_space<vmem>>, vector<64x64xf32>
    %cst_194 = arith.constant dense<0.000000e+00> : vector<16x64xf32>
    %319 = tpu.matmul %317, %318, %cst_194 {dimension_numbers = #tpu.dot_dimension_numbers<[1], [0], [0], [1], [0, 0, 1, 1], [], []>} : vector<16x64xf32>, vector<64x64xf32>, vector<16x64xf32> -> vector<16x64xf32>
    %c0_195 = arith.constant 0 : index
    %c0_196 = arith.constant 0 : index
    %320 = vector.load %arg43[%c0_195, %c0_196] : memref<1x64xf32, #tpu.memory_space<vmem>>, vector<1x64xf32>
    %321 = vector.broadcast %320 : vector<1x64xf32> to vector<16x64xf32>
    %322 = arith.addf %319, %321 : vector<16x64xf32>
    %cst_197 = arith.constant 0.000000e+00 : f32
    %323 = vector.broadcast %cst_197 : f32 to vector<16x64xf32>
    %324 = arith.maximumf %322, %323 : vector<16x64xf32>
    %cst_198 = arith.constant 0.000000e+00 : f32
    %325 = vector.broadcast %cst_198 : f32 to vector<1x64xf32>
    %326 = vector.extract_strided_slice %324 {offsets = [0, 0], sizes = [15, 64], strides = [1, 1]} : vector<16x64xf32> to vector<15x64xf32>
    %327 = tpu.concatenate %325, %326 in 0 : vector<1x64xf32>, vector<15x64xf32> -> vector<16x64xf32>
    %c0_199 = arith.constant 0 : index
    %c0_200 = arith.constant 0 : index
    %c0_201 = arith.constant 0 : index
    %328 = vector.load %arg44[%c0_199, %c0_200, %c0_201] : memref<3x1x64xf32, #tpu.memory_space<vmem>>, vector<1x1x64xf32>
    %329 = vector.shape_cast %328 : vector<1x1x64xf32> to vector<1x64xf32>
    %330 = vector.broadcast %329 : vector<1x64xf32> to vector<16x64xf32>
    %331 = arith.mulf %327, %330 : vector<16x64xf32>
    %c1_202 = arith.constant 1 : index
    %c0_203 = arith.constant 0 : index
    %c0_204 = arith.constant 0 : index
    %332 = vector.load %arg44[%c1_202, %c0_203, %c0_204] : memref<3x1x64xf32, #tpu.memory_space<vmem>>, vector<1x1x64xf32>
    %333 = vector.shape_cast %332 : vector<1x1x64xf32> to vector<1x64xf32>
    %334 = vector.broadcast %333 : vector<1x64xf32> to vector<16x64xf32>
    %335 = arith.mulf %324, %334 : vector<16x64xf32>
    %336 = arith.addf %331, %335 : vector<16x64xf32>
    %cst_205 = arith.constant 0.000000e+00 : f32
    %337 = vector.broadcast %cst_205 : f32 to vector<1x64xf32>
    %338 = vector.extract_strided_slice %324 {offsets = [1, 0], sizes = [15, 64], strides = [1, 1]} : vector<16x64xf32> to vector<15x64xf32>
    %339 = tpu.concatenate %338, %337 in 0 : vector<15x64xf32>, vector<1x64xf32> -> vector<16x64xf32>
    %c2_206 = arith.constant 2 : index
    %c0_207 = arith.constant 0 : index
    %c0_208 = arith.constant 0 : index
    %340 = vector.load %arg44[%c2_206, %c0_207, %c0_208] : memref<3x1x64xf32, #tpu.memory_space<vmem>>, vector<1x1x64xf32>
    %341 = vector.shape_cast %340 : vector<1x1x64xf32> to vector<1x64xf32>
    %342 = vector.broadcast %341 : vector<1x64xf32> to vector<16x64xf32>
    %343 = arith.mulf %339, %342 : vector<16x64xf32>
    %344 = arith.addf %336, %343 : vector<16x64xf32>
    %c0_209 = arith.constant 0 : index
    %c0_210 = arith.constant 0 : index
    %345 = vector.load %arg45[%c0_209, %c0_210] : memref<1x64xf32, #tpu.memory_space<vmem>>, vector<1x64xf32>
    %346 = vector.broadcast %345 : vector<1x64xf32> to vector<16x64xf32>
    %347 = arith.addf %344, %346 : vector<16x64xf32>
    %c0_211 = arith.constant 0 : index
    %c0_212 = arith.constant 0 : index
    %348 = vector.load %arg46[%c0_211, %c0_212] : memref<64x128xf32, #tpu.memory_space<vmem>>, vector<64x128xf32>
    %cst_213 = arith.constant dense<0.000000e+00> : vector<16x128xf32>
    %349 = tpu.matmul %347, %348, %cst_213 {dimension_numbers = #tpu.dot_dimension_numbers<[1], [0], [0], [1], [0, 0, 1, 1], [], []>} : vector<16x64xf32>, vector<64x128xf32>, vector<16x128xf32> -> vector<16x128xf32>
    %c0_214 = arith.constant 0 : index
    %c0_215 = arith.constant 0 : index
    %350 = vector.load %arg47[%c0_214, %c0_215] : memref<1x128xf32, #tpu.memory_space<vmem>>, vector<1x128xf32>
    %351 = vector.broadcast %350 : vector<1x128xf32> to vector<16x128xf32>
    %352 = arith.addf %349, %351 : vector<16x128xf32>
    %cst_216 = arith.constant 0.000000e+00 : f32
    %353 = vector.broadcast %cst_216 : f32 to vector<16x128xf32>
    %354 = arith.maximumf %352, %353 : vector<16x128xf32>
    %cst_217 = arith.constant 0.000000e+00 : f32
    %355 = vector.broadcast %cst_217 : f32 to vector<1x128xf32>
    %356 = vector.extract_strided_slice %354 {offsets = [0, 0], sizes = [15, 128], strides = [1, 1]} : vector<16x128xf32> to vector<15x128xf32>
    %357 = tpu.concatenate %355, %356 in 0 : vector<1x128xf32>, vector<15x128xf32> -> vector<16x128xf32>
    %c0_218 = arith.constant 0 : index
    %c0_219 = arith.constant 0 : index
    %c0_220 = arith.constant 0 : index
    %358 = vector.load %arg48[%c0_218, %c0_219, %c0_220] : memref<3x1x128xf32, #tpu.memory_space<vmem>>, vector<1x1x128xf32>
    %359 = vector.shape_cast %358 : vector<1x1x128xf32> to vector<1x128xf32>
    %360 = vector.broadcast %359 : vector<1x128xf32> to vector<16x128xf32>
    %361 = arith.mulf %357, %360 : vector<16x128xf32>
    %c1_221 = arith.constant 1 : index
    %c0_222 = arith.constant 0 : index
    %c0_223 = arith.constant 0 : index
    %362 = vector.load %arg48[%c1_221, %c0_222, %c0_223] : memref<3x1x128xf32, #tpu.memory_space<vmem>>, vector<1x1x128xf32>
    %363 = vector.shape_cast %362 : vector<1x1x128xf32> to vector<1x128xf32>
    %364 = vector.broadcast %363 : vector<1x128xf32> to vector<16x128xf32>
    %365 = arith.mulf %354, %364 : vector<16x128xf32>
    %366 = arith.addf %361, %365 : vector<16x128xf32>
    %cst_224 = arith.constant 0.000000e+00 : f32
    %367 = vector.broadcast %cst_224 : f32 to vector<1x128xf32>
    %368 = vector.extract_strided_slice %354 {offsets = [1, 0], sizes = [15, 128], strides = [1, 1]} : vector<16x128xf32> to vector<15x128xf32>
    %369 = tpu.concatenate %368, %367 in 0 : vector<15x128xf32>, vector<1x128xf32> -> vector<16x128xf32>
    %c2_225 = arith.constant 2 : index
    %c0_226 = arith.constant 0 : index
    %c0_227 = arith.constant 0 : index
    %370 = vector.load %arg48[%c2_225, %c0_226, %c0_227] : memref<3x1x128xf32, #tpu.memory_space<vmem>>, vector<1x1x128xf32>
    %371 = vector.shape_cast %370 : vector<1x1x128xf32> to vector<1x128xf32>
    %372 = vector.broadcast %371 : vector<1x128xf32> to vector<16x128xf32>
    %373 = arith.mulf %369, %372 : vector<16x128xf32>
    %374 = arith.addf %366, %373 : vector<16x128xf32>
    %c0_228 = arith.constant 0 : index
    %c0_229 = arith.constant 0 : index
    %375 = vector.load %arg49[%c0_228, %c0_229] : memref<1x128xf32, #tpu.memory_space<vmem>>, vector<1x128xf32>
    %376 = vector.broadcast %375 : vector<1x128xf32> to vector<16x128xf32>
    %377 = arith.addf %374, %376 : vector<16x128xf32>
    %c0_230 = arith.constant 0 : index
    %c0_231 = arith.constant 0 : index
    %378 = vector.load %arg50[%c0_230, %c0_231] : memref<128x128xf32, #tpu.memory_space<vmem>>, vector<128x128xf32>
    %cst_232 = arith.constant dense<0.000000e+00> : vector<16x128xf32>
    %379 = tpu.matmul %377, %378, %cst_232 {dimension_numbers = #tpu.dot_dimension_numbers<[1], [0], [0], [1], [0, 0, 1, 1], [], []>} : vector<16x128xf32>, vector<128x128xf32>, vector<16x128xf32> -> vector<16x128xf32>
    %c0_233 = arith.constant 0 : index
    %c0_234 = arith.constant 0 : index
    %380 = vector.load %arg51[%c0_233, %c0_234] : memref<1x128xf32, #tpu.memory_space<vmem>>, vector<1x128xf32>
    %381 = vector.broadcast %380 : vector<1x128xf32> to vector<16x128xf32>
    %382 = arith.addf %379, %381 : vector<16x128xf32>
    %cst_235 = arith.constant 0.000000e+00 : f32
    %383 = vector.broadcast %cst_235 : f32 to vector<16x128xf32>
    %384 = arith.maximumf %382, %383 : vector<16x128xf32>
    %cst_236 = arith.constant dense<0.000000e+00> : vector<128xf32>
    %385 = vector.multi_reduction <add>, %384, %cst_236 [0] : vector<16x128xf32> to vector<128xf32>
    %386 = vector.shape_cast %385 : vector<128xf32> to vector<1x128xf32>
    %cst_237 = arith.constant 1.600000e+01 : f32
    %387 = vector.broadcast %cst_237 : f32 to vector<1x128xf32>
    %388 = arith.divf %386, %387 : vector<1x128xf32>
    %c0_238 = arith.constant 0 : index
    %c0_239 = arith.constant 0 : index
    %389 = vector.load %arg52[%c0_238, %c0_239] : memref<128x16xf32, #tpu.memory_space<vmem>>, vector<128x16xf32>
    %cst_240 = arith.constant dense<0.000000e+00> : vector<1x16xf32>
    %390 = tpu.matmul %388, %389, %cst_240 {dimension_numbers = #tpu.dot_dimension_numbers<[1], [0], [0], [1], [0, 0, 1, 1], [], []>} : vector<1x128xf32>, vector<128x16xf32>, vector<1x16xf32> -> vector<1x16xf32>
    %c0_241 = arith.constant 0 : index
    %c0_242 = arith.constant 0 : index
    %391 = vector.load %arg53[%c0_241, %c0_242] : memref<1x16xf32, #tpu.memory_space<vmem>>, vector<1x16xf32>
    %392 = arith.addf %390, %391 : vector<1x16xf32>
    %c0_243 = arith.constant 0 : index
    %c0_244 = arith.constant 0 : index
    %c0_245 = arith.constant 0 : index
    %393 = vector.load %arg54[%c0_243, %c0_244, %c0_245] : memref<1x1x16xf32, #tpu.memory_space<vmem>>, vector<1x1x16xf32>
    %394 = vector.shape_cast %393 : vector<1x1x16xf32> to vector<1x16xf32>
    %395 = vector.shape_cast %392 : vector<1x16xf32> to vector<1x1x16xf32>
    tpu.vector_store %arg54[%c0_243, %c0_244, %c0_245], %395 {strides = array<i32>} : memref<1x1x16xf32, #tpu.memory_space<vmem>>, vector<1x1x16xf32>,
    return
  }
  func.func @transform_0(%arg0: i32) -> (i32, i32, i32) {
    %c0_i32 = arith.constant 0 : i32
    %c0_i32_0 = arith.constant 0 : i32
    %c0_i32_1 = arith.constant 0 : i32
    return %arg0, %c0_i32, %c0_i32_0 : i32, i32, i32
  }
  func.func @transform_1(%arg0: i32) -> (i32, i32) {
    %c0_i32 = arith.constant 0 : i32
    %c0_i32_0 = arith.constant 0 : i32
    %c0_i32_1 = arith.constant 0 : i32
    return %c0_i32, %c0_i32_0 : i32, i32
  }
  func.func @transform_2(%arg0: i32) -> (i32, i32) {
    %c0_i32 = arith.constant 0 : i32
    %c0_i32_0 = arith.constant 0 : i32
    %c0_i32_1 = arith.constant 0 : i32
    return %c0_i32, %c0_i32_0 : i32, i32
  }
  func.func @transform_3(%arg0: i32) -> (i32, i32, i32) {
    %c0_i32 = arith.constant 0 : i32
    %c0_i32_0 = arith.constant 0 : i32
    %c0_i32_1 = arith.constant 0 : i32
    %c0_i32_2 = arith.constant 0 : i32
    return %c0_i32, %c0_i32_0, %c0_i32_1 : i32, i32, i32
  }
  func.func @transform_4(%arg0: i32) -> (i32, i32) {
    %c0_i32 = arith.constant 0 : i32
    %c0_i32_0 = arith.constant 0 : i32
    %c0_i32_1 = arith.constant 0 : i32
    return %c0_i32, %c0_i32_0 : i32, i32
  }
  func.func @transform_5(%arg0: i32) -> (i32, i32) {
    %c0_i32 = arith.constant 0 : i32
    %c0_i32_0 = arith.constant 0 : i32
    %c0_i32_1 = arith.constant 0 : i32
    return %c0_i32, %c0_i32_0 : i32, i32
  }
  func.func @transform_6(%arg0: i32) -> (i32, i32) {
    %c0_i32 = arith.constant 0 : i32
    %c0_i32_0 = arith.constant 0 : i32
    %c0_i32_1 = arith.constant 0 : i32
    return %c0_i32, %c0_i32_0 : i32, i32
  }
  func.func @transform_7(%arg0: i32) -> (i32, i32, i32) {
    %c0_i32 = arith.constant 0 : i32
    %c0_i32_0 = arith.constant 0 : i32
    %c0_i32_1 = arith.constant 0 : i32
    %c0_i32_2 = arith.constant 0 : i32
    return %c0_i32, %c0_i32_0, %c0_i32_1 : i32, i32, i32
  }
  func.func @transform_8(%arg0: i32) -> (i32, i32) {
    %c0_i32 = arith.constant 0 : i32
    %c0_i32_0 = arith.constant 0 : i32
    %c0_i32_1 = arith.constant 0 : i32
    return %c0_i32, %c0_i32_0 : i32, i32
  }
  func.func @transform_9(%arg0: i32) -> (i32, i32) {
    %c0_i32 = arith.constant 0 : i32
    %c0_i32_0 = arith.constant 0 : i32
    %c0_i32_1 = arith.constant 0 : i32
    return %c0_i32, %c0_i32_0 : i32, i32
  }
  func.func @transform_10(%arg0: i32) -> (i32, i32) {
    %c0_i32 = arith.constant 0 : i32
    %c0_i32_0 = arith.constant 0 : i32
    %c0_i32_1 = arith.constant 0 : i32
    return %c0_i32, %c0_i32_0 : i32, i32
  }
  func.func @transform_11(%arg0: i32) -> (i32, i32, i32) {
    %c0_i32 = arith.constant 0 : i32
    %c0_i32_0 = arith.constant 0 : i32
    %c0_i32_1 = arith.constant 0 : i32
    %c0_i32_2 = arith.constant 0 : i32
    return %c0_i32, %c0_i32_0, %c0_i32_1 : i32, i32, i32
  }
  func.func @transform_12(%arg0: i32) -> (i32, i32) {
    %c0_i32 = arith.constant 0 : i32
    %c0_i32_0 = arith.constant 0 : i32
    %c0_i32_1 = arith.constant 0 : i32
    return %c0_i32, %c0_i32_0 : i32, i32
  }
  func.func @transform_13(%arg0: i32) -> (i32, i32) {
    %c0_i32 = arith.constant 0 : i32
    %c0_i32_0 = arith.constant 0 : i32
    %c0_i32_1 = arith.constant 0 : i32
    return %c0_i32, %c0_i32_0 : i32, i32
  }
  func.func @transform_14(%arg0: i32) -> (i32, i32) {
    %c0_i32 = arith.constant 0 : i32
    %c0_i32_0 = arith.constant 0 : i32
    %c0_i32_1 = arith.constant 0 : i32
    return %c0_i32, %c0_i32_0 : i32, i32
  }
  func.func @transform_15(%arg0: i32) -> (i32, i32, i32) {
    %c0_i32 = arith.constant 0 : i32
    %c0_i32_0 = arith.constant 0 : i32
    %c0_i32_1 = arith.constant 0 : i32
    %c0_i32_2 = arith.constant 0 : i32
    return %c0_i32, %c0_i32_0, %c0_i32_1 : i32, i32, i32
  }
  func.func @transform_16(%arg0: i32) -> (i32, i32) {
    %c0_i32 = arith.constant 0 : i32
    %c0_i32_0 = arith.constant 0 : i32
    %c0_i32_1 = arith.constant 0 : i32
    return %c0_i32, %c0_i32_0 : i32, i32
  }
  func.func @transform_17(%arg0: i32) -> (i32, i32) {
    %c0_i32 = arith.constant 0 : i32
    %c0_i32_0 = arith.constant 0 : i32
    %c0_i32_1 = arith.constant 0 : i32
    return %c0_i32, %c0_i32_0 : i32, i32
  }
  func.func @transform_18(%arg0: i32) -> (i32, i32) {
    %c0_i32 = arith.constant 0 : i32
    %c0_i32_0 = arith.constant 0 : i32
    %c0_i32_1 = arith.constant 0 : i32
    return %c0_i32, %c0_i32_0 : i32, i32
  }
  func.func @transform_19(%arg0: i32) -> (i32, i32, i32) {
    %c0_i32 = arith.constant 0 : i32
    %c0_i32_0 = arith.constant 0 : i32
    %c0_i32_1 = arith.constant 0 : i32
    %c0_i32_2 = arith.constant 0 : i32
    return %c0_i32, %c0_i32_0, %c0_i32_1 : i32, i32, i32
  }
  func.func @transform_20(%arg0: i32) -> (i32, i32) {
    %c0_i32 = arith.constant 0 : i32
    %c0_i32_0 = arith.constant 0 : i32
    %c0_i32_1 = arith.constant 0 : i32
    return %c0_i32, %c0_i32_0 : i32, i32
  }
  func.func @transform_21(%arg0: i32) -> (i32, i32) {
    %c0_i32 = arith.constant 0 : i32
    %c0_i32_0 = arith.constant 0 : i32
    %c0_i32_1 = arith.constant 0 : i32
    return %c0_i32, %c0_i32_0 : i32, i32
  }
  func.func @transform_22(%arg0: i32) -> (i32, i32) {
    %c0_i32 = arith.constant 0 : i32
    %c0_i32_0 = arith.constant 0 : i32
    %c0_i32_1 = arith.constant 0 : i32
    return %c0_i32, %c0_i32_0 : i32, i32
  }
  func.func @transform_23(%arg0: i32) -> (i32, i32, i32) {
    %c0_i32 = arith.constant 0 : i32
    %c0_i32_0 = arith.constant 0 : i32
    %c0_i32_1 = arith.constant 0 : i32
    %c0_i32_2 = arith.constant 0 : i32
    return %c0_i32, %c0_i32_0, %c0_i32_1 : i32, i32, i32
  }
  func.func @transform_24(%arg0: i32) -> (i32, i32) {
    %c0_i32 = arith.constant 0 : i32
    %c0_i32_0 = arith.constant 0 : i32
    %c0_i32_1 = arith.constant 0 : i32
    return %c0_i32, %c0_i32_0 : i32, i32
  }
  func.func @transform_25(%arg0: i32) -> (i32, i32) {
    %c0_i32 = arith.constant 0 : i32
    %c0_i32_0 = arith.constant 0 : i32
    %c0_i32_1 = arith.constant 0 : i32
    return %c0_i32, %c0_i32_0 : i32, i32
  }
  func.func @transform_26(%arg0: i32) -> (i32, i32) {
    %c0_i32 = arith.constant 0 : i32
    %c0_i32_0 = arith.constant 0 : i32
    %c0_i32_1 = arith.constant 0 : i32
    return %c0_i32, %c0_i32_0 : i32, i32
  }
  func.func @transform_27(%arg0: i32) -> (i32, i32, i32) {
    %c0_i32 = arith.constant 0 : i32
    %c0_i32_0 = arith.constant 0 : i32
    %c0_i32_1 = arith.constant 0 : i32
    %c0_i32_2 = arith.constant 0 : i32
    return %c0_i32, %c0_i32_0, %c0_i32_1 : i32, i32, i32
  }
  func.func @transform_28(%arg0: i32) -> (i32, i32) {
    %c0_i32 = arith.constant 0 : i32
    %c0_i32_0 = arith.constant 0 : i32
    %c0_i32_1 = arith.constant 0 : i32
    return %c0_i32, %c0_i32_0 : i32, i32
  }
  func.func @transform_29(%arg0: i32) -> (i32, i32) {
    %c0_i32 = arith.constant 0 : i32
    %c0_i32_0 = arith.constant 0 : i32
    %c0_i32_1 = arith.constant 0 : i32
    return %c0_i32, %c0_i32_0 : i32, i32
  }
  func.func @transform_30(%arg0: i32) -> (i32, i32) {
    %c0_i32 = arith.constant 0 : i32
    %c0_i32_0 = arith.constant 0 : i32
    %c0_i32_1 = arith.constant 0 : i32
    return %c0_i32, %c0_i32_0 : i32, i32
  }
  func.func @transform_31(%arg0: i32) -> (i32, i32, i32) {
    %c0_i32 = arith.constant 0 : i32
    %c0_i32_0 = arith.constant 0 : i32
    %c0_i32_1 = arith.constant 0 : i32
    %c0_i32_2 = arith.constant 0 : i32
    return %c0_i32, %c0_i32_0, %c0_i32_1 : i32, i32, i32
  }
  func.func @transform_32(%arg0: i32) -> (i32, i32) {
    %c0_i32 = arith.constant 0 : i32
    %c0_i32_0 = arith.constant 0 : i32
    %c0_i32_1 = arith.constant 0 : i32
    return %c0_i32, %c0_i32_0 : i32, i32
  }
  func.func @transform_33(%arg0: i32) -> (i32, i32) {
    %c0_i32 = arith.constant 0 : i32
    %c0_i32_0 = arith.constant 0 : i32
    %c0_i32_1 = arith.constant 0 : i32
    return %c0_i32, %c0_i32_0 : i32, i32
  }
  func.func @transform_34(%arg0: i32) -> (i32, i32) {
    %c0_i32 = arith.constant 0 : i32
    %c0_i32_0 = arith.constant 0 : i32
    %c0_i32_1 = arith.constant 0 : i32
    return %c0_i32, %c0_i32_0 : i32, i32
  }
  func.func @transform_35(%arg0: i32) -> (i32, i32, i32) {
    %c0_i32 = arith.constant 0 : i32
    %c0_i32_0 = arith.constant 0 : i32
    %c0_i32_1 = arith.constant 0 : i32
    %c0_i32_2 = arith.constant 0 : i32
    return %c0_i32, %c0_i32_0, %c0_i32_1 : i32, i32, i32
  }
  func.func @transform_36(%arg0: i32) -> (i32, i32) {
    %c0_i32 = arith.constant 0 : i32
    %c0_i32_0 = arith.constant 0 : i32
    %c0_i32_1 = arith.constant 0 : i32
    return %c0_i32, %c0_i32_0 : i32, i32
  }
  func.func @transform_37(%arg0: i32) -> (i32, i32) {
    %c0_i32 = arith.constant 0 : i32
    %c0_i32_0 = arith.constant 0 : i32
    %c0_i32_1 = arith.constant 0 : i32
    return %c0_i32, %c0_i32_0 : i32, i32
  }
  func.func @transform_38(%arg0: i32) -> (i32, i32) {
    %c0_i32 = arith.constant 0 : i32
    %c0_i32_0 = arith.constant 0 : i32
    %c0_i32_1 = arith.constant 0 : i32
    return %c0_i32, %c0_i32_0 : i32, i32
  }
  func.func @transform_39(%arg0: i32) -> (i32, i32, i32) {
    %c0_i32 = arith.constant 0 : i32
    %c0_i32_0 = arith.constant 0 : i32
    %c0_i32_1 = arith.constant 0 : i32
    %c0_i32_2 = arith.constant 0 : i32
    return %c0_i32, %c0_i32_0, %c0_i32_1 : i32, i32, i32
  }
  func.func @transform_40(%arg0: i32) -> (i32, i32) {
    %c0_i32 = arith.constant 0 : i32
    %c0_i32_0 = arith.constant 0 : i32
    %c0_i32_1 = arith.constant 0 : i32
    return %c0_i32, %c0_i32_0 : i32, i32
  }
  func.func @transform_41(%arg0: i32) -> (i32, i32) {
    %c0_i32 = arith.constant 0 : i32
    %c0_i32_0 = arith.constant 0 : i32
    %c0_i32_1 = arith.constant 0 : i32
    return %c0_i32, %c0_i32_0 : i32, i32
  }
  func.func @transform_42(%arg0: i32) -> (i32, i32) {
    %c0_i32 = arith.constant 0 : i32
    %c0_i32_0 = arith.constant 0 : i32
    %c0_i32_1 = arith.constant 0 : i32
    return %c0_i32, %c0_i32_0 : i32, i32
  }
  func.func @transform_43(%arg0: i32) -> (i32, i32, i32) {
    %c0_i32 = arith.constant 0 : i32
    %c0_i32_0 = arith.constant 0 : i32
    %c0_i32_1 = arith.constant 0 : i32
    %c0_i32_2 = arith.constant 0 : i32
    return %c0_i32, %c0_i32_0, %c0_i32_1 : i32, i32, i32
  }
  func.func @transform_44(%arg0: i32) -> (i32, i32) {
    %c0_i32 = arith.constant 0 : i32
    %c0_i32_0 = arith.constant 0 : i32
    %c0_i32_1 = arith.constant 0 : i32
    return %c0_i32, %c0_i32_0 : i32, i32
  }
  func.func @transform_45(%arg0: i32) -> (i32, i32) {
    %c0_i32 = arith.constant 0 : i32
    %c0_i32_0 = arith.constant 0 : i32
    %c0_i32_1 = arith.constant 0 : i32
    return %c0_i32, %c0_i32_0 : i32, i32
  }
  func.func @transform_46(%arg0: i32) -> (i32, i32) {
    %c0_i32 = arith.constant 0 : i32
    %c0_i32_0 = arith.constant 0 : i32
    %c0_i32_1 = arith.constant 0 : i32
    return %c0_i32, %c0_i32_0 : i32, i32
  }
  func.func @transform_47(%arg0: i32) -> (i32, i32, i32) {
    %c0_i32 = arith.constant 0 : i32
    %c0_i32_0 = arith.constant 0 : i32
    %c0_i32_1 = arith.constant 0 : i32
    %c0_i32_2 = arith.constant 0 : i32
    return %c0_i32, %c0_i32_0, %c0_i32_1 : i32, i32, i32
  }
  func.func @transform_48(%arg0: i32) -> (i32, i32) {
    %c0_i32 = arith.constant 0 : i32
    %c0_i32_0 = arith.constant 0 : i32
    %c0_i32_1 = arith.constant 0 : i32
    return %c0_i32, %c0_i32_0 : i32, i32
  }
  func.func @transform_49(%arg0: i32) -> (i32, i32) {
    %c0_i32 = arith.constant 0 : i32
    %c0_i32_0 = arith.constant 0 : i32
    %c0_i32_1 = arith.constant 0 : i32
    return %c0_i32, %c0_i32_0 : i32, i32
  }
  func.func @transform_50(%arg0: i32) -> (i32, i32) {
    %c0_i32 = arith.constant 0 : i32
    %c0_i32_0 = arith.constant 0 : i32
    %c0_i32_1 = arith.constant 0 : i32
    return %c0_i32, %c0_i32_0 : i32, i32
  }
  func.func @transform_51(%arg0: i32) -> (i32, i32) {
    %c0_i32 = arith.constant 0 : i32
    %c0_i32_0 = arith.constant 0 : i32
    %c0_i32_1 = arith.constant 0 : i32
    return %c0_i32, %c0_i32_0 : i32, i32
  }
  func.func @transform_52(%arg0: i32) -> (i32, i32) {
    %c0_i32 = arith.constant 0 : i32
    %c0_i32_0 = arith.constant 0 : i32
    %c0_i32_1 = arith.constant 0 : i32
    return %c0_i32, %c0_i32_0 : i32, i32
  }
  func.func @transform_53(%arg0: i32) -> (i32, i32, i32) {
    %c0_i32 = arith.constant 0 : i32
    %c0_i32_0 = arith.constant 0 : i32
    %c0_i32_1 = arith.constant 0 : i32
    return %arg0, %c0_i32, %c0_i32_0 : i32, i32, i32
  }
}

</mosaic_0001>

<llo_original>
// kernel: tpu_custom_call.1
$region0: #{tpu_custom_call.1}
  #allocation0 [shape = 'u32[]', space=smem, size = 0x4, offset = 0x4, fixed_abs, tag = 'smem constant byte address 0x4 - core index']
  #allocation1 [shape = 'u32[72,128]{1,0:T(1,128)}', space=vmem, size = 0x9000, scoped, tag = 'internal scratch']
  %s0 = inlined_call_operand.smem [shape: u32[54], index: -1, kind: input, shape index: {}]
  %s1 = sld [smem:[%s0]]
  %s2 = scalar_lea.smem %s0, 1
  %s3 = sld [smem:[%s2]]
  %s4 = scalar_lea.smem %s0, 2
  %s5 = sld [smem:[%s4]]
  %s6 = scalar_lea.smem %s0, 3
  %s7 = sld [smem:[%s6]]
  %s8 = scalar_lea.smem %s0, 4
  %s9 = sld [smem:[%s8]]
  %s10 = scalar_lea.smem %s0, 5
  %s11 = sld [smem:[%s10]]
  %s12 = scalar_lea.smem %s0, 6
  %s13 = sld [smem:[%s12]]
  %s14 = scalar_lea.smem %s0, 7
  %s15 = sld [smem:[%s14]]
  %s16 = scalar_lea.smem %s0, 8
  %s17 = sld [smem:[%s16]]
  %s18 = scalar_lea.smem %s0, 9
  %s19 = sld [smem:[%s18]]
  %s20 = scalar_lea.smem %s0, 10
  %s21 = sld [smem:[%s20]]
  %s22 = scalar_lea.smem %s0, 11
  %s23 = sld [smem:[%s22]]
  %s24 = scalar_lea.smem %s0, 12
  %s25 = sld [smem:[%s24]]
  %s26 = scalar_lea.smem %s0, 13
  %s27 = sld [smem:[%s26]]
  %s28 = scalar_lea.smem %s0, 14
  %s29 = sld [smem:[%s28]]
  %s30 = scalar_lea.smem %s0, 15
  %s31 = sld [smem:[%s30]]
  %s32 = scalar_lea.smem %s0, 16
  %s33 = sld [smem:[%s32]]
  %s34 = scalar_lea.smem %s0, 17
  %s35 = sld [smem:[%s34]]
  %s36 = scalar_lea.smem %s0, 18
  %s37 = sld [smem:[%s36]]
  %s38 = scalar_lea.smem %s0, 19
  %s39 = sld [smem:[%s38]]
  %s40 = scalar_lea.smem %s0, 20
  %s41 = sld [smem:[%s40]]
  %s42 = scalar_lea.smem %s0, 21
  %s43 = sld [smem:[%s42]]
  %s44 = scalar_lea.smem %s0, 22
  %s45 = sld [smem:[%s44]]
  %s46 = scalar_lea.smem %s0, 23
  %s47 = sld [smem:[%s46]]
  %s48 = scalar_lea.smem %s0, 24
  %s49 = sld [smem:[%s48]]
  %s50 = scalar_lea.smem %s0, 25
  %s51 = sld [smem:[%s50]]
  %s52 = scalar_lea.smem %s0, 26
  %s53 = sld [smem:[%s52]]
  %s54 = scalar_lea.smem %s0, 27
  %s55 = sld [smem:[%s54]]
  %s56 = scalar_lea.smem %s0, 28
  %s57 = sld [smem:[%s56]]
  %s58 = scalar_lea.smem %s0, 29
  %s59 = sld [smem:[%s58]]
  %s60 = scalar_lea.smem %s0, 30
  %s61 = sld [smem:[%s60]]
  %s62 = scalar_lea.smem %s0, 31
  %s63 = sld [smem:[%s62]]
  %s64 = scalar_lea.smem %s0, 32
  %s65 = sld [smem:[%s64]]
  %s66 = scalar_lea.smem %s0, 33
  %s67 = sld [smem:[%s66]]
  %s68 = scalar_lea.smem %s0, 34
  %s69 = sld [smem:[%s68]]
  %s70 = scalar_lea.smem %s0, 35
  %s71 = sld [smem:[%s70]]
  %s72 = scalar_lea.smem %s0, 36
  %s73 = sld [smem:[%s72]]
  %s74 = scalar_lea.smem %s0, 37
  %s75 = sld [smem:[%s74]]
  %s76 = scalar_lea.smem %s0, 38
  %s77 = sld [smem:[%s76]]
  %s78 = scalar_lea.smem %s0, 39
  %s79 = sld [smem:[%s78]]
  %s80 = scalar_lea.smem %s0, 40
  %s81 = sld [smem:[%s80]]
  %s82 = scalar_lea.smem %s0, 41
  %s83 = sld [smem:[%s82]]
  %s84 = scalar_lea.smem %s0, 42
  %s85 = sld [smem:[%s84]]
  %s86 = scalar_lea.smem %s0, 43
  %s87 = sld [smem:[%s86]]
  %s88 = scalar_lea.smem %s0, 44
  %s89 = sld [smem:[%s88]]
  %s90 = scalar_lea.smem %s0, 45
  %s91 = sld [smem:[%s90]]
  %s92 = scalar_lea.smem %s0, 46
  %s93 = sld [smem:[%s92]]
  %s94 = scalar_lea.smem %s0, 47
  %s95 = sld [smem:[%s94]]
  %s96 = scalar_lea.smem %s0, 48
  %s97 = sld [smem:[%s96]]
  %s98 = scalar_lea.smem %s0, 49
  %s99 = sld [smem:[%s98]]
  %s100 = scalar_lea.smem %s0, 50
  %s101 = sld [smem:[%s100]]
  %s102 = scalar_lea.smem %s0, 51
  %s103 = sld [smem:[%s102]]
  %s104 = scalar_lea.smem %s0, 52
  %s105 = sld [smem:[%s104]]
  %s106 = scalar_lea.smem %s0, 53
  %s107 = sld [smem:[%s106]]
  %s108 = sld [smem:[#allocation0]]
  $region349: #{tpu_custom_call.1} parent=0
    _
  %s110 = ssub.s32 1, %s108
  %s111 = scalar_select 0, %s110, %s108
  $region1: #{tpu_custom_call.1} parent=0
    #allocation2 [shape = 'u8[512]{0}', space=vmem, size = 0x400, scoped, tag = 'input window, operand 2, single buffered']
    #allocation3 [shape = 's32[2]{0}', space=sflag, size = 0x8, scoped, tag = 'scoped memory for tpu_custom_call.1']
    #allocation4 [shape = 's32[2]{0}', space=sflag, size = 0x8, scoped, tag = 'scoped memory for tpu_custom_call.1']
    #allocation5 [shape = 'u8[1536]{0}', space=vmem, size = 0x800, scoped, tag = 'input window, operand 3, single buffered']
    #allocation6 [shape = 's32[1]{0}', space=sflag, size = 0x4, scoped, tag = 'scoped memory for tpu_custom_call.1']
    #allocation7 [shape = 'u8[512]{0}', space=vmem, size = 0x400, scoped, tag = 'input window, operand 4, single buffered']
    #allocation8 [shape = 'u8[512]{0}', space=vmem, size = 0x400, scoped, tag = 'input window, operand 6, single buffered']
    #allocation9 [shape = 's32[1]{0}', space=sflag, size = 0x4, scoped, tag = 'scoped memory for tpu_custom_call.1']
    #allocation10 [shape = 'u8[512]{0}', space=vmem, size = 0x400, scoped, tag = 'input window, operand 8, single buffered']
    #allocation11 [shape = 'u8[512]{0}', space=vmem, size = 0x400, scoped, tag = 'input window, operand 10, single buffered']
    #allocation12 [shape = 's32[1]{0}', space=sflag, size = 0x4, scoped, tag = 'scoped memory for tpu_custom_call.1']
    #allocation13 [shape = 'u8[512]{0}', space=vmem, size = 0x400, scoped, tag = 'input window, operand 12, single buffered']
    #allocation14 [shape = 'u8[8192]{0}', space=vmem, size = 0x2000, scoped, tag = 'input window, operand 13, single buffered']
    #allocation15 [shape = 's32[1]{0}', space=sflag, size = 0x4, scoped, tag = 'scoped memory for tpu_custom_call.1']
    #allocation16 [shape = 'u8[512]{0}', space=vmem, size = 0x400, scoped, tag = 'input window, operand 14, single buffered']
    #allocation17 [shape = 'u8[512]{0}', space=vmem, size = 0x400, scoped, tag = 'input window, operand 16, single buffered']
    #allocation18 [shape = 's32[1]{0}', space=sflag, size = 0x4, scoped, tag = 'scoped memory for tpu_custom_call.1']
    #allocation19 [shape = 'u8[16384]{0}', space=vmem, size = 0x4000, scoped, tag = 'input window, operand 17, single buffered']
    #allocation20 [shape = 'u8[512]{0}', space=vmem, size = 0x400, scoped, tag = 'input window, operand 18, single buffered']
    #allocation21 [shape = 's32[1]{0}', space=sflag, size = 0x4, scoped, tag = 'scoped memory for tpu_custom_call.1']
    #allocation22 [shape = 'u8[512]{0}', space=vmem, size = 0x400, scoped, tag = 'input window, operand 20, single buffered']
    #allocation23 [shape = 'u8[16384]{0}', space=vmem, size = 0x4000, scoped, tag = 'input window, operand 21, single buffered']
    #allocation24 [shape = 's32[1]{0}', space=sflag, size = 0x4, scoped, tag = 'scoped memory for tpu_custom_call.1']
    #allocation25 [shape = 'u8[512]{0}', space=vmem, size = 0x400, scoped, tag = 'input window, operand 22, single buffered']
    #allocation26 [shape = 'u8[512]{0}', space=vmem, size = 0x400, scoped, tag = 'input window, operand 24, single buffered']
    #allocation27 [shape = 's32[1]{0}', space=sflag, size = 0x4, scoped, tag = 'scoped memory for tpu_custom_call.1']
    #allocation28 [shape = 'u8[16384]{0}', space=vmem, size = 0x4000, scoped, tag = 'input window, operand 25, single buffered']
    #allocation29 [shape = 'u8[512]{0}', space=vmem, size = 0x400, scoped, tag = 'input window, operand 26, single buffered']
    #allocation30 [shape = 's32[1]{0}', space=sflag, size = 0x4, scoped, tag = 'scoped memory for tpu_custom_call.1']
    #allocation31 [shape = 'u8[512]{0}', space=vmem, size = 0x400, scoped, tag = 'input window, operand 28, single buffered']
    #allocation32 [shape = 'u8[16384]{0}', space=vmem, size = 0x4000, scoped, tag = 'input window, operand 29, single buffered']
    #allocation33 [shape = 's32[1]{0}', space=sflag, size = 0x4, scoped, tag = 'scoped memory for tpu_custom_call.1']
    #allocation34 [shape = 'u8[512]{0}', space=vmem, size = 0x400, scoped, tag = 'input window, operand 30, single buffered']
    #allocation35 [shape = 'u8[512]{0}', space=vmem, size = 0x400, scoped, tag = 'input window, operand 32, single buffered']
    #allocation36 [shape = 's32[1]{0}', space=sflag, size = 0x4, scoped, tag = 'scoped memory for tpu_custom_call.1']
    #allocation37 [shape = 'u8[512]{0}', space=vmem, size = 0x400, scoped, tag = 'input window, operand 34, single buffered']
    #allocation38 [shape = 'u8[512]{0}', space=vmem, size = 0x400, scoped, tag = 'input window, operand 38, single buffered']
    #allocation39 [shape = 's32[1]{0}', space=sflag, size = 0x4, scoped, tag = 'scoped memory for tpu_custom_call.1']
    #allocation40 [shape = 'u8[32768]{0}', space=vmem, size = 0x8000, scoped, tag = 'input window, operand 41, single buffered']
    #allocation41 [shape = 'u8[32768]{0}', space=vmem, size = 0x8000, scoped, tag = 'input window, operand 45, single buffered']
    #allocation42 [shape = 's32[1]{0}', space=sflag, size = 0x4, scoped, tag = 'scoped memory for tpu_custom_call.1']
    #allocation43 [shape = 'u8[1024]{0}', space=vmem, size = 0x400, scoped, tag = 'output window, operand 0']
    %112 = vsyncpa [#allocation3], 0
    %113 = vsyncpa [#allocation6], 0
    %114 = vsyncpa [#allocation9], 0
    %115 = vsyncpa [#allocation12], 0
    %116 = vsyncpa [#allocation15], 0
    %117 = vsyncpa [#allocation18], 0
    %118 = vsyncpa [#allocation21], 0
    %119 = vsyncpa [#allocation24], 0
    %120 = vsyncpa [#allocation27], 0
    %121 = vsyncpa [#allocation30], 0
    %122 = vsyncpa [#allocation33], 0
    %123 = vsyncpa [#allocation36], 0
    %124 = vsyncpa [#allocation39], 0
    %125 = vsyncpa [#allocation42], 0
    %126 = vsyncpa [#allocation4], 0
    %s127 = scalar_lea.sflag [#allocation4], 1
    %128 = vsyncpa %s127, 0
    loop: start=0, step=1, limit=4
    $region2: #{tpu_custom_call.1} parent=1 // loop_pre_header
      _
    $region3: #{tpu_custom_call.1} parent=1 // loop_header
      %s130 = sphi 0, %s134
      %p131 = scmp.ge.s32.totalorder %s130, 4
      %s140 = sphi 0, %s142
      %s143 = sphi 0, %s140
      %s144 = sphi 0, %s143
      %s160 = sphi 0, %s144
      %s164 = sphi 0, %s164
      %s166 = sphi 0, %s164
      %s167 = sphi 0, %s166
      %s181 = sphi 0, %s167
      %s185 = sphi 0, %s185
      %s187 = sphi 0, %s185
      %s188 = sphi 0, %s187
      %s202 = sphi 0, %s188
      %s206 = sphi 0, %s206
      %s208 = sphi 0, %s206
      %s209 = sphi 0, %s208
      %s223 = sphi 0, %s209
      %s227 = sphi 0, %s227
      %s229 = sphi 0, %s227
      %s230 = sphi 0, %s229
      %s244 = sphi 0, %s230
      %s248 = sphi 0, %s248
      %s250 = sphi 0, %s248
      %s251 = sphi 0, %s250
      %s265 = sphi 0, %s251
      %s269 = sphi 0, %s269
      %s271 = sphi 0, %s269
      %s272 = sphi 0, %s271
      %s286 = sphi 0, %s272
      %s290 = sphi 0, %s290
      %s292 = sphi 0, %s290
      %s293 = sphi 0, %s292
      %s307 = sphi 0, %s293
      %s311 = sphi 0, %s311
      %s313 = sphi 0, %s311
      %s314 = sphi 0, %s313
      %s328 = sphi 0, %s314
      %s332 = sphi 0, %s332
      %s334 = sphi 0, %s332
      %s335 = sphi 0, %s334
      %s349 = sphi 0, %s335
      %s353 = sphi 0, %s353
      %s355 = sphi 0, %s353
      %s356 = sphi 0, %s355
      %s370 = sphi 0, %s356
      %s374 = sphi 0, %s374
      %s376 = sphi 0, %s374
      %s377 = sphi 0, %s376
      %s391 = sphi 0, %s377
      %s395 = sphi 0, %s395
      %s397 = sphi 0, %s395
      %s398 = sphi 0, %s397
      %s412 = sphi 0, %s398
      %s416 = sphi 0, %s416
      %s418 = sphi 0, %s416
      %s419 = sphi 0, %s418
      %s433 = sphi 0, %s419
      %s437 = sphi 0, %s437
      %s439 = sphi 0, %s437
      %s440 = sphi 0, %s439
      %s454 = sphi 0, %s440
      %s458 = sphi 0, %s458
      %s460 = sphi 0, %s458
      %s461 = sphi 0, %s460
      %s475 = sphi 0, %s461
      %s479 = sphi 0, %s479
      %s481 = sphi 0, %s479
      %s482 = sphi 0, %s481
      %s496 = sphi 0, %s482
      %s500 = sphi 0, %s500
      %s502 = sphi 0, %s500
      %s503 = sphi 0, %s502
      %s517 = sphi 0, %s503
      %s521 = sphi 0, %s521
      %s523 = sphi 0, %s521
      %s524 = sphi 0, %s523
      %s538 = sphi 0, %s524
      %s542 = sphi 0, %s542
      %s544 = sphi 0, %s542
      %s545 = sphi 0, %s544
      %s559 = sphi 0, %s545
      %s563 = sphi 0, %s563
      %s565 = sphi 0, %s563
      %s566 = sphi 0, %s565
      %s580 = sphi 0, %s566
      %s584 = sphi 0, %s584
      %s586 = sphi 0, %s584
      %s587 = sphi 0, %s586
      %s601 = sphi 0, %s587
      %s605 = sphi 0, %s605
      %s607 = sphi 0, %s605
      %s608 = sphi 0, %s607
      %s622 = sphi 0, %s608
      %s626 = sphi 0, %s626
      %s628 = sphi 0, %s626
      %s629 = sphi 0, %s628
      %s643 = sphi 0, %s629
      %s647 = sphi 0, %s647
      %s649 = sphi 0, %s647
      %s650 = sphi 0, %s649
      %s664 = sphi 0, %s650
      %s668 = sphi 0, %s668
      %s670 = sphi 0, %s668
      %s671 = sphi 0, %s670
      %s685 = sphi 0, %s671
      %s689 = sphi 0, %s689
      %s691 = sphi 0, %s689
      %s692 = sphi 0, %s691
      %s706 = sphi 0, %s692
      %s710 = sphi 0, %s710
      %s712 = sphi 0, %s710
      %s713 = sphi 0, %s712
      %s727 = sphi 0, %s713
      %s731 = sphi 0, %s731
      %s733 = sphi 0, %s731
      %s734 = sphi 0, %s733
      %s748 = sphi 0, %s734
      %s752 = sphi 0, %s752
      %s754 = sphi 0, %s752
      %s755 = sphi 0, %s754
      %s769 = sphi 0, %s755
      %s773 = sphi 0, %s773
      %s775 = sphi 0, %s773
      %s776 = sphi 0, %s775
      %s790 = sphi 0, %s776
      %s794 = sphi 0, %s794
      %s796 = sphi 0, %s794
      %s797 = sphi 0, %s796
      %s811 = sphi 0, %s797
      %s815 = sphi 0, %s815
      %s817 = sphi 0, %s815
      %s818 = sphi 0, %s817
      %s832 = sphi 0, %s818
      %s836 = sphi 0, %s836
      %s838 = sphi 0, %s836
      %s839 = sphi 0, %s838
      %s853 = sphi 0, %s839
      %s857 = sphi 0, %s857
      %s859 = sphi 0, %s857
      %s860 = sphi 0, %s859
      %s874 = sphi 0, %s860
      %s878 = sphi 0, %s878
      %s880 = sphi 0, %s878
      %s881 = sphi 0, %s880
      %s895 = sphi 0, %s881
      %s899 = sphi 0, %s899
      %s901 = sphi 0, %s899
      %s902 = sphi 0, %s901
      %s916 = sphi 0, %s902
      %s920 = sphi 0, %s920
      %s922 = sphi 0, %s920
      %s923 = sphi 0, %s922
      %s937 = sphi 0, %s923
      %s941 = sphi 0, %s941
      %s943 = sphi 0, %s941
      %s944 = sphi 0, %s943
      %s958 = sphi 0, %s944
      %s962 = sphi 0, %s962
      %s964 = sphi 0, %s962
      %s965 = sphi 0, %s964
      %s979 = sphi 0, %s965
      %s983 = sphi 0, %s983
      %s985 = sphi 0, %s983
      %s986 = sphi 0, %s985
      %s1000 = sphi 0, %s986
      %s1004 = sphi 0, %s1004
      %s1006 = sphi 0, %s1004
      %s1007 = sphi 0, %s1006
      %s1021 = sphi 0, %s1007
      %s1025 = sphi 0, %s1025
      %s1027 = sphi 0, %s1025
      %s1028 = sphi 0, %s1027
      %s1042 = sphi 0, %s1028
      %s1046 = sphi 0, %s1046
      %s1048 = sphi 0, %s1046
      %s1049 = sphi 0, %s1048
      %s1063 = sphi 0, %s1049
      %s1067 = sphi 0, %s1067
      %s1069 = sphi 0, %s1067
      %s1070 = sphi 0, %s1069
      %s1084 = sphi 0, %s1070
      %s1088 = sphi 0, %s1088
      %s1090 = sphi 0, %s1088
      %s1091 = sphi 0, %s1090
      %s1105 = sphi 0, %s1091
      %s1109 = sphi 0, %s1109
      %s1111 = sphi 0, %s1109
      %s1112 = sphi 0, %s1111
      %s1126 = sphi 0, %s1112
      %s1130 = sphi 0, %s1130
      %s1132 = sphi 0, %s1130
      %s1133 = sphi 0, %s1132
      %s1147 = sphi 0, %s1133
      %s1151 = sphi 0, %s1151
      %s1153 = sphi 0, %s1151
      %s1154 = sphi 0, %s1153
      %s1168 = sphi 0, %s1154
      %s1172 = sphi 0, %s1172
      %s1174 = sphi 0, %s1172
      %s1175 = sphi 0, %s1174
      %s1189 = sphi 0, %s1175
      %s1193 = sphi 0, %s1193
      %s1195 = sphi 0, %s1193
      %s1196 = sphi 0, %s1195
      %s1210 = sphi 0, %s1196
      %s1214 = sphi 0, %s1214
      %s1216 = sphi 0, %s1214
      %s1217 = sphi 0, %s1216
      %s1231 = sphi 0, %s1217
      %s1235 = sphi 0, %s1235
      %s1237 = sphi 0, %s1235
      %s1238 = sphi 0, %s1237
      %s1252 = sphi 0, %s1238
      %s1258 = sphi 0, %s1260
      %s1261 = sphi 0, %s1258
      %s1262 = sphi 0, %s1261
      %s1278 = sphi 0, %s1262
    $region4: #{tpu_custom_call.1} parent=1 // loop_header_branch
      %133 = sbr.rel (%p131) target = $region8
    $region5: #{tpu_custom_call.1} parent=1 // loop_body
      %s135 = ssub.s32 %s130, 1
      %s136 = ssub.s32 %s130, 2
      %s137 = sadd.s32 %s130, 1
      %s138 = ssub.s32 %s130, %s137
      %p139 = scmp.eq.s32.totalorder %s138, 0
      %s141 = sadd.s32 %s140, 1
      %s142 = scalar_select %p139, %s140, %s141
      %p145 = pneg %p139
      %p146 = scmp.eq.s32.totalorder %s130, 1
      %p147 = por %p145, %p146
      %p148 = scmp.ne.s32.totalorder %s140, %s143
      %p149 = scmp.eq.s32.totalorder %s130, 0
      %p150 = por %p148, %p149
      %p151 = scmp.ne.s32.totalorder %s140, %s143
      %p152 = scmp.eq.s32.totalorder %s135, 1
      %p153 = por %p151, %p152
      %p154 = scmp.ne.s32.totalorder %s143, %s144
      %p155 = scmp.eq.s32.totalorder %s135, 0
      %p156 = por %p154, %p155
      %p157 = scmp.ne.s32.totalorder %s143, %s144
      %p158 = scmp.eq.s32.totalorder %s136, 1
      %p159 = por %p157, %p158
      %p161 = scmp.ne.s32.totalorder %s144, %s160
      %p162 = scmp.eq.s32.totalorder %s136, 0
      %p163 = por %p161, %p162
      %s165 = sadd.s32 %s164, 1
      %p168 = scmp.eq.s32.totalorder %s130, 1
      %p169 = scmp.ne.s32.totalorder %s164, %s166
      %p170 = scmp.eq.s32.totalorder %s130, 0
      %p171 = por %p169, %p170
      %p172 = scmp.ne.s32.totalorder %s164, %s166
      %p173 = scmp.eq.s32.totalorder %s135, 1
      %p174 = por %p172, %p173
      %p175 = scmp.ne.s32.totalorder %s166, %s167
      %p176 = scmp.eq.s32.totalorder %s135, 0
      %p177 = por %p175, %p176
      %p178 = scmp.ne.s32.totalorder %s166, %s167
      %p179 = scmp.eq.s32.totalorder %s136, 1
      %p180 = por %p178, %p179
      %p182 = scmp.ne.s32.totalorder %s167, %s181
      %p183 = scmp.eq.s32.totalorder %s136, 0
      %p184 = por %p182, %p183
      %s186 = sadd.s32 %s185, 1
      %p189 = scmp.eq.s32.totalorder %s130, 1
      %p190 = scmp.ne.s32.totalorder %s185, %s187
      %p191 = scmp.eq.s32.totalorder %s130, 0
      %p192 = por %p190, %p191
      %p193 = scmp.ne.s32.totalorder %s185, %s187
      %p194 = scmp.eq.s32.totalorder %s135, 1
      %p195 = por %p193, %p194
      %p196 = scmp.ne.s32.totalorder %s187, %s188
      %p197 = scmp.eq.s32.totalorder %s135, 0
      %p198 = por %p196, %p197
      %p199 = scmp.ne.s32.totalorder %s187, %s188
      %p200 = scmp.eq.s32.totalorder %s136, 1
      %p201 = por %p199, %p200
      %p203 = scmp.ne.s32.totalorder %s188, %s202
      %p204 = scmp.eq.s32.totalorder %s136, 0
      %p205 = por %p203, %p204
      %s207 = sadd.s32 %s206, 1
      %p210 = scmp.eq.s32.totalorder %s130, 1
      %p211 = scmp.ne.s32.totalorder %s206, %s208
      %p212 = scmp.eq.s32.totalorder %s130, 0
      %p213 = por %p211, %p212
      %p214 = scmp.ne.s32.totalorder %s206, %s208
      %p215 = scmp.eq.s32.totalorder %s135, 1
      %p216 = por %p214, %p215
      %p217 = scmp.ne.s32.totalorder %s208, %s209
      %p218 = scmp.eq.s32.totalorder %s135, 0
      %p219 = por %p217, %p218
      %p220 = scmp.ne.s32.totalorder %s208, %s209
      %p221 = scmp.eq.s32.totalorder %s136, 1
      %p222 = por %p220, %p221
      %p224 = scmp.ne.s32.totalorder %s209, %s223
      %p225 = scmp.eq.s32.totalorder %s136, 0
      %p226 = por %p224, %p225
      %s228 = sadd.s32 %s227, 1
      %p231 = scmp.eq.s32.totalorder %s130, 1
      %p232 = scmp.ne.s32.totalorder %s227, %s229
      %p233 = scmp.eq.s32.totalorder %s130, 0
      %p234 = por %p232, %p233
      %p235 = scmp.ne.s32.totalorder %s227, %s229
      %p236 = scmp.eq.s32.totalorder %s135, 1
      %p237 = por %p235, %p236
      %p238 = scmp.ne.s32.totalorder %s229, %s230
      %p239 = scmp.eq.s32.totalorder %s135, 0
      %p240 = por %p238, %p239
      %p241 = scmp.ne.s32.totalorder %s229, %s230
      %p242 = scmp.eq.s32.totalorder %s136, 1
      %p243 = por %p241, %p242
      %p245 = scmp.ne.s32.totalorder %s230, %s244
      %p246 = scmp.eq.s32.totalorder %s136, 0
      %p247 = por %p245, %p246
      %s249 = sadd.s32 %s248, 1
      %p252 = scmp.eq.s32.totalorder %s130, 1
      %p253 = scmp.ne.s32.totalorder %s248, %s250
      %p254 = scmp.eq.s32.totalorder %s130, 0
      %p255 = por %p253, %p254
      %p256 = scmp.ne.s32.totalorder %s248, %s250
      %p257 = scmp.eq.s32.totalorder %s135, 1
      %p258 = por %p256, %p257
      %p259 = scmp.ne.s32.totalorder %s250, %s251
      %p260 = scmp.eq.s32.totalorder %s135, 0
      %p261 = por %p259, %p260
      %p262 = scmp.ne.s32.totalorder %s250, %s251
      %p263 = scmp.eq.s32.totalorder %s136, 1
      %p264 = por %p262, %p263
      %p266 = scmp.ne.s32.totalorder %s251, %s265
      %p267 = scmp.eq.s32.totalorder %s136, 0
      %p268 = por %p266, %p267
      %s270 = sadd.s32 %s269, 1
      %p273 = scmp.eq.s32.totalorder %s130, 1
      %p274 = scmp.ne.s32.totalorder %s269, %s271
      %p275 = scmp.eq.s32.totalorder %s130, 0
      %p276 = por %p274, %p275
      %p277 = scmp.ne.s32.totalorder %s269, %s271
      %p278 = scmp.eq.s32.totalorder %s135, 1
      %p279 = por %p277, %p278
      %p280 = scmp.ne.s32.totalorder %s271, %s272
      %p281 = scmp.eq.s32.totalorder %s135, 0
      %p282 = por %p280, %p281
      %p283 = scmp.ne.s32.totalorder %s271, %s272
      %p284 = scmp.eq.s32.totalorder %s136, 1
      %p285 = por %p283, %p284
      %p287 = scmp.ne.s32.totalorder %s272, %s286
      %p288 = scmp.eq.s32.totalorder %s136, 0
      %p289 = por %p287, %p288
      %s291 = sadd.s32 %s290, 1
      %p294 = scmp.eq.s32.totalorder %s130, 1
      %p295 = scmp.ne.s32.totalorder %s290, %s292
      %p296 = scmp.eq.s32.totalorder %s130, 0
      %p297 = por %p295, %p296
      %p298 = scmp.ne.s32.totalorder %s290, %s292
      %p299 = scmp.eq.s32.totalorder %s135, 1
      %p300 = por %p298, %p299
      %p301 = scmp.ne.s32.totalorder %s292, %s293
      %p302 = scmp.eq.s32.totalorder %s135, 0
      %p303 = por %p301, %p302
      %p304 = scmp.ne.s32.totalorder %s292, %s293
      %p305 = scmp.eq.s32.totalorder %s136, 1
      %p306 = por %p304, %p305
      %p308 = scmp.ne.s32.totalorder %s293, %s307
      %p309 = scmp.eq.s32.totalorder %s136, 0
      %p310 = por %p308, %p309
      %s312 = sadd.s32 %s311, 1
      %p315 = scmp.eq.s32.totalorder %s130, 1
      %p316 = scmp.ne.s32.totalorder %s311, %s313
      %p317 = scmp.eq.s32.totalorder %s130, 0
      %p318 = por %p316, %p317
      %p319 = scmp.ne.s32.totalorder %s311, %s313
      %p320 = scmp.eq.s32.totalorder %s135, 1
      %p321 = por %p319, %p320
      %p322 = scmp.ne.s32.totalorder %s313, %s314
      %p323 = scmp.eq.s32.totalorder %s135, 0
      %p324 = por %p322, %p323
      %p325 = scmp.ne.s32.totalorder %s313, %s314
      %p326 = scmp.eq.s32.totalorder %s136, 1
      %p327 = por %p325, %p326
      %p329 = scmp.ne.s32.totalorder %s314, %s328
      %p330 = scmp.eq.s32.totalorder %s136, 0
      %p331 = por %p329, %p330
      %s333 = sadd.s32 %s332, 1
      %p336 = scmp.eq.s32.totalorder %s130, 1
      %p337 = scmp.ne.s32.totalorder %s332, %s334
      %p338 = scmp.eq.s32.totalorder %s130, 0
      %p339 = por %p337, %p338
      %p340 = scmp.ne.s32.totalorder %s332, %s334
      %p341 = scmp.eq.s32.totalorder %s135, 1
      %p342 = por %p340, %p341
      %p343 = scmp.ne.s32.totalorder %s334, %s335
      %p344 = scmp.eq.s32.totalorder %s135, 0
      %p345 = por %p343, %p344
      %p346 = scmp.ne.s32.totalorder %s334, %s335
      %p347 = scmp.eq.s32.totalorder %s136, 1
      %p348 = por %p346, %p347
      %p350 = scmp.ne.s32.totalorder %s335, %s349
      %p351 = scmp.eq.s32.totalorder %s136, 0
      %p352 = por %p350, %p351
      %s354 = sadd.s32 %s353, 1
      %p357 = scmp.eq.s32.totalorder %s130, 1
      %p358 = scmp.ne.s32.totalorder %s353, %s355
      %p359 = scmp.eq.s32.totalorder %s130, 0
      %p360 = por %p358, %p359
      %p361 = scmp.ne.s32.totalorder %s353, %s355
      %p362 = scmp.eq.s32.totalorder %s135, 1
      %p363 = por %p361, %p362
      %p364 = scmp.ne.s32.totalorder %s355, %s356
      %p365 = scmp.eq.s32.totalorder %s135, 0
      %p366 = por %p364, %p365
      %p367 = scmp.ne.s32.totalorder %s355, %s356
      %p368 = scmp.eq.s32.totalorder %s136, 1
      %p369 = por %p367, %p368
      %p371 = scmp.ne.s32.totalorder %s356, %s370
      %p372 = scmp.eq.s32.totalorder %s136, 0
      %p373 = por %p371, %p372
      %s375 = sadd.s32 %s374, 1
      %p378 = scmp.eq.s32.totalorder %s130, 1
      %p379 = scmp.ne.s32.totalorder %s374, %s376
      %p380 = scmp.eq.s32.totalorder %s130, 0
      %p381 = por %p379, %p380
      %p382 = scmp.ne.s32.totalorder %s374, %s376
      %p383 = scmp.eq.s32.totalorder %s135, 1
      %p384 = por %p382, %p383
      %p385 = scmp.ne.s32.totalorder %s376, %s377
      %p386 = scmp.eq.s32.totalorder %s135, 0
      %p387 = por %p385, %p386
      %p388 = scmp.ne.s32.totalorder %s376, %s377
      %p389 = scmp.eq.s32.totalorder %s136, 1
      %p390 = por %p388, %p389
      %p392 = scmp.ne.s32.totalorder %s377, %s391
      %p393 = scmp.eq.s32.totalorder %s136, 0
      %p394 = por %p392, %p393
      %s396 = sadd.s32 %s395, 1
      %p399 = scmp.eq.s32.totalorder %s130, 1
      %p400 = scmp.ne.s32.totalorder %s395, %s397
      %p401 = scmp.eq.s32.totalorder %s130, 0
      %p402 = por %p400, %p401
      %p403 = scmp.ne.s32.totalorder %s395, %s397
      %p404 = scmp.eq.s32.totalorder %s135, 1
      %p405 = por %p403, %p404
      %p406 = scmp.ne.s32.totalorder %s397, %s398
      %p407 = scmp.eq.s32.totalorder %s135, 0
      %p408 = por %p406, %p407
      %p409 = scmp.ne.s32.totalorder %s397, %s398
      %p410 = scmp.eq.s32.totalorder %s136, 1
      %p411 = por %p409, %p410
      %p413 = scmp.ne.s32.totalorder %s398, %s412
      %p414 = scmp.eq.s32.totalorder %s136, 0
      %p415 = por %p413, %p414
      %s417 = sadd.s32 %s416, 1
      %p420 = scmp.eq.s32.totalorder %s130, 1
      %p421 = scmp.ne.s32.totalorder %s416, %s418
      %p422 = scmp.eq.s32.totalorder %s130, 0
      %p423 = por %p421, %p422
      %p424 = scmp.ne.s32.totalorder %s416, %s418
      %p425 = scmp.eq.s32.totalorder %s135, 1
      %p426 = por %p424, %p425
      %p427 = scmp.ne.s32.totalorder %s418, %s419
      %p428 = scmp.eq.s32.totalorder %s135, 0
      %p429 = por %p427, %p428
      %p430 = scmp.ne.s32.totalorder %s418, %s419
      %p431 = scmp.eq.s32.totalorder %s136, 1
      %p432 = por %p430, %p431
      %p434 = scmp.ne.s32.totalorder %s419, %s433
      %p435 = scmp.eq.s32.totalorder %s136, 0
      %p436 = por %p434, %p435
      %s438 = sadd.s32 %s437, 1
      %p441 = scmp.eq.s32.totalorder %s130, 1
      %p442 = scmp.ne.s32.totalorder %s437, %s439
      %p443 = scmp.eq.s32.totalorder %s130, 0
      %p444 = por %p442, %p443
      %p445 = scmp.ne.s32.totalorder %s437, %s439
      %p446 = scmp.eq.s32.totalorder %s135, 1
      %p447 = por %p445, %p446
      %p448 = scmp.ne.s32.totalorder %s439, %s440
      %p449 = scmp.eq.s32.totalorder %s135, 0
      %p450 = por %p448, %p449
      %p451 = scmp.ne.s32.totalorder %s439, %s440
      %p452 = scmp.eq.s32.totalorder %s136, 1
      %p453 = por %p451, %p452
      %p455 = scmp.ne.s32.totalorder %s440, %s454
      %p456 = scmp.eq.s32.totalorder %s136, 0
      %p457 = por %p455, %p456
      %s459 = sadd.s32 %s458, 1
      %p462 = scmp.eq.s32.totalorder %s130, 1
      %p463 = scmp.ne.s32.totalorder %s458, %s460
      %p464 = scmp.eq.s32.totalorder %s130, 0
      %p465 = por %p463, %p464
      %p466 = scmp.ne.s32.totalorder %s458, %s460
      %p467 = scmp.eq.s32.totalorder %s135, 1
      %p468 = por %p466, %p467
      %p469 = scmp.ne.s32.totalorder %s460, %s461
      %p470 = scmp.eq.s32.totalorder %s135, 0
      %p471 = por %p469, %p470
      %p472 = scmp.ne.s32.totalorder %s460, %s461
      %p473 = scmp.eq.s32.totalorder %s136, 1
      %p474 = por %p472, %p473
      %p476 = scmp.ne.s32.totalorder %s461, %s475
      %p477 = scmp.eq.s32.totalorder %s136, 0
      %p478 = por %p476, %p477
      %s480 = sadd.s32 %s479, 1
      %p483 = scmp.eq.s32.totalorder %s130, 1
      %p484 = scmp.ne.s32.totalorder %s479, %s481
      %p485 = scmp.eq.s32.totalorder %s130, 0
      %p486 = por %p484, %p485
      %p487 = scmp.ne.s32.totalorder %s479, %s481
      %p488 = scmp.eq.s32.totalorder %s135, 1
      %p489 = por %p487, %p488
      %p490 = scmp.ne.s32.totalorder %s481, %s482
      %p491 = scmp.eq.s32.totalorder %s135, 0
      %p492 = por %p490, %p491
      %p493 = scmp.ne.s32.totalorder %s481, %s482
      %p494 = scmp.eq.s32.totalorder %s136, 1
      %p495 = por %p493, %p494
      %p497 = scmp.ne.s32.totalorder %s482, %s496
      %p498 = scmp.eq.s32.totalorder %s136, 0
      %p499 = por %p497, %p498
      %s501 = sadd.s32 %s500, 1
      %p504 = scmp.eq.s32.totalorder %s130, 1
      %p505 = scmp.ne.s32.totalorder %s500, %s502
      %p506 = scmp.eq.s32.totalorder %s130, 0
      %p507 = por %p505, %p506
      %p508 = scmp.ne.s32.totalorder %s500, %s502
      %p509 = scmp.eq.s32.totalorder %s135, 1
      %p510 = por %p508, %p509
      %p511 = scmp.ne.s32.totalorder %s502, %s503
      %p512 = scmp.eq.s32.totalorder %s135, 0
      %p513 = por %p511, %p512
      %p514 = scmp.ne.s32.totalorder %s502, %s503
      %p515 = scmp.eq.s32.totalorder %s136, 1
      %p516 = por %p514, %p515
      %p518 = scmp.ne.s32.totalorder %s503, %s517
      %p519 = scmp.eq.s32.totalorder %s136, 0
      %p520 = por %p518, %p519
      %s522 = sadd.s32 %s521, 1
      %p525 = scmp.eq.s32.totalorder %s130, 1
      %p526 = scmp.ne.s32.totalorder %s521, %s523
      %p527 = scmp.eq.s32.totalorder %s130, 0
      %p528 = por %p526, %p527
      %p529 = scmp.ne.s32.totalorder %s521, %s523
      %p530 = scmp.eq.s32.totalorder %s135, 1
      %p531 = por %p529, %p530
      %p532 = scmp.ne.s32.totalorder %s523, %s524
      %p533 = scmp.eq.s32.totalorder %s135, 0
      %p534 = por %p532, %p533
      %p535 = scmp.ne.s32.totalorder %s523, %s524
      %p536 = scmp.eq.s32.totalorder %s136, 1
      %p537 = por %p535, %p536
      %p539 = scmp.ne.s32.totalorder %s524, %s538
      %p540 = scmp.eq.s32.totalorder %s136, 0
      %p541 = por %p539, %p540
      %s543 = sadd.s32 %s542, 1
      %p546 = scmp.eq.s32.totalorder %s130, 1
      %p547 = scmp.ne.s32.totalorder %s542, %s544
      %p548 = scmp.eq.s32.totalorder %s130, 0
      %p549 = por %p547, %p548
      %p550 = scmp.ne.s32.totalorder %s542, %s544
      %p551 = scmp.eq.s32.totalorder %s135, 1
      %p552 = por %p550, %p551
      %p553 = scmp.ne.s32.totalorder %s544, %s545
      %p554 = scmp.eq.s32.totalorder %s135, 0
      %p555 = por %p553, %p554
      %p556 = scmp.ne.s32.totalorder %s544, %s545
      %p557 = scmp.eq.s32.totalorder %s136, 1
      %p558 = por %p556, %p557
      %p560 = scmp.ne.s32.totalorder %s545, %s559
      %p561 = scmp.eq.s32.totalorder %s136, 0
      %p562 = por %p560, %p561
      %s564 = sadd.s32 %s563, 1
      %p567 = scmp.eq.s32.totalorder %s130, 1
      %p568 = scmp.ne.s32.totalorder %s563, %s565
      %p569 = scmp.eq.s32.totalorder %s130, 0
      %p570 = por %p568, %p569
      %p571 = scmp.ne.s32.totalorder %s563, %s565
      %p572 = scmp.eq.s32.totalorder %s135, 1
      %p573 = por %p571, %p572
      %p574 = scmp.ne.s32.totalorder %s565, %s566
      %p575 = scmp.eq.s32.totalorder %s135, 0
      %p576 = por %p574, %p575
      %p577 = scmp.ne.s32.totalorder %s565, %s566
      %p578 = scmp.eq.s32.totalorder %s136, 1
      %p579 = por %p577, %p578
      %p581 = scmp.ne.s32.totalorder %s566, %s580
      %p582 = scmp.eq.s32.totalorder %s136, 0
      %p583 = por %p581, %p582
      %s585 = sadd.s32 %s584, 1
      %p588 = scmp.eq.s32.totalorder %s130, 1
      %p589 = scmp.ne.s32.totalorder %s584, %s586
      %p590 = scmp.eq.s32.totalorder %s130, 0
      %p591 = por %p589, %p590
      %p592 = scmp.ne.s32.totalorder %s584, %s586
      %p593 = scmp.eq.s32.totalorder %s135, 1
      %p594 = por %p592, %p593
      %p595 = scmp.ne.s32.totalorder %s586, %s587
      %p596 = scmp.eq.s32.totalorder %s135, 0
      %p597 = por %p595, %p596
      %p598 = scmp.ne.s32.totalorder %s586, %s587
      %p599 = scmp.eq.s32.totalorder %s136, 1
      %p600 = por %p598, %p599
      %p602 = scmp.ne.s32.totalorder %s587, %s601
      %p603 = scmp.eq.s32.totalorder %s136, 0
      %p604 = por %p602, %p603
      %s606 = sadd.s32 %s605, 1
      %p609 = scmp.eq.s32.totalorder %s130, 1
      %p610 = scmp.ne.s32.totalorder %s605, %s607
      %p611 = scmp.eq.s32.totalorder %s130, 0
      %p612 = por %p610, %p611
      %p613 = scmp.ne.s32.totalorder %s605, %s607
      %p614 = scmp.eq.s32.totalorder %s135, 1
      %p615 = por %p613, %p614
      %p616 = scmp.ne.s32.totalorder %s607, %s608
      %p617 = scmp.eq.s32.totalorder %s135, 0
      %p618 = por %p616, %p617
      %p619 = scmp.ne.s32.totalorder %s607, %s608
      %p620 = scmp.eq.s32.totalorder %s136, 1
      %p621 = por %p619, %p620
      %p623 = scmp.ne.s32.totalorder %s608, %s622
      %p624 = scmp.eq.s32.totalorder %s136, 0
      %p625 = por %p623, %p624
      %s627 = sadd.s32 %s626, 1
      %p630 = scmp.eq.s32.totalorder %s130, 1
      %p631 = scmp.ne.s32.totalorder %s626, %s628
      %p632 = scmp.eq.s32.totalorder %s130, 0
      %p633 = por %p631, %p632
      %p634 = scmp.ne.s32.totalorder %s626, %s628
      %p635 = scmp.eq.s32.totalorder %s135, 1
      %p636 = por %p634, %p635
      %p637 = scmp.ne.s32.totalorder %s628, %s629
      %p638 = scmp.eq.s32.totalorder %s135, 0
      %p639 = por %p637, %p638
      %p640 = scmp.ne.s32.totalorder %s628, %s629
      %p641 = scmp.eq.s32.totalorder %s136, 1
      %p642 = por %p640, %p641
      %p644 = scmp.ne.s32.totalorder %s629, %s643
      %p645 = scmp.eq.s32.totalorder %s136, 0
      %p646 = por %p644, %p645
      %s648 = sadd.s32 %s647, 1
      %p651 = scmp.eq.s32.totalorder %s130, 1
      %p652 = scmp.ne.s32.totalorder %s647, %s649
      %p653 = scmp.eq.s32.totalorder %s130, 0
      %p654 = por %p652, %p653
      %p655 = scmp.ne.s32.totalorder %s647, %s649
      %p656 = scmp.eq.s32.totalorder %s135, 1
      %p657 = por %p655, %p656
      %p658 = scmp.ne.s32.totalorder %s649, %s650
      %p659 = scmp.eq.s32.totalorder %s135, 0
      %p660 = por %p658, %p659
      %p661 = scmp.ne.s32.totalorder %s649, %s650
      %p662 = scmp.eq.s32.totalorder %s136, 1
      %p663 = por %p661, %p662
      %p665 = scmp.ne.s32.totalorder %s650, %s664
      %p666 = scmp.eq.s32.totalorder %s136, 0
      %p667 = por %p665, %p666
      %s669 = sadd.s32 %s668, 1
      %p672 = scmp.eq.s32.totalorder %s130, 1
      %p673 = scmp.ne.s32.totalorder %s668, %s670
      %p674 = scmp.eq.s32.totalorder %s130, 0
      %p675 = por %p673, %p674
      %p676 = scmp.ne.s32.totalorder %s668, %s670
      %p677 = scmp.eq.s32.totalorder %s135, 1
      %p678 = por %p676, %p677
      %p679 = scmp.ne.s32.totalorder %s670, %s671
      %p680 = scmp.eq.s32.totalorder %s135, 0
      %p681 = por %p679, %p680
      %p682 = scmp.ne.s32.totalorder %s670, %s671
      %p683 = scmp.eq.s32.totalorder %s136, 1
      %p684 = por %p682, %p683
      %p686 = scmp.ne.s32.totalorder %s671, %s685
      %p687 = scmp.eq.s32.totalorder %s136, 0
      %p688 = por %p686, %p687
      %s690 = sadd.s32 %s689, 1
      %p693 = scmp.eq.s32.totalorder %s130, 1
      %p694 = scmp.ne.s32.totalorder %s689, %s691
      %p695 = scmp.eq.s32.totalorder %s130, 0
      %p696 = por %p694, %p695
      %p697 = scmp.ne.s32.totalorder %s689, %s691
      %p698 = scmp.eq.s32.totalorder %s135, 1
      %p699 = por %p697, %p698
      %p700 = scmp.ne.s32.totalorder %s691, %s692
      %p701 = scmp.eq.s32.totalorder %s135, 0
      %p702 = por %p700, %p701
      %p703 = scmp.ne.s32.totalorder %s691, %s692
      %p704 = scmp.eq.s32.totalorder %s136, 1
      %p705 = por %p703, %p704
      %p707 = scmp.ne.s32.totalorder %s692, %s706
      %p708 = scmp.eq.s32.totalorder %s136, 0
      %p709 = por %p707, %p708
      %s711 = sadd.s32 %s710, 1
      %p714 = scmp.eq.s32.totalorder %s130, 1
      %p715 = scmp.ne.s32.totalorder %s710, %s712
      %p716 = scmp.eq.s32.totalorder %s130, 0
      %p717 = por %p715, %p716
      %p718 = scmp.ne.s32.totalorder %s710, %s712
      %p719 = scmp.eq.s32.totalorder %s135, 1
      %p720 = por %p718, %p719
      %p721 = scmp.ne.s32.totalorder %s712, %s713
      %p722 = scmp.eq.s32.totalorder %s135, 0
      %p723 = por %p721, %p722
      %p724 = scmp.ne.s32.totalorder %s712, %s713
      %p725 = scmp.eq.s32.totalorder %s136, 1
      %p726 = por %p724, %p725
      %p728 = scmp.ne.s32.totalorder %s713, %s727
      %p729 = scmp.eq.s32.totalorder %s136, 0
      %p730 = por %p728, %p729
      %s732 = sadd.s32 %s731, 1
      %p735 = scmp.eq.s32.totalorder %s130, 1
      %p736 = scmp.ne.s32.totalorder %s731, %s733
      %p737 = scmp.eq.s32.totalorder %s130, 0
      %p738 = por %p736, %p737
      %p739 = scmp.ne.s32.totalorder %s731, %s733
      %p740 = scmp.eq.s32.totalorder %s135, 1
      %p741 = por %p739, %p740
      %p742 = scmp.ne.s32.totalorder %s733, %s734
      %p743 = scmp.eq.s32.totalorder %s135, 0
      %p744 = por %p742, %p743
      %p745 = scmp.ne.s32.totalorder %s733, %s734
      %p746 = scmp.eq.s32.totalorder %s136, 1
      %p747 = por %p745, %p746
      %p749 = scmp.ne.s32.totalorder %s734, %s748
      %p750 = scmp.eq.s32.totalorder %s136, 0
      %p751 = por %p749, %p750
      %s753 = sadd.s32 %s752, 1
      %p756 = scmp.eq.s32.totalorder %s130, 1
      %p757 = scmp.ne.s32.totalorder %s752, %s754
      %p758 = scmp.eq.s32.totalorder %s130, 0
      %p759 = por %p757, %p758
      %p760 = scmp.ne.s32.totalorder %s752, %s754
      %p761 = scmp.eq.s32.totalorder %s135, 1
      %p762 = por %p760, %p761
      %p763 = scmp.ne.s32.totalorder %s754, %s755
      %p764 = scmp.eq.s32.totalorder %s135, 0
      %p765 = por %p763, %p764
      %p766 = scmp.ne.s32.totalorder %s754, %s755
      %p767 = scmp.eq.s32.totalorder %s136, 1
      %p768 = por %p766, %p767
      %p770 = scmp.ne.s32.totalorder %s755, %s769
      %p771 = scmp.eq.s32.totalorder %s136, 0
      %p772 = por %p770, %p771
      %s774 = sadd.s32 %s773, 1
      %p777 = scmp.eq.s32.totalorder %s130, 1
      %p778 = scmp.ne.s32.totalorder %s773, %s775
      %p779 = scmp.eq.s32.totalorder %s130, 0
      %p780 = por %p778, %p779
      %p781 = scmp.ne.s32.totalorder %s773, %s775
      %p782 = scmp.eq.s32.totalorder %s135, 1
      %p783 = por %p781, %p782
      %p784 = scmp.ne.s32.totalorder %s775, %s776
      %p785 = scmp.eq.s32.totalorder %s135, 0
      %p786 = por %p784, %p785
      %p787 = scmp.ne.s32.totalorder %s775, %s776
      %p788 = scmp.eq.s32.totalorder %s136, 1
      %p789 = por %p787, %p788
      %p791 = scmp.ne.s32.totalorder %s776, %s790
      %p792 = scmp.eq.s32.totalorder %s136, 0
      %p793 = por %p791, %p792
      %s795 = sadd.s32 %s794, 1
      %p798 = scmp.eq.s32.totalorder %s130, 1
      %p799 = scmp.ne.s32.totalorder %s794, %s796
      %p800 = scmp.eq.s32.totalorder %s130, 0
      %p801 = por %p799, %p800
      %p802 = scmp.ne.s32.totalorder %s794, %s796
      %p803 = scmp.eq.s32.totalorder %s135, 1
      %p804 = por %p802, %p803
      %p805 = scmp.ne.s32.totalorder %s796, %s797
      %p806 = scmp.eq.s32.totalorder %s135, 0
      %p807 = por %p805, %p806
      %p808 = scmp.ne.s32.totalorder %s796, %s797
      %p809 = scmp.eq.s32.totalorder %s136, 1
      %p810 = por %p808, %p809
      %p812 = scmp.ne.s32.totalorder %s797, %s811
      %p813 = scmp.eq.s32.totalorder %s136, 0
      %p814 = por %p812, %p813
      %s816 = sadd.s32 %s815, 1
      %p819 = scmp.eq.s32.totalorder %s130, 1
      %p820 = scmp.ne.s32.totalorder %s815, %s817
      %p821 = scmp.eq.s32.totalorder %s130, 0
      %p822 = por %p820, %p821
      %p823 = scmp.ne.s32.totalorder %s815, %s817
      %p824 = scmp.eq.s32.totalorder %s135, 1
      %p825 = por %p823, %p824
      %p826 = scmp.ne.s32.totalorder %s817, %s818
      %p827 = scmp.eq.s32.totalorder %s135, 0
      %p828 = por %p826, %p827
      %p829 = scmp.ne.s32.totalorder %s817, %s818
      %p830 = scmp.eq.s32.totalorder %s136, 1
      %p831 = por %p829, %p830
      %p833 = scmp.ne.s32.totalorder %s818, %s832
      %p834 = scmp.eq.s32.totalorder %s136, 0
      %p835 = por %p833, %p834
      %s837 = sadd.s32 %s836, 1
      %p840 = scmp.eq.s32.totalorder %s130, 1
      %p841 = scmp.ne.s32.totalorder %s836, %s838
      %p842 = scmp.eq.s32.totalorder %s130, 0
      %p843 = por %p841, %p842
      %p844 = scmp.ne.s32.totalorder %s836, %s838
      %p845 = scmp.eq.s32.totalorder %s135, 1
      %p846 = por %p844, %p845
      %p847 = scmp.ne.s32.totalorder %s838, %s839
      %p848 = scmp.eq.s32.totalorder %s135, 0
      %p849 = por %p847, %p848
      %p850 = scmp.ne.s32.totalorder %s838, %s839
      %p851 = scmp.eq.s32.totalorder %s136, 1
      %p852 = por %p850, %p851
      %p854 = scmp.ne.s32.totalorder %s839, %s853
      %p855 = scmp.eq.s32.totalorder %s136, 0
      %p856 = por %p854, %p855
      %s858 = sadd.s32 %s857, 1
      %p861 = scmp.eq.s32.totalorder %s130, 1
      %p862 = scmp.ne.s32.totalorder %s857, %s859
      %p863 = scmp.eq.s32.totalorder %s130, 0
      %p864 = por %p862, %p863
      %p865 = scmp.ne.s32.totalorder %s857, %s859
      %p866 = scmp.eq.s32.totalorder %s135, 1
      %p867 = por %p865, %p866
      %p868 = scmp.ne.s32.totalorder %s859, %s860
      %p869 = scmp.eq.s32.totalorder %s135, 0
      %p870 = por %p868, %p869
      %p871 = scmp.ne.s32.totalorder %s859, %s860
      %p872 = scmp.eq.s32.totalorder %s136, 1
      %p873 = por %p871, %p872
      %p875 = scmp.ne.s32.totalorder %s860, %s874
      %p876 = scmp.eq.s32.totalorder %s136, 0
      %p877 = por %p875, %p876
      %s879 = sadd.s32 %s878, 1
      %p882 = scmp.eq.s32.totalorder %s130, 1
      %p883 = scmp.ne.s32.totalorder %s878, %s880
      %p884 = scmp.eq.s32.totalorder %s130, 0
      %p885 = por %p883, %p884
      %p886 = scmp.ne.s32.totalorder %s878, %s880
      %p887 = scmp.eq.s32.totalorder %s135, 1
      %p888 = por %p886, %p887
      %p889 = scmp.ne.s32.totalorder %s880, %s881
      %p890 = scmp.eq.s32.totalorder %s135, 0
      %p891 = por %p889, %p890
      %p892 = scmp.ne.s32.totalorder %s880, %s881
      %p893 = scmp.eq.s32.totalorder %s136, 1
      %p894 = por %p892, %p893
      %p896 = scmp.ne.s32.totalorder %s881, %s895
      %p897 = scmp.eq.s32.totalorder %s136, 0
      %p898 = por %p896, %p897
      %s900 = sadd.s32 %s899, 1
      %p903 = scmp.eq.s32.totalorder %s130, 1
      %p904 = scmp.ne.s32.totalorder %s899, %s901
      %p905 = scmp.eq.s32.totalorder %s130, 0
      %p906 = por %p904, %p905
      %p907 = scmp.ne.s32.totalorder %s899, %s901
      %p908 = scmp.eq.s32.totalorder %s135, 1
      %p909 = por %p907, %p908
      %p910 = scmp.ne.s32.totalorder %s901, %s902
      %p911 = scmp.eq.s32.totalorder %s135, 0
      %p912 = por %p910, %p911
      %p913 = scmp.ne.s32.totalorder %s901, %s902
      %p914 = scmp.eq.s32.totalorder %s136, 1
      %p915 = por %p913, %p914
      %p917 = scmp.ne.s32.totalorder %s902, %s916
      %p918 = scmp.eq.s32.totalorder %s136, 0
      %p919 = por %p917, %p918
      %s921 = sadd.s32 %s920, 1
      %p924 = scmp.eq.s32.totalorder %s130, 1
      %p925 = scmp.ne.s32.totalorder %s920, %s922
      %p926 = scmp.eq.s32.totalorder %s130, 0
      %p927 = por %p925, %p926
      %p928 = scmp.ne.s32.totalorder %s920, %s922
      %p929 = scmp.eq.s32.totalorder %s135, 1
      %p930 = por %p928, %p929
      %p931 = scmp.ne.s32.totalorder %s922, %s923
      %p932 = scmp.eq.s32.totalorder %s135, 0
      %p933 = por %p931, %p932
      %p934 = scmp.ne.s32.totalorder %s922, %s923
      %p935 = scmp.eq.s32.totalorder %s136, 1
      %p936 = por %p934, %p935
      %p938 = scmp.ne.s32.totalorder %s923, %s937
      %p939 = scmp.eq.s32.totalorder %s136, 0
      %p940 = por %p938, %p939
      %s942 = sadd.s32 %s941, 1
      %p945 = scmp.eq.s32.totalorder %s130, 1
      %p946 = scmp.ne.s32.totalorder %s941, %s943
      %p947 = scmp.eq.s32.totalorder %s130, 0
      %p948 = por %p946, %p947
      %p949 = scmp.ne.s32.totalorder %s941, %s943
      %p950 = scmp.eq.s32.totalorder %s135, 1
      %p951 = por %p949, %p950
      %p952 = scmp.ne.s32.totalorder %s943, %s944
      %p953 = scmp.eq.s32.totalorder %s135, 0
      %p954 = por %p952, %p953
      %p955 = scmp.ne.s32.totalorder %s943, %s944
      %p956 = scmp.eq.s32.totalorder %s136, 1
      %p957 = por %p955, %p956
      %p959 = scmp.ne.s32.totalorder %s944, %s958
      %p960 = scmp.eq.s32.totalorder %s136, 0
      %p961 = por %p959, %p960
      %s963 = sadd.s32 %s962, 1
      %p966 = scmp.eq.s32.totalorder %s130, 1
      %p967 = scmp.ne.s32.totalorder %s962, %s964
      %p968 = scmp.eq.s32.totalorder %s130, 0
      %p969 = por %p967, %p968
      %p970 = scmp.ne.s32.totalorder %s962, %s964
      %p971 = scmp.eq.s32.totalorder %s135, 1
      %p972 = por %p970, %p971
      %p973 = scmp.ne.s32.totalorder %s964, %s965
      %p974 = scmp.eq.s32.totalorder %s135, 0
      %p975 = por %p973, %p974
      %p976 = scmp.ne.s32.totalorder %s964, %s965
      %p977 = scmp.eq.s32.totalorder %s136, 1
      %p978 = por %p976, %p977
      %p980 = scmp.ne.s32.totalorder %s965, %s979
      %p981 = scmp.eq.s32.totalorder %s136, 0
      %p982 = por %p980, %p981
      %s984 = sadd.s32 %s983, 1
      %p987 = scmp.eq.s32.totalorder %s130, 1
      %p988 = scmp.ne.s32.totalorder %s983, %s985
      %p989 = scmp.eq.s32.totalorder %s130, 0
      %p990 = por %p988, %p989
      %p991 = scmp.ne.s32.totalorder %s983, %s985
      %p992 = scmp.eq.s32.totalorder %s135, 1
      %p993 = por %p991, %p992
      %p994 = scmp.ne.s32.totalorder %s985, %s986
      %p995 = scmp.eq.s32.totalorder %s135, 0
      %p996 = por %p994, %p995
      %p997 = scmp.ne.s32.totalorder %s985, %s986
      %p998 = scmp.eq.s32.totalorder %s136, 1
      %p999 = por %p997, %p998
      %p1001 = scmp.ne.s32.totalorder %s986, %s1000
      %p1002 = scmp.eq.s32.totalorder %s136, 0
      %p1003 = por %p1001, %p1002
      %s1005 = sadd.s32 %s1004, 1
      %p1008 = scmp.eq.s32.totalorder %s130, 1
      %p1009 = scmp.ne.s32.totalorder %s1004, %s1006
      %p1010 = scmp.eq.s32.totalorder %s130, 0
      %p1011 = por %p1009, %p1010
      %p1012 = scmp.ne.s32.totalorder %s1004, %s1006
      %p1013 = scmp.eq.s32.totalorder %s135, 1
      %p1014 = por %p1012, %p1013
      %p1015 = scmp.ne.s32.totalorder %s1006, %s1007
      %p1016 = scmp.eq.s32.totalorder %s135, 0
      %p1017 = por %p1015, %p1016
      %p1018 = scmp.ne.s32.totalorder %s1006, %s1007
      %p1019 = scmp.eq.s32.totalorder %s136, 1
      %p1020 = por %p1018, %p1019
      %p1022 = scmp.ne.s32.totalorder %s1007, %s1021
      %p1023 = scmp.eq.s32.totalorder %s136, 0
      %p1024 = por %p1022, %p1023
      %s1026 = sadd.s32 %s1025, 1
      %p1029 = scmp.eq.s32.totalorder %s130, 1
      %p1030 = scmp.ne.s32.totalorder %s1025, %s1027
      %p1031 = scmp.eq.s32.totalorder %s130, 0
      %p1032 = por %p1030, %p1031
      %p1033 = scmp.ne.s32.totalorder %s1025, %s1027
      %p1034 = scmp.eq.s32.totalorder %s135, 1
      %p1035 = por %p1033, %p1034
      %p1036 = scmp.ne.s32.totalorder %s1027, %s1028
      %p1037 = scmp.eq.s32.totalorder %s135, 0
      %p1038 = por %p1036, %p1037
      %p1039 = scmp.ne.s32.totalorder %s1027, %s1028
      %p1040 = scmp.eq.s32.totalorder %s136, 1
      %p1041 = por %p1039, %p1040
      %p1043 = scmp.ne.s32.totalorder %s1028, %s1042
      %p1044 = scmp.eq.s32.totalorder %s136, 0
      %p1045 = por %p1043, %p1044
      %s1047 = sadd.s32 %s1046, 1
      %p1050 = scmp.eq.s32.totalorder %s130, 1
      %p1051 = scmp.ne.s32.totalorder %s1046, %s1048
      %p1052 = scmp.eq.s32.totalorder %s130, 0
      %p1053 = por %p1051, %p1052
      %p1054 = scmp.ne.s32.totalorder %s1046, %s1048
      %p1055 = scmp.eq.s32.totalorder %s135, 1
      %p1056 = por %p1054, %p1055
      %p1057 = scmp.ne.s32.totalorder %s1048, %s1049
      %p1058 = scmp.eq.s32.totalorder %s135, 0
      %p1059 = por %p1057, %p1058
      %p1060 = scmp.ne.s32.totalorder %s1048, %s1049
      %p1061 = scmp.eq.s32.totalorder %s136, 1
      %p1062 = por %p1060, %p1061
      %p1064 = scmp.ne.s32.totalorder %s1049, %s1063
      %p1065 = scmp.eq.s32.totalorder %s136, 0
      %p1066 = por %p1064, %p1065
      %s1068 = sadd.s32 %s1067, 1
      %p1071 = scmp.eq.s32.totalorder %s130, 1
      %p1072 = scmp.ne.s32.totalorder %s1067, %s1069
      %p1073 = scmp.eq.s32.totalorder %s130, 0
      %p1074 = por %p1072, %p1073
      %p1075 = scmp.ne.s32.totalorder %s1067, %s1069
      %p1076 = scmp.eq.s32.totalorder %s135, 1
      %p1077 = por %p1075, %p1076
      %p1078 = scmp.ne.s32.totalorder %s1069, %s1070
      %p1079 = scmp.eq.s32.totalorder %s135, 0
      %p1080 = por %p1078, %p1079
      %p1081 = scmp.ne.s32.totalorder %s1069, %s1070
      %p1082 = scmp.eq.s32.totalorder %s136, 1
      %p1083 = por %p1081, %p1082
      %p1085 = scmp.ne.s32.totalorder %s1070, %s1084
      %p1086 = scmp.eq.s32.totalorder %s136, 0
      %p1087 = por %p1085, %p1086
      %s1089 = sadd.s32 %s1088, 1
      %p1092 = scmp.eq.s32.totalorder %s130, 1
      %p1093 = scmp.ne.s32.totalorder %s1088, %s1090
      %p1094 = scmp.eq.s32.totalorder %s130, 0
      %p1095 = por %p1093, %p1094
      %p1096 = scmp.ne.s32.totalorder %s1088, %s1090
      %p1097 = scmp.eq.s32.totalorder %s135, 1
      %p1098 = por %p1096, %p1097
      %p1099 = scmp.ne.s32.totalorder %s1090, %s1091
      %p1100 = scmp.eq.s32.totalorder %s135, 0
      %p1101 = por %p1099, %p1100
      %p1102 = scmp.ne.s32.totalorder %s1090, %s1091
      %p1103 = scmp.eq.s32.totalorder %s136, 1
      %p1104 = por %p1102, %p1103
      %p1106 = scmp.ne.s32.totalorder %s1091, %s1105
      %p1107 = scmp.eq.s32.totalorder %s136, 0
      %p1108 = por %p1106, %p1107
      %s1110 = sadd.s32 %s1109, 1
      %p1113 = scmp.eq.s32.totalorder %s130, 1
      %p1114 = scmp.ne.s32.totalorder %s1109, %s1111
      %p1115 = scmp.eq.s32.totalorder %s130, 0
      %p1116 = por %p1114, %p1115
      %p1117 = scmp.ne.s32.totalorder %s1109, %s1111
      %p1118 = scmp.eq.s32.totalorder %s135, 1
      %p1119 = por %p1117, %p1118
      %p1120 = scmp.ne.s32.totalorder %s1111, %s1112
      %p1121 = scmp.eq.s32.totalorder %s135, 0
      %p1122 = por %p1120, %p1121
      %p1123 = scmp.ne.s32.totalorder %s1111, %s1112
      %p1124 = scmp.eq.s32.totalorder %s136, 1
      %p1125 = por %p1123, %p1124
      %p1127 = scmp.ne.s32.totalorder %s1112, %s1126
      %p1128 = scmp.eq.s32.totalorder %s136, 0
      %p1129 = por %p1127, %p1128
      %s1131 = sadd.s32 %s1130, 1
      %p1134 = scmp.eq.s32.totalorder %s130, 1
      %p1135 = scmp.ne.s32.totalorder %s1130, %s1132
      %p1136 = scmp.eq.s32.totalorder %s130, 0
      %p1137 = por %p1135, %p1136
      %p1138 = scmp.ne.s32.totalorder %s1130, %s1132
      %p1139 = scmp.eq.s32.totalorder %s135, 1
      %p1140 = por %p1138, %p1139
      %p1141 = scmp.ne.s32.totalorder %s1132, %s1133
      %p1142 = scmp.eq.s32.totalorder %s135, 0
      %p1143 = por %p1141, %p1142
      %p1144 = scmp.ne.s32.totalorder %s1132, %s1133
      %p1145 = scmp.eq.s32.totalorder %s136, 1
      %p1146 = por %p1144, %p1145
      %p1148 = scmp.ne.s32.totalorder %s1133, %s1147
      %p1149 = scmp.eq.s32.totalorder %s136, 0
      %p1150 = por %p1148, %p1149
      %s1152 = sadd.s32 %s1151, 1
      %p1155 = scmp.eq.s32.totalorder %s130, 1
      %p1156 = scmp.ne.s32.totalorder %s1151, %s1153
      %p1157 = scmp.eq.s32.totalorder %s130, 0
      %p1158 = por %p1156, %p1157
      %p1159 = scmp.ne.s32.totalorder %s1151, %s1153
      %p1160 = scmp.eq.s32.totalorder %s135, 1
      %p1161 = por %p1159, %p1160
      %p1162 = scmp.ne.s32.totalorder %s1153, %s1154
      %p1163 = scmp.eq.s32.totalorder %s135, 0
      %p1164 = por %p1162, %p1163
      %p1165 = scmp.ne.s32.totalorder %s1153, %s1154
      %p1166 = scmp.eq.s32.totalorder %s136, 1
      %p1167 = por %p1165, %p1166
      %p1169 = scmp.ne.s32.totalorder %s1154, %s1168
      %p1170 = scmp.eq.s32.totalorder %s136, 0
      %p1171 = por %p1169, %p1170
      %s1173 = sadd.s32 %s1172, 1
      %p1176 = scmp.eq.s32.totalorder %s130, 1
      %p1177 = scmp.ne.s32.totalorder %s1172, %s1174
      %p1178 = scmp.eq.s32.totalorder %s130, 0
      %p1179 = por %p1177, %p1178
      %p1180 = scmp.ne.s32.totalorder %s1172, %s1174
      %p1181 = scmp.eq.s32.totalorder %s135, 1
      %p1182 = por %p1180, %p1181
      %p1183 = scmp.ne.s32.totalorder %s1174, %s1175
      %p1184 = scmp.eq.s32.totalorder %s135, 0
      %p1185 = por %p1183, %p1184
      %p1186 = scmp.ne.s32.totalorder %s1174, %s1175
      %p1187 = scmp.eq.s32.totalorder %s136, 1
      %p1188 = por %p1186, %p1187
      %p1190 = scmp.ne.s32.totalorder %s1175, %s1189
      %p1191 = scmp.eq.s32.totalorder %s136, 0
      %p1192 = por %p1190, %p1191
      %s1194 = sadd.s32 %s1193, 1
      %p1197 = scmp.eq.s32.totalorder %s130, 1
      %p1198 = scmp.ne.s32.totalorder %s1193, %s1195
      %p1199 = scmp.eq.s32.totalorder %s130, 0
      %p1200 = por %p1198, %p1199
      %p1201 = scmp.ne.s32.totalorder %s1193, %s1195
      %p1202 = scmp.eq.s32.totalorder %s135, 1
      %p1203 = por %p1201, %p1202
      %p1204 = scmp.ne.s32.totalorder %s1195, %s1196
      %p1205 = scmp.eq.s32.totalorder %s135, 0
      %p1206 = por %p1204, %p1205
      %p1207 = scmp.ne.s32.totalorder %s1195, %s1196
      %p1208 = scmp.eq.s32.totalorder %s136, 1
      %p1209 = por %p1207, %p1208
      %p1211 = scmp.ne.s32.totalorder %s1196, %s1210
      %p1212 = scmp.eq.s32.totalorder %s136, 0
      %p1213 = por %p1211, %p1212
      %s1215 = sadd.s32 %s1214, 1
      %p1218 = scmp.eq.s32.totalorder %s130, 1
      %p1219 = scmp.ne.s32.totalorder %s1214, %s1216
      %p1220 = scmp.eq.s32.totalorder %s130, 0
      %p1221 = por %p1219, %p1220
      %p1222 = scmp.ne.s32.totalorder %s1214, %s1216
      %p1223 = scmp.eq.s32.totalorder %s135, 1
      %p1224 = por %p1222, %p1223
      %p1225 = scmp.ne.s32.totalorder %s1216, %s1217
      %p1226 = scmp.eq.s32.totalorder %s135, 0
      %p1227 = por %p1225, %p1226
      %p1228 = scmp.ne.s32.totalorder %s1216, %s1217
      %p1229 = scmp.eq.s32.totalorder %s136, 1
      %p1230 = por %p1228, %p1229
      %p1232 = scmp.ne.s32.totalorder %s1217, %s1231
      %p1233 = scmp.eq.s32.totalorder %s136, 0
      %p1234 = por %p1232, %p1233
      %s1236 = sadd.s32 %s1235, 1
      %p1239 = scmp.eq.s32.totalorder %s130, 1
      %p1240 = scmp.ne.s32.totalorder %s1235, %s1237
      %p1241 = scmp.eq.s32.totalorder %s130, 0
      %p1242 = por %p1240, %p1241
      %p1243 = scmp.ne.s32.totalorder %s1235, %s1237
      %p1244 = scmp.eq.s32.totalorder %s135, 1
      %p1245 = por %p1243, %p1244
      %p1246 = scmp.ne.s32.totalorder %s1237, %s1238
      %p1247 = scmp.eq.s32.totalorder %s135, 0
      %p1248 = por %p1246, %p1247
      %p1249 = scmp.ne.s32.totalorder %s1237, %s1238
      %p1250 = scmp.eq.s32.totalorder %s136, 1
      %p1251 = por %p1249, %p1250
      %p1253 = scmp.ne.s32.totalorder %s1238, %s1252
      %p1254 = scmp.eq.s32.totalorder %s136, 0
      %p1255 = por %p1253, %p1254
      %s1256 = ssub.s32 %s130, %s137
      %p1257 = scmp.eq.s32.totalorder %s1256, 0
      %s1259 = sadd.s32 %s1258, 1
      %s1260 = scalar_select %p1257, %s1258, %s1259
      %p1263 = pneg %p1257
      %p1264 = scmp.eq.s32.totalorder %s130, 1
      %p1265 = por %p1263, %p1264
      %p1266 = scmp.ne.s32.totalorder %s1258, %s1261
      %p1267 = scmp.eq.s32.totalorder %s130, 0
      %p1268 = por %p1266, %p1267
      %p1269 = scmp.ne.s32.totalorder %s1258, %s1261
      %p1270 = scmp.eq.s32.totalorder %s135, 1
      %p1271 = por %p1269, %p1270
      %p1272 = scmp.ne.s32.totalorder %s1261, %s1262
      %p1273 = scmp.eq.s32.totalorder %s135, 0
      %p1274 = por %p1272, %p1273
      %p1275 = scmp.ne.s32.totalorder %s1261, %s1262
      %p1276 = scmp.eq.s32.totalorder %s136, 1
      %p1277 = por %p1275, %p1276
      %p1279 = scmp.ne.s32.totalorder %s1262, %s1278
      %p1280 = scmp.eq.s32.totalorder %s136, 0
      %p1281 = por %p1279, %p1280
      %p1282 = scmp.le.s32.totalorder 1, %s130
      %p1283 = scmp.lt.s32.totalorder %s130, 3
      %p1284 = pnand %p1282, %p1283
      %p1285 = pneg %p1284
      // Predicated region
      $region9: #{tpu_custom_call.1} parent=5 // pred_check
        _
      $region10: #{tpu_custom_call.1} parent=5 // pred_check_branch
        %1287 = sbr.rel (%p1284) target = $region12
      $region11: #{tpu_custom_call.1} parent=5 // pred_region
        %s1288 = ssub.s32 %s130, 1
        // Predicated region
        $region13: #{tpu_custom_call.1} parent=11 // pred_check
          %p1289 = pneg %p177
        $region14: #{tpu_custom_call.1} parent=11 // pred_check_branch
          %1291 = sbr.rel (%p1289) target = $region16
        $region15: #{tpu_custom_call.1} parent=11 // pred_region
          _
        $region16: #{tpu_custom_call.1} parent=11 // pred_fallthru
          _
        // Predicated region
        $region17: #{tpu_custom_call.1} parent=11 // pred_check
          %p1292 = pneg %p198
        $region18: #{tpu_custom_call.1} parent=11 // pred_check_branch
          %1294 = sbr.rel (%p1292) target = $region20
        $region19: #{tpu_custom_call.1} parent=11 // pred_region
          %1296 = vsyncadd [#allocation3], 0
          %s1298 = sshll.u32 %s5, 4
          %s1299 = int_to_ptr.hbm [resolvable:$true] %s1298
          %s1300 = sshll.u32 [#allocation2], 4
          %s1301 = int_to_ptr.vmem [resolvable:$true] %s1300
          %1303 = dma.hbm_to_vmem [thread:$0]  %s1299, 16, %s1301, [#allocation3]
        $region20: #{tpu_custom_call.1} parent=11 // pred_fallthru
          _
        // Predicated region
        $region21: #{tpu_custom_call.1} parent=11 // pred_check
          %p1304 = pneg %p219
        $region22: #{tpu_custom_call.1} parent=11 // pred_check_branch
          %1306 = sbr.rel (%p1304) target = $region24
        $region23: #{tpu_custom_call.1} parent=11 // pred_region
          %1308 = vsyncadd [#allocation6], 0
          %s1309 = sshll.u32 %s7, 4
          %s1310 = int_to_ptr.hbm [resolvable:$true] %s1309
          %s1311 = sshll.u32 [#allocation5], 4
          %s1312 = int_to_ptr.vmem [resolvable:$true] %s1311
          %1317 = dma.hbm_to_vmem [thread:$0]  %s1310, 48, %s1312, [#allocation6], 16, 16, 1
        $region24: #{tpu_custom_call.1} parent=11 // pred_fallthru
          _
        // Predicated region
        $region25: #{tpu_custom_call.1} parent=11 // pred_check
          %p1318 = pneg %p240
        $region26: #{tpu_custom_call.1} parent=11 // pred_check_branch
          %1320 = sbr.rel (%p1318) target = $region28
        $region27: #{tpu_custom_call.1} parent=11 // pred_region
          %1322 = vsyncadd [#allocation6], 0
          %s1324 = sshll.u32 %s9, 4
          %s1325 = int_to_ptr.hbm [resolvable:$true] %s1324
          %s1326 = sshll.u32 [#allocation7], 4
          %s1327 = int_to_ptr.vmem [resolvable:$true] %s1326
          %1329 = dma.hbm_to_vmem [thread:$0]  %s1325, 16, %s1327, [#allocation6]
        $region28: #{tpu_custom_call.1} parent=11 // pred_fallthru
          _
        // Predicated region
        $region29: #{tpu_custom_call.1} parent=11 // pred_check
          %p1330 = pneg %p261
        $region30: #{tpu_custom_call.1} parent=11 // pred_check_branch
          %1332 = sbr.rel (%p1330) target = $region32
        $region31: #{tpu_custom_call.1} parent=11 // pred_region
          _
        $region32: #{tpu_custom_call.1} parent=11 // pred_fallthru
          _
        // Predicated region
        $region33: #{tpu_custom_call.1} parent=11 // pred_check
          %p1333 = pneg %p282
        $region34: #{tpu_custom_call.1} parent=11 // pred_check_branch
          %1335 = sbr.rel (%p1333) target = $region36
        $region35: #{tpu_custom_call.1} parent=11 // pred_region
          %1337 = vsyncadd [#allocation9], 0
          %s1339 = sshll.u32 %s13, 4
          %s1340 = int_to_ptr.hbm [resolvable:$true] %s1339
          %s1341 = sshll.u32 [#allocation8], 4
          %s1342 = int_to_ptr.vmem [resolvable:$true] %s1341
          %1344 = dma.hbm_to_vmem [thread:$0]  %s1340, 16, %s1342, [#allocation9]
        $region36: #{tpu_custom_call.1} parent=11 // pred_fallthru
          _
        // Predicated region
        $region37: #{tpu_custom_call.1} parent=11 // pred_check
          %p1345 = pneg %p303
        $region38: #{tpu_custom_call.1} parent=11 // pred_check_branch
          %1347 = sbr.rel (%p1345) target = $region40
        $region39: #{tpu_custom_call.1} parent=11 // pred_region
          _
        $region40: #{tpu_custom_call.1} parent=11 // pred_fallthru
          _
        // Predicated region
        $region41: #{tpu_custom_call.1} parent=11 // pred_check
          %p1348 = pneg %p324
        $region42: #{tpu_custom_call.1} parent=11 // pred_check_branch
          %1350 = sbr.rel (%p1348) target = $region44
        $region43: #{tpu_custom_call.1} parent=11 // pred_region
          %1352 = vsyncadd [#allocation9], 0
          %s1354 = sshll.u32 %s17, 4
          %s1355 = int_to_ptr.hbm [resolvable:$true] %s1354
          %s1356 = sshll.u32 [#allocation10], 4
          %s1357 = int_to_ptr.vmem [resolvable:$true] %s1356
          %1359 = dma.hbm_to_vmem [thread:$0]  %s1355, 16, %s1357, [#allocation9]
        $region44: #{tpu_custom_call.1} parent=11 // pred_fallthru
          _
        // Predicated region
        $region45: #{tpu_custom_call.1} parent=11 // pred_check
          %p1360 = pneg %p345
        $region46: #{tpu_custom_call.1} parent=11 // pred_check_branch
          %1362 = sbr.rel (%p1360) target = $region48
        $region47: #{tpu_custom_call.1} parent=11 // pred_region
          _
        $region48: #{tpu_custom_call.1} parent=11 // pred_fallthru
          _
        // Predicated region
        $region49: #{tpu_custom_call.1} parent=11 // pred_check
          %p1363 = pneg %p366
        $region50: #{tpu_custom_call.1} parent=11 // pred_check_branch
          %1365 = sbr.rel (%p1363) target = $region52
        $region51: #{tpu_custom_call.1} parent=11 // pred_region
          %1367 = vsyncadd [#allocation12], 0
          %s1369 = sshll.u32 %s21, 4
          %s1370 = int_to_ptr.hbm [resolvable:$true] %s1369
          %s1371 = sshll.u32 [#allocation11], 4
          %s1372 = int_to_ptr.vmem [resolvable:$true] %s1371
          %1374 = dma.hbm_to_vmem [thread:$0]  %s1370, 16, %s1372, [#allocation12]
        $region52: #{tpu_custom_call.1} parent=11 // pred_fallthru
          _
        // Predicated region
        $region53: #{tpu_custom_call.1} parent=11 // pred_check
          %p1375 = pneg %p387
        $region54: #{tpu_custom_call.1} parent=11 // pred_check_branch
          %1377 = sbr.rel (%p1375) target = $region56
        $region55: #{tpu_custom_call.1} parent=11 // pred_region
          _
        $region56: #{tpu_custom_call.1} parent=11 // pred_fallthru
          _
        // Predicated region
        $region57: #{tpu_custom_call.1} parent=11 // pred_check
          %p1378 = pneg %p408
        $region58: #{tpu_custom_call.1} parent=11 // pred_check_branch
          %1380 = sbr.rel (%p1378) target = $region60
        $region59: #{tpu_custom_call.1} parent=11 // pred_region
          %1382 = vsyncadd [#allocation12], 0
          %s1384 = sshll.u32 %s25, 4
          %s1385 = int_to_ptr.hbm [resolvable:$true] %s1384
          %s1386 = sshll.u32 [#allocation13], 4
          %s1387 = int_to_ptr.vmem [resolvable:$true] %s1386
          %1389 = dma.hbm_to_vmem [thread:$0]  %s1385, 16, %s1387, [#allocation12]
        $region60: #{tpu_custom_call.1} parent=11 // pred_fallthru
          _
        // Predicated region
        $region61: #{tpu_custom_call.1} parent=11 // pred_check
          %p1390 = pneg %p429
        $region62: #{tpu_custom_call.1} parent=11 // pred_check_branch
          %1392 = sbr.rel (%p1390) target = $region64
        $region63: #{tpu_custom_call.1} parent=11 // pred_region
          %1394 = vsyncadd [#allocation15], 0
          %s1395 = sshll.u32 %s27, 4
          %s1396 = int_to_ptr.hbm [resolvable:$true] %s1395
          %s1397 = sshll.u32 [#allocation14], 4
          %s1398 = int_to_ptr.vmem [resolvable:$true] %s1397
          %1403 = dma.hbm_to_vmem [thread:$0]  %s1396, 256, %s1398, [#allocation15], 128, 128, 8
        $region64: #{tpu_custom_call.1} parent=11 // pred_fallthru
          _
        // Predicated region
        $region65: #{tpu_custom_call.1} parent=11 // pred_check
          %p1404 = pneg %p450
        $region66: #{tpu_custom_call.1} parent=11 // pred_check_branch
          %1406 = sbr.rel (%p1404) target = $region68
        $region67: #{tpu_custom_call.1} parent=11 // pred_region
          %1408 = vsyncadd [#allocation15], 0
          %s1410 = sshll.u32 %s29, 4
          %s1411 = int_to_ptr.hbm [resolvable:$true] %s1410
          %s1412 = sshll.u32 [#allocation16], 4
          %s1413 = int_to_ptr.vmem [resolvable:$true] %s1412
          %1415 = dma.hbm_to_vmem [thread:$0]  %s1411, 16, %s1413, [#allocation15]
        $region68: #{tpu_custom_call.1} parent=11 // pred_fallthru
          _
        // Predicated region
        $region69: #{tpu_custom_call.1} parent=11 // pred_check
          %p1416 = pneg %p471
        $region70: #{tpu_custom_call.1} parent=11 // pred_check_branch
          %1418 = sbr.rel (%p1416) target = $region72
        $region71: #{tpu_custom_call.1} parent=11 // pred_region
          _
        $region72: #{tpu_custom_call.1} parent=11 // pred_fallthru
          _
        // Predicated region
        $region73: #{tpu_custom_call.1} parent=11 // pred_check
          %p1419 = pneg %p492
        $region74: #{tpu_custom_call.1} parent=11 // pred_check_branch
          %1421 = sbr.rel (%p1419) target = $region76
        $region75: #{tpu_custom_call.1} parent=11 // pred_region
          %1423 = vsyncadd [#allocation18], 0
          %s1425 = sshll.u32 %s33, 4
          %s1426 = int_to_ptr.hbm [resolvable:$true] %s1425
          %s1427 = sshll.u32 [#allocation17], 4
          %s1428 = int_to_ptr.vmem [resolvable:$true] %s1427
          %1430 = dma.hbm_to_vmem [thread:$0]  %s1426, 16, %s1428, [#allocation18]
        $region76: #{tpu_custom_call.1} parent=11 // pred_fallthru
          _
        // Predicated region
        $region77: #{tpu_custom_call.1} parent=11 // pred_check
          %p1431 = pneg %p513
        $region78: #{tpu_custom_call.1} parent=11 // pred_check_branch
          %1433 = sbr.rel (%p1431) target = $region80
        $region79: #{tpu_custom_call.1} parent=11 // pred_region
          %1435 = vsyncadd [#allocation18], 0
          %s1436 = sshll.u32 %s35, 4
          %s1437 = int_to_ptr.hbm [resolvable:$true] %s1436
          %s1438 = sshll.u32 [#allocation19], 4
          %s1439 = int_to_ptr.vmem [resolvable:$true] %s1438
          %1444 = dma.hbm_to_vmem [thread:$0]  %s1437, 512, %s1439, [#allocation18], 128, 128, 8
        $region80: #{tpu_custom_call.1} parent=11 // pred_fallthru
          _
        // Predicated region
        $region81: #{tpu_custom_call.1} parent=11 // pred_check
          %p1445 = pneg %p534
        $region82: #{tpu_custom_call.1} parent=11 // pred_check_branch
          %1447 = sbr.rel (%p1445) target = $region84
        $region83: #{tpu_custom_call.1} parent=11 // pred_region
          %1449 = vsyncadd [#allocation21], 0
          %s1451 = sshll.u32 %s37, 4
          %s1452 = int_to_ptr.hbm [resolvable:$true] %s1451
          %s1453 = sshll.u32 [#allocation20], 4
          %s1454 = int_to_ptr.vmem [resolvable:$true] %s1453
          %1456 = dma.hbm_to_vmem [thread:$0]  %s1452, 16, %s1454, [#allocation21]
        $region84: #{tpu_custom_call.1} parent=11 // pred_fallthru
          _
        // Predicated region
        $region85: #{tpu_custom_call.1} parent=11 // pred_check
          %p1457 = pneg %p555
        $region86: #{tpu_custom_call.1} parent=11 // pred_check_branch
          %1459 = sbr.rel (%p1457) target = $region88
        $region87: #{tpu_custom_call.1} parent=11 // pred_region
          _
        $region88: #{tpu_custom_call.1} parent=11 // pred_fallthru
          _
        // Predicated region
        $region89: #{tpu_custom_call.1} parent=11 // pred_check
          %p1460 = pneg %p576
        $region90: #{tpu_custom_call.1} parent=11 // pred_check_branch
          %1462 = sbr.rel (%p1460) target = $region92
        $region91: #{tpu_custom_call.1} parent=11 // pred_region
          %1464 = vsyncadd [#allocation21], 0
          %s1466 = sshll.u32 %s41, 4
          %s1467 = int_to_ptr.hbm [resolvable:$true] %s1466
          %s1468 = sshll.u32 [#allocation22], 4
          %s1469 = int_to_ptr.vmem [resolvable:$true] %s1468
          %1471 = dma.hbm_to_vmem [thread:$0]  %s1467, 16, %s1469, [#allocation21]
        $region92: #{tpu_custom_call.1} parent=11 // pred_fallthru
          _
        // Predicated region
        $region93: #{tpu_custom_call.1} parent=11 // pred_check
          %p1472 = pneg %p597
        $region94: #{tpu_custom_call.1} parent=11 // pred_check_branch
          %1474 = sbr.rel (%p1472) target = $region96
        $region95: #{tpu_custom_call.1} parent=11 // pred_region
          %1476 = vsyncadd [#allocation24], 0
          %s1477 = sshll.u32 %s43, 4
          %s1478 = int_to_ptr.hbm [resolvable:$true] %s1477
          %s1479 = sshll.u32 [#allocation23], 4
          %s1480 = int_to_ptr.vmem [resolvable:$true] %s1479
          %1485 = dma.hbm_to_vmem [thread:$0]  %s1478, 512, %s1480, [#allocation24], 128, 128, 8
        $region96: #{tpu_custom_call.1} parent=11 // pred_fallthru
          _
        // Predicated region
        $region97: #{tpu_custom_call.1} parent=11 // pred_check
          %p1486 = pneg %p618
        $region98: #{tpu_custom_call.1} parent=11 // pred_check_branch
          %1488 = sbr.rel (%p1486) target = $region100
        $region99: #{tpu_custom_call.1} parent=11 // pred_region
          %1490 = vsyncadd [#allocation24], 0
          %s1492 = sshll.u32 %s45, 4
          %s1493 = int_to_ptr.hbm [resolvable:$true] %s1492
          %s1494 = sshll.u32 [#allocation25], 4
          %s1495 = int_to_ptr.vmem [resolvable:$true] %s1494
          %1497 = dma.hbm_to_vmem [thread:$0]  %s1493, 16, %s1495, [#allocation24]
        $region100: #{tpu_custom_call.1} parent=11 // pred_fallthru
          _
        // Predicated region
        $region101: #{tpu_custom_call.1} parent=11 // pred_check
          %p1498 = pneg %p639
        $region102: #{tpu_custom_call.1} parent=11 // pred_check_branch
          %1500 = sbr.rel (%p1498) target = $region104
        $region103: #{tpu_custom_call.1} parent=11 // pred_region
          _
        $region104: #{tpu_custom_call.1} parent=11 // pred_fallthru
          _
        // Predicated region
        $region105: #{tpu_custom_call.1} parent=11 // pred_check
          %p1501 = pneg %p660
        $region106: #{tpu_custom_call.1} parent=11 // pred_check_branch
          %1503 = sbr.rel (%p1501) target = $region108
        $region107: #{tpu_custom_call.1} parent=11 // pred_region
          %1505 = vsyncadd [#allocation27], 0
          %s1507 = sshll.u32 %s49, 4
          %s1508 = int_to_ptr.hbm [resolvable:$true] %s1507
          %s1509 = sshll.u32 [#allocation26], 4
          %s1510 = int_to_ptr.vmem [resolvable:$true] %s1509
          %1512 = dma.hbm_to_vmem [thread:$0]  %s1508, 16, %s1510, [#allocation27]
        $region108: #{tpu_custom_call.1} parent=11 // pred_fallthru
          _
        // Predicated region
        $region109: #{tpu_custom_call.1} parent=11 // pred_check
          %p1513 = pneg %p681
        $region110: #{tpu_custom_call.1} parent=11 // pred_check_branch
          %1515 = sbr.rel (%p1513) target = $region112
        $region111: #{tpu_custom_call.1} parent=11 // pred_region
          %1517 = vsyncadd [#allocation27], 0
          %s1518 = sshll.u32 %s51, 4
          %s1519 = int_to_ptr.hbm [resolvable:$true] %s1518
          %s1520 = sshll.u32 [#allocation28], 4
          %s1521 = int_to_ptr.vmem [resolvable:$true] %s1520
          %1526 = dma.hbm_to_vmem [thread:$0]  %s1519, 512, %s1521, [#allocation27], 128, 128, 8
        $region112: #{tpu_custom_call.1} parent=11 // pred_fallthru
          _
        // Predicated region
        $region113: #{tpu_custom_call.1} parent=11 // pred_check
          %p1527 = pneg %p702
        $region114: #{tpu_custom_call.1} parent=11 // pred_check_branch
          %1529 = sbr.rel (%p1527) target = $region116
        $region115: #{tpu_custom_call.1} parent=11 // pred_region
          %1531 = vsyncadd [#allocation30], 0
          %s1533 = sshll.u32 %s53, 4
          %s1534 = int_to_ptr.hbm [resolvable:$true] %s1533
          %s1535 = sshll.u32 [#allocation29], 4
          %s1536 = int_to_ptr.vmem [resolvable:$true] %s1535
          %1538 = dma.hbm_to_vmem [thread:$0]  %s1534, 16, %s1536, [#allocation30]
        $region116: #{tpu_custom_call.1} parent=11 // pred_fallthru
          _
        // Predicated region
        $region117: #{tpu_custom_call.1} parent=11 // pred_check
          %p1539 = pneg %p723
        $region118: #{tpu_custom_call.1} parent=11 // pred_check_branch
          %1541 = sbr.rel (%p1539) target = $region120
        $region119: #{tpu_custom_call.1} parent=11 // pred_region
          _
        $region120: #{tpu_custom_call.1} parent=11 // pred_fallthru
          _
        // Predicated region
        $region121: #{tpu_custom_call.1} parent=11 // pred_check
          %p1542 = pneg %p744
        $region122: #{tpu_custom_call.1} parent=11 // pred_check_branch
          %1544 = sbr.rel (%p1542) target = $region124
        $region123: #{tpu_custom_call.1} parent=11 // pred_region
          %1546 = vsyncadd [#allocation30], 0
          %s1548 = sshll.u32 %s57, 4
          %s1549 = int_to_ptr.hbm [resolvable:$true] %s1548
          %s1550 = sshll.u32 [#allocation31], 4
          %s1551 = int_to_ptr.vmem [resolvable:$true] %s1550
          %1553 = dma.hbm_to_vmem [thread:$0]  %s1549, 16, %s1551, [#allocation30]
        $region124: #{tpu_custom_call.1} parent=11 // pred_fallthru
          _
        // Predicated region
        $region125: #{tpu_custom_call.1} parent=11 // pred_check
          %p1554 = pneg %p765
        $region126: #{tpu_custom_call.1} parent=11 // pred_check_branch
          %1556 = sbr.rel (%p1554) target = $region128
        $region127: #{tpu_custom_call.1} parent=11 // pred_region
          %1558 = vsyncadd [#allocation33], 0
          %s1559 = sshll.u32 %s59, 4
          %s1560 = int_to_ptr.hbm [resolvable:$true] %s1559
          %s1561 = sshll.u32 [#allocation32], 4
          %s1562 = int_to_ptr.vmem [resolvable:$true] %s1561
          %1567 = dma.hbm_to_vmem [thread:$0]  %s1560, 512, %s1562, [#allocation33], 128, 128, 8
        $region128: #{tpu_custom_call.1} parent=11 // pred_fallthru
          _
        // Predicated region
        $region129: #{tpu_custom_call.1} parent=11 // pred_check
          %p1568 = pneg %p786
        $region130: #{tpu_custom_call.1} parent=11 // pred_check_branch
          %1570 = sbr.rel (%p1568) target = $region132
        $region131: #{tpu_custom_call.1} parent=11 // pred_region
          %1572 = vsyncadd [#allocation33], 0
          %s1574 = sshll.u32 %s61, 4
          %s1575 = int_to_ptr.hbm [resolvable:$true] %s1574
          %s1576 = sshll.u32 [#allocation34], 4
          %s1577 = int_to_ptr.vmem [resolvable:$true] %s1576
          %1579 = dma.hbm_to_vmem [thread:$0]  %s1575, 16, %s1577, [#allocation33]
        $region132: #{tpu_custom_call.1} parent=11 // pred_fallthru
          _
        // Predicated region
        $region133: #{tpu_custom_call.1} parent=11 // pred_check
          %p1580 = pneg %p807
        $region134: #{tpu_custom_call.1} parent=11 // pred_check_branch
          %1582 = sbr.rel (%p1580) target = $region136
        $region135: #{tpu_custom_call.1} parent=11 // pred_region
          _
        $region136: #{tpu_custom_call.1} parent=11 // pred_fallthru
          _
        // Predicated region
        $region137: #{tpu_custom_call.1} parent=11 // pred_check
          %p1583 = pneg %p828
        $region138: #{tpu_custom_call.1} parent=11 // pred_check_branch
          %1585 = sbr.rel (%p1583) target = $region140
        $region139: #{tpu_custom_call.1} parent=11 // pred_region
          %1587 = vsyncadd [#allocation36], 0
          %s1589 = sshll.u32 %s65, 4
          %s1590 = int_to_ptr.hbm [resolvable:$true] %s1589
          %s1591 = sshll.u32 [#allocation35], 4
          %s1592 = int_to_ptr.vmem [resolvable:$true] %s1591
          %1594 = dma.hbm_to_vmem [thread:$0]  %s1590, 16, %s1592, [#allocation36]
        $region140: #{tpu_custom_call.1} parent=11 // pred_fallthru
          _
        // Predicated region
        $region141: #{tpu_custom_call.1} parent=11 // pred_check
          %p1595 = pneg %p849
        $region142: #{tpu_custom_call.1} parent=11 // pred_check_branch
          %1597 = sbr.rel (%p1595) target = $region144
        $region143: #{tpu_custom_call.1} parent=11 // pred_region
          _
        $region144: #{tpu_custom_call.1} parent=11 // pred_fallthru
          _
        // Predicated region
        $region145: #{tpu_custom_call.1} parent=11 // pred_check
          %p1598 = pneg %p870
        $region146: #{tpu_custom_call.1} parent=11 // pred_check_branch
          %1600 = sbr.rel (%p1598) target = $region148
        $region147: #{tpu_custom_call.1} parent=11 // pred_region
          %1602 = vsyncadd [#allocation36], 0
          %s1604 = sshll.u32 %s69, 4
          %s1605 = int_to_ptr.hbm [resolvable:$true] %s1604
          %s1606 = sshll.u32 [#allocation37], 4
          %s1607 = int_to_ptr.vmem [resolvable:$true] %s1606
          %1609 = dma.hbm_to_vmem [thread:$0]  %s1605, 16, %s1607, [#allocation36]
        $region148: #{tpu_custom_call.1} parent=11 // pred_fallthru
          _
        // Predicated region
        $region149: #{tpu_custom_call.1} parent=11 // pred_check
          %p1610 = pneg %p891
        $region150: #{tpu_custom_call.1} parent=11 // pred_check_branch
          %1612 = sbr.rel (%p1610) target = $region152
        $region151: #{tpu_custom_call.1} parent=11 // pred_region
          _
        $region152: #{tpu_custom_call.1} parent=11 // pred_fallthru
          _
        // Predicated region
        $region153: #{tpu_custom_call.1} parent=11 // pred_check
          %p1613 = pneg %p912
        $region154: #{tpu_custom_call.1} parent=11 // pred_check_branch
          %1615 = sbr.rel (%p1613) target = $region156
        $region155: #{tpu_custom_call.1} parent=11 // pred_region
          _
        $region156: #{tpu_custom_call.1} parent=11 // pred_fallthru
          _
        // Predicated region
        $region157: #{tpu_custom_call.1} parent=11 // pred_check
          %p1616 = pneg %p933
        $region158: #{tpu_custom_call.1} parent=11 // pred_check_branch
          %1618 = sbr.rel (%p1616) target = $region160
        $region159: #{tpu_custom_call.1} parent=11 // pred_region
          _
        $region160: #{tpu_custom_call.1} parent=11 // pred_fallthru
          _
        // Predicated region
        $region161: #{tpu_custom_call.1} parent=11 // pred_check
          %p1619 = pneg %p954
        $region162: #{tpu_custom_call.1} parent=11 // pred_check_branch
          %1621 = sbr.rel (%p1619) target = $region164
        $region163: #{tpu_custom_call.1} parent=11 // pred_region
          %1623 = vsyncadd [#allocation39], 0
          %s1625 = sshll.u32 %s77, 4
          %s1626 = int_to_ptr.hbm [resolvable:$true] %s1625
          %s1627 = sshll.u32 [#allocation38], 4
          %s1628 = int_to_ptr.vmem [resolvable:$true] %s1627
          %1630 = dma.hbm_to_vmem [thread:$0]  %s1626, 16, %s1628, [#allocation39]
        $region164: #{tpu_custom_call.1} parent=11 // pred_fallthru
          _
        // Predicated region
        $region165: #{tpu_custom_call.1} parent=11 // pred_check
          %p1631 = pneg %p975
        $region166: #{tpu_custom_call.1} parent=11 // pred_check_branch
          %1633 = sbr.rel (%p1631) target = $region168
        $region167: #{tpu_custom_call.1} parent=11 // pred_region
          _
        $region168: #{tpu_custom_call.1} parent=11 // pred_fallthru
          _
        // Predicated region
        $region169: #{tpu_custom_call.1} parent=11 // pred_check
          %p1634 = pneg %p996
        $region170: #{tpu_custom_call.1} parent=11 // pred_check_branch
          %1636 = sbr.rel (%p1634) target = $region172
        $region171: #{tpu_custom_call.1} parent=11 // pred_region
          _
        $region172: #{tpu_custom_call.1} parent=11 // pred_fallthru
          _
        // Predicated region
        $region173: #{tpu_custom_call.1} parent=11 // pred_check
          %p1637 = pneg %p1017
        $region174: #{tpu_custom_call.1} parent=11 // pred_check_branch
          %1639 = sbr.rel (%p1637) target = $region176
        $region175: #{tpu_custom_call.1} parent=11 // pred_region
          %1641 = vsyncadd [#allocation39], 0
          %s1642 = sshll.u32 %s83, 4
          %s1643 = int_to_ptr.hbm [resolvable:$true] %s1642
          %s1644 = sshll.u32 [#allocation40], 4
          %s1645 = int_to_ptr.vmem [resolvable:$true] %s1644
          %1650 = dma.hbm_to_vmem [thread:$0]  %s1643, 1024, %s1645, [#allocation39], 128, 128, 8
        $region176: #{tpu_custom_call.1} parent=11 // pred_fallthru
          _
        // Predicated region
        $region177: #{tpu_custom_call.1} parent=11 // pred_check
          %p1651 = pneg %p1038
        $region178: #{tpu_custom_call.1} parent=11 // pred_check_branch
          %1653 = sbr.rel (%p1651) target = $region180
        $region179: #{tpu_custom_call.1} parent=11 // pred_region
          _
        $region180: #{tpu_custom_call.1} parent=11 // pred_fallthru
          _
        // Predicated region
        $region181: #{tpu_custom_call.1} parent=11 // pred_check
          %p1654 = pneg %p1059
        $region182: #{tpu_custom_call.1} parent=11 // pred_check_branch
          %1656 = sbr.rel (%p1654) target = $region184
        $region183: #{tpu_custom_call.1} parent=11 // pred_region
          _
        $region184: #{tpu_custom_call.1} parent=11 // pred_fallthru
          _
        // Predicated region
        $region185: #{tpu_custom_call.1} parent=11 // pred_check
          %p1657 = pneg %p1080
        $region186: #{tpu_custom_call.1} parent=11 // pred_check_branch
          %1659 = sbr.rel (%p1657) target = $region188
        $region187: #{tpu_custom_call.1} parent=11 // pred_region
          _
        $region188: #{tpu_custom_call.1} parent=11 // pred_fallthru
          _
        // Predicated region
        $region189: #{tpu_custom_call.1} parent=11 // pred_check
          %p1660 = pneg %p1101
        $region190: #{tpu_custom_call.1} parent=11 // pred_check_branch
          %1662 = sbr.rel (%p1660) target = $region192
        $region191: #{tpu_custom_call.1} parent=11 // pred_region
          %1664 = vsyncadd [#allocation42], 0
          %s1665 = sshll.u32 %s91, 4
          %s1666 = int_to_ptr.hbm [resolvable:$true] %s1665
          %s1667 = sshll.u32 [#allocation41], 4
          %s1668 = int_to_ptr.vmem [resolvable:$true] %s1667
          %1673 = dma.hbm_to_vmem [thread:$0]  %s1666, 1024, %s1668, [#allocation42], 128, 128, 8
        $region192: #{tpu_custom_call.1} parent=11 // pred_fallthru
          _
        // Predicated region
        $region193: #{tpu_custom_call.1} parent=11 // pred_check
          %p1674 = pneg %p1122
        $region194: #{tpu_custom_call.1} parent=11 // pred_check_branch
          %1676 = sbr.rel (%p1674) target = $region196
        $region195: #{tpu_custom_call.1} parent=11 // pred_region
          _
        $region196: #{tpu_custom_call.1} parent=11 // pred_fallthru
          _
        // Predicated region
        $region197: #{tpu_custom_call.1} parent=11 // pred_check
          %p1677 = pneg %p1143
        $region198: #{tpu_custom_call.1} parent=11 // pred_check_branch
          %1679 = sbr.rel (%p1677) target = $region200
        $region199: #{tpu_custom_call.1} parent=11 // pred_region
          _
        $region200: #{tpu_custom_call.1} parent=11 // pred_fallthru
          _
        // Predicated region
        $region201: #{tpu_custom_call.1} parent=11 // pred_check
          %p1680 = pneg %p1164
        $region202: #{tpu_custom_call.1} parent=11 // pred_check_branch
          %1682 = sbr.rel (%p1680) target = $region204
        $region203: #{tpu_custom_call.1} parent=11 // pred_region
          _
        $region204: #{tpu_custom_call.1} parent=11 // pred_fallthru
          _
        // Predicated region
        $region205: #{tpu_custom_call.1} parent=11 // pred_check
          %p1683 = pneg %p1185
        $region206: #{tpu_custom_call.1} parent=11 // pred_check_branch
          %1685 = sbr.rel (%p1683) target = $region208
        $region207: #{tpu_custom_call.1} parent=11 // pred_region
          _
        $region208: #{tpu_custom_call.1} parent=11 // pred_fallthru
          _
        // Predicated region
        $region209: #{tpu_custom_call.1} parent=11 // pred_check
          %p1686 = pneg %p1206
        $region210: #{tpu_custom_call.1} parent=11 // pred_check_branch
          %1688 = sbr.rel (%p1686) target = $region212
        $region211: #{tpu_custom_call.1} parent=11 // pred_region
          _
        $region212: #{tpu_custom_call.1} parent=11 // pred_fallthru
          _
        // Predicated region
        $region213: #{tpu_custom_call.1} parent=11 // pred_check
          %p1689 = pneg %p1227
        $region214: #{tpu_custom_call.1} parent=11 // pred_check_branch
          %1691 = sbr.rel (%p1689) target = $region216
        $region215: #{tpu_custom_call.1} parent=11 // pred_region
          _
        $region216: #{tpu_custom_call.1} parent=11 // pred_fallthru
          _
        // Predicated region
        $region217: #{tpu_custom_call.1} parent=11 // pred_check
          %p1692 = pneg %p1248
        $region218: #{tpu_custom_call.1} parent=11 // pred_check_branch
          %1694 = sbr.rel (%p1692) target = $region220
        $region219: #{tpu_custom_call.1} parent=11 // pred_region
          _
        $region220: #{tpu_custom_call.1} parent=11 // pred_fallthru
          _
      $region12: #{tpu_custom_call.1} parent=5 // pred_fallthru
        _
      %p1695 = scmp.lt.s32.totalorder %s130, 2
      // Predicated region
      $region221: #{tpu_custom_call.1} parent=5 // pred_check
        %p1696 = pneg %p1695
      $region222: #{tpu_custom_call.1} parent=5 // pred_check_branch
        %1698 = sbr.rel (%p1696) target = $region224
      $region223: #{tpu_custom_call.1} parent=5 // pred_region
        // Predicated region
        $region225: #{tpu_custom_call.1} parent=223 // pred_check
          %p1699 = pneg %p150
        $region226: #{tpu_custom_call.1} parent=223 // pred_check_branch
          %1701 = sbr.rel (%p1699) target = $region228
        $region227: #{tpu_custom_call.1} parent=223 // pred_region
          %p1702 = scmp.lt.s32.totalorder %s130, 1
          %s1703 = scalar_select %p1702, %s130, 1
          %s1704 = smul.addr %s1703, 8
          %s1705 = smul.addr %s1704, 8
          %s1706 = scalar_lea.vmem %s1, %s1705
        $region228: #{tpu_custom_call.1} parent=223 // pred_fallthru
          _
      $region224: #{tpu_custom_call.1} parent=5 // pred_fallthru
        _
      %p1707 = scmp.le.s32.totalorder 1, %s130
      %p1708 = scmp.lt.s32.totalorder %s130, 3
      %p1709 = pnand %p1707, %p1708
      %p1710 = pneg %p1709
      // Predicated region
      $region229: #{tpu_custom_call.1} parent=5 // pred_check
        _
      $region230: #{tpu_custom_call.1} parent=5 // pred_check_branch
        %1712 = sbr.rel (%p1709) target = $region232
      $region231: #{tpu_custom_call.1} parent=5 // pred_region
        %s1713 = ssub.s32 %s130, 1
        // Predicated region
        $region233: #{tpu_custom_call.1} parent=231 // pred_check
          %p1714 = pneg %p198
        $region234: #{tpu_custom_call.1} parent=231 // pred_check_branch
          %1716 = sbr.rel (%p1714) target = $region236
        $region235: #{tpu_custom_call.1} parent=231 // pred_region
          %1718 = dma.done [#allocation3], 16
        $region236: #{tpu_custom_call.1} parent=231 // pred_fallthru
          _
        // Predicated region
        $region237: #{tpu_custom_call.1} parent=231 // pred_check
          %p1719 = pneg %p219
        $region238: #{tpu_custom_call.1} parent=231 // pred_check_branch
          %1721 = sbr.rel (%p1719) target = $region240
        $region239: #{tpu_custom_call.1} parent=231 // pred_region
          %1723 = dma.done [#allocation6], 48
        $region240: #{tpu_custom_call.1} parent=231 // pred_fallthru
          _
        // Predicated region
        $region241: #{tpu_custom_call.1} parent=231 // pred_check
          %p1724 = pneg %p240
        $region242: #{tpu_custom_call.1} parent=231 // pred_check_branch
          %1726 = sbr.rel (%p1724) target = $region244
        $region243: #{tpu_custom_call.1} parent=231 // pred_region
          %1728 = dma.done [#allocation6], 16
        $region244: #{tpu_custom_call.1} parent=231 // pred_fallthru
          _
        // Predicated region
        $region245: #{tpu_custom_call.1} parent=231 // pred_check
          %p1729 = pneg %p282
        $region246: #{tpu_custom_call.1} parent=231 // pred_check_branch
          %1731 = sbr.rel (%p1729) target = $region248
        $region247: #{tpu_custom_call.1} parent=231 // pred_region
          %1733 = dma.done [#allocation9], 16
        $region248: #{tpu_custom_call.1} parent=231 // pred_fallthru
          _
        // Predicated region
        $region249: #{tpu_custom_call.1} parent=231 // pred_check
          %p1734 = pneg %p324
        $region250: #{tpu_custom_call.1} parent=231 // pred_check_branch
          %1736 = sbr.rel (%p1734) target = $region252
        $region251: #{tpu_custom_call.1} parent=231 // pred_region
          %1738 = dma.done [#allocation9], 16
        $region252: #{tpu_custom_call.1} parent=231 // pred_fallthru
          _
        // Predicated region
        $region253: #{tpu_custom_call.1} parent=231 // pred_check
          %p1739 = pneg %p366
        $region254: #{tpu_custom_call.1} parent=231 // pred_check_branch
          %1741 = sbr.rel (%p1739) target = $region256
        $region255: #{tpu_custom_call.1} parent=231 // pred_region
          %1743 = dma.done [#allocation12], 16
        $region256: #{tpu_custom_call.1} parent=231 // pred_fallthru
          _
        // Predicated region
        $region257: #{tpu_custom_call.1} parent=231 // pred_check
          %p1744 = pneg %p408
        $region258: #{tpu_custom_call.1} parent=231 // pred_check_branch
          %1746 = sbr.rel (%p1744) target = $region260
        $region259: #{tpu_custom_call.1} parent=231 // pred_region
          %1748 = dma.done [#allocation12], 16
        $region260: #{tpu_custom_call.1} parent=231 // pred_fallthru
          _
        // Predicated region
        $region261: #{tpu_custom_call.1} parent=231 // pred_check
          %p1749 = pneg %p429
        $region262: #{tpu_custom_call.1} parent=231 // pred_check_branch
          %1751 = sbr.rel (%p1749) target = $region264
        $region263: #{tpu_custom_call.1} parent=231 // pred_region
          %1753 = dma.done [#allocation15], 256
        $region264: #{tpu_custom_call.1} parent=231 // pred_fallthru
          _
        // Predicated region
        $region265: #{tpu_custom_call.1} parent=231 // pred_check
          %p1754 = pneg %p450
        $region266: #{tpu_custom_call.1} parent=231 // pred_check_branch
          %1756 = sbr.rel (%p1754) target = $region268
        $region267: #{tpu_custom_call.1} parent=231 // pred_region
          %1758 = dma.done [#allocation15], 16
        $region268: #{tpu_custom_call.1} parent=231 // pred_fallthru
          _
        // Predicated region
        $region269: #{tpu_custom_call.1} parent=231 // pred_check
          %p1759 = pneg %p492
        $region270: #{tpu_custom_call.1} parent=231 // pred_check_branch
          %1761 = sbr.rel (%p1759) target = $region272
        $region271: #{tpu_custom_call.1} parent=231 // pred_region
          %1763 = dma.done [#allocation18], 16
        $region272: #{tpu_custom_call.1} parent=231 // pred_fallthru
          _
        // Predicated region
        $region273: #{tpu_custom_call.1} parent=231 // pred_check
          %p1764 = pneg %p513
        $region274: #{tpu_custom_call.1} parent=231 // pred_check_branch
          %1766 = sbr.rel (%p1764) target = $region276
        $region275: #{tpu_custom_call.1} parent=231 // pred_region
          %1768 = dma.done [#allocation18], 512
        $region276: #{tpu_custom_call.1} parent=231 // pred_fallthru
          _
        // Predicated region
        $region277: #{tpu_custom_call.1} parent=231 // pred_check
          %p1769 = pneg %p534
        $region278: #{tpu_custom_call.1} parent=231 // pred_check_branch
          %1771 = sbr.rel (%p1769) target = $region280
        $region279: #{tpu_custom_call.1} parent=231 // pred_region
          %1773 = dma.done [#allocation21], 16
        $region280: #{tpu_custom_call.1} parent=231 // pred_fallthru
          _
        // Predicated region
        $region281: #{tpu_custom_call.1} parent=231 // pred_check
          %p1774 = pneg %p576
        $region282: #{tpu_custom_call.1} parent=231 // pred_check_branch
          %1776 = sbr.rel (%p1774) target = $region284
        $region283: #{tpu_custom_call.1} parent=231 // pred_region
          %1778 = dma.done [#allocation21], 16
        $region284: #{tpu_custom_call.1} parent=231 // pred_fallthru
          _
        // Predicated region
        $region285: #{tpu_custom_call.1} parent=231 // pred_check
          %p1779 = pneg %p597
        $region286: #{tpu_custom_call.1} parent=231 // pred_check_branch
          %1781 = sbr.rel (%p1779) target = $region288
        $region287: #{tpu_custom_call.1} parent=231 // pred_region
          %1783 = dma.done [#allocation24], 512
        $region288: #{tpu_custom_call.1} parent=231 // pred_fallthru
          _
        // Predicated region
        $region289: #{tpu_custom_call.1} parent=231 // pred_check
          %p1784 = pneg %p618
        $region290: #{tpu_custom_call.1} parent=231 // pred_check_branch
          %1786 = sbr.rel (%p1784) target = $region292
        $region291: #{tpu_custom_call.1} parent=231 // pred_region
          %1788 = dma.done [#allocation24], 16
        $region292: #{tpu_custom_call.1} parent=231 // pred_fallthru
          _
        // Predicated region
        $region293: #{tpu_custom_call.1} parent=231 // pred_check
          %p1789 = pneg %p660
        $region294: #{tpu_custom_call.1} parent=231 // pred_check_branch
          %1791 = sbr.rel (%p1789) target = $region296
        $region295: #{tpu_custom_call.1} parent=231 // pred_region
          %1793 = dma.done [#allocation27], 16
        $region296: #{tpu_custom_call.1} parent=231 // pred_fallthru
          _
        // Predicated region
        $region297: #{tpu_custom_call.1} parent=231 // pred_check
          %p1794 = pneg %p681
        $region298: #{tpu_custom_call.1} parent=231 // pred_check_branch
          %1796 = sbr.rel (%p1794) target = $region300
        $region299: #{tpu_custom_call.1} parent=231 // pred_region
          %1798 = dma.done [#allocation27], 512
        $region300: #{tpu_custom_call.1} parent=231 // pred_fallthru
          _
        // Predicated region
        $region301: #{tpu_custom_call.1} parent=231 // pred_check
          %p1799 = pneg %p702
        $region302: #{tpu_custom_call.1} parent=231 // pred_check_branch
          %1801 = sbr.rel (%p1799) target = $region304
        $region303: #{tpu_custom_call.1} parent=231 // pred_region
          %1803 = dma.done [#allocation30], 16
        $region304: #{tpu_custom_call.1} parent=231 // pred_fallthru
          _
        // Predicated region
        $region305: #{tpu_custom_call.1} parent=231 // pred_check
          %p1804 = pneg %p744
        $region306: #{tpu_custom_call.1} parent=231 // pred_check_branch
          %1806 = sbr.rel (%p1804) target = $region308
        $region307: #{tpu_custom_call.1} parent=231 // pred_region
          %1808 = dma.done [#allocation30], 16
        $region308: #{tpu_custom_call.1} parent=231 // pred_fallthru
          _
        // Predicated region
        $region309: #{tpu_custom_call.1} parent=231 // pred_check
          %p1809 = pneg %p765
        $region310: #{tpu_custom_call.1} parent=231 // pred_check_branch
          %1811 = sbr.rel (%p1809) target = $region312
        $region311: #{tpu_custom_call.1} parent=231 // pred_region
          %1813 = dma.done [#allocation33], 512
        $region312: #{tpu_custom_call.1} parent=231 // pred_fallthru
          _
        // Predicated region
        $region313: #{tpu_custom_call.1} parent=231 // pred_check
          %p1814 = pneg %p786
        $region314: #{tpu_custom_call.1} parent=231 // pred_check_branch
          %1816 = sbr.rel (%p1814) target = $region316
        $region315: #{tpu_custom_call.1} parent=231 // pred_region
          %1818 = dma.done [#allocation33], 16
        $region316: #{tpu_custom_call.1} parent=231 // pred_fallthru
          _
        // Predicated region
        $region317: #{tpu_custom_call.1} parent=231 // pred_check
          %p1819 = pneg %p828
        $region318: #{tpu_custom_call.1} parent=231 // pred_check_branch
          %1821 = sbr.rel (%p1819) target = $region320
        $region319: #{tpu_custom_call.1} parent=231 // pred_region
          %1823 = dma.done [#allocation36], 16
        $region320: #{tpu_custom_call.1} parent=231 // pred_fallthru
          _
        // Predicated region
        $region321: #{tpu_custom_call.1} parent=231 // pred_check
          %p1824 = pneg %p870
        $region322: #{tpu_custom_call.1} parent=231 // pred_check_branch
          %1826 = sbr.rel (%p1824) target = $region324
        $region323: #{tpu_custom_call.1} parent=231 // pred_region
          %1828 = dma.done [#allocation36], 16
        $region324: #{tpu_custom_call.1} parent=231 // pred_fallthru
          _
        // Predicated region
        $region325: #{tpu_custom_call.1} parent=231 // pred_check
          %p1829 = pneg %p954
        $region326: #{tpu_custom_call.1} parent=231 // pred_check_branch
          %1831 = sbr.rel (%p1829) target = $region328
        $region327: #{tpu_custom_call.1} parent=231 // pred_region
          %1833 = dma.done [#allocation39], 16
        $region328: #{tpu_custom_call.1} parent=231 // pred_fallthru
          _
        // Predicated region
        $region329: #{tpu_custom_call.1} parent=231 // pred_check
          %p1834 = pneg %p1017
        $region330: #{tpu_custom_call.1} parent=231 // pred_check_branch
          %1836 = sbr.rel (%p1834) target = $region332
        $region331: #{tpu_custom_call.1} parent=231 // pred_region
          %1838 = dma.done [#allocation39], 1024
        $region332: #{tpu_custom_call.1} parent=231 // pred_fallthru
          _
        // Predicated region
        $region333: #{tpu_custom_call.1} parent=231 // pred_check
          %p1839 = pneg %p1101
        $region334: #{tpu_custom_call.1} parent=231 // pred_check_branch
          %1841 = sbr.rel (%p1839) target = $region336
        $region335: #{tpu_custom_call.1} parent=231 // pred_region
          %1843 = dma.done [#allocation42], 1024
        $region336: #{tpu_custom_call.1} parent=231 // pred_fallthru
          _
        %p1844 = scmp.lt.s32.totalorder %s135, 1
        %s1845 = scalar_select %p1844, %s135, 1
        %s1846 = smul.addr %s1845, 8
        %s1847 = smul.addr %s1846, 8
        %s1848 = scalar_lea.vmem %s1, %s1847
        %p1849 = pneg %p156
        %p1850 = pneg %p153
        %p1851 = pneg %p177
        %p1852 = pneg %p174
        %p1853 = pneg %p198
        %p1854 = pneg %p195
        %p1855 = pneg %p219
        %p1856 = pneg %p216
        %p1857 = pneg %p240
        %p1858 = pneg %p237
        %p1859 = pneg %p261
        %p1860 = pneg %p258
        %p1861 = pneg %p282
        %p1862 = pneg %p279
        %p1863 = pneg %p303
        %p1864 = pneg %p300
        %p1865 = pneg %p324
        %p1866 = pneg %p321
        %p1867 = pneg %p345
        %p1868 = pneg %p342
        %p1869 = pneg %p366
        %p1870 = pneg %p363
        %p1871 = pneg %p387
        %p1872 = pneg %p384
        %p1873 = pneg %p408
        %p1874 = pneg %p405
        %p1875 = pneg %p429
        %p1876 = pneg %p426
        %p1877 = pneg %p450
        %p1878 = pneg %p447
        %p1879 = pneg %p471
        %p1880 = pneg %p468
        %p1881 = pneg %p492
        %p1882 = pneg %p489
        %p1883 = pneg %p513
        %p1884 = pneg %p510
        %p1885 = pneg %p534
        %p1886 = pneg %p531
        %p1887 = pneg %p555
        %p1888 = pneg %p552
        %p1889 = pneg %p576
        %p1890 = pneg %p573
        %p1891 = pneg %p597
        %p1892 = pneg %p594
        %p1893 = pneg %p618
        %p1894 = pneg %p615
        %p1895 = pneg %p639
        %p1896 = pneg %p636
        %p1897 = pneg %p660
        %p1898 = pneg %p657
        %p1899 = pneg %p681
        %p1900 = pneg %p678
        %p1901 = pneg %p702
        %p1902 = pneg %p699
        %p1903 = pneg %p723
        %p1904 = pneg %p720
        %p1905 = pneg %p744
        %p1906 = pneg %p741
        %p1907 = pneg %p765
        %p1908 = pneg %p762
        %p1909 = pneg %p786
        %p1910 = pneg %p783
        %p1911 = pneg %p807
        %p1912 = pneg %p804
        %p1913 = pneg %p828
        %p1914 = pneg %p825
        %p1915 = pneg %p849
        %p1916 = pneg %p846
        %p1917 = pneg %p870
        %p1918 = pneg %p867
        %p1919 = pneg %p891
        %p1920 = pneg %p888
        %p1921 = pneg %p912
        %p1922 = pneg %p909
        %p1923 = pneg %p933
        %p1924 = pneg %p930
        %p1925 = pneg %p954
        %p1926 = pneg %p951
        %p1927 = pneg %p975
        %p1928 = pneg %p972
        %p1929 = pneg %p996
        %p1930 = pneg %p993
        %p1931 = pneg %p1017
        %p1932 = pneg %p1014
        %p1933 = pneg %p1038
        %p1934 = pneg %p1035
        %p1935 = pneg %p1059
        %p1936 = pneg %p1056
        %p1937 = pneg %p1080
        %p1938 = pneg %p1077
        %p1939 = pneg %p1101
        %p1940 = pneg %p1098
        %p1941 = pneg %p1122
        %p1942 = pneg %p1119
        %p1943 = pneg %p1143
        %p1944 = pneg %p1140
        %p1945 = pneg %p1164
        %p1946 = pneg %p1161
        %p1947 = pneg %p1185
        %p1948 = pneg %p1182
        %p1949 = pneg %p1206
        %p1950 = pneg %p1203
        %p1951 = pneg %p1227
        %p1952 = pneg %p1224
        %p1953 = pneg %p1248
        %p1954 = pneg %p1245
        %p1955 = pneg %p1274
        %p1956 = pneg %p1271
        %s1957 = sand.u32 %s1261, 1
        %s1958 = scalar_lea.sflag [#allocation4], %s1957
        %s1959 = sand.u32 %s1261, 1
        %s1960 = scalar_lea.vmem [#allocation43], %s1959
        %p1961 = scmp.lt.s32.totalorder %s135, 1
        %s1962 = scalar_select %p1961, %s135, 1
        %s1963 = smul.addr %s1962, 8
        %s1964 = smul.addr %s1963, 8
        %s1965 = scalar_lea.vmem %s1, %s1964
        %v1966 = vld [vmem:[%s1965] sm:$0xff]
        %v1967 = vld [vmem:[%s1965 + $0x8] sm:$0xff]
        %v1968 = vld [vmem:[%s1965 + $0x10] sm:$0xff]
        %v1969 = vld [vmem:[%s1965 + $0x18] sm:$0xff]
        %v1970 = vld [vmem:[%s1965 + $0x20] sm:$0xff]
        %v1971 = vld [vmem:[%s1965 + $0x28] sm:$0xff]
        %v1972 = vld [vmem:[%s1965 + $0x30] sm:$0xff]
        %v1973 = vld [vmem:[%s1965 + $0x38] sm:$0xff]
        %v1974 = vld [vmem:[%s3] sm:$0xff]
        %v1975 = vld [vmem:[%s3 + $0x8] sm:$0xf]
        %v1976 = vld [vmem:[#allocation2] sm:$0x1]
        %v1978 = vperm.slane %v1976, 0
        %vm1980 = vcmask 97280
        %v1982 = vsel %vm1980, %v1966, 0
        %v1985 = vsel %vm1980, %v1967, 0
        %v1988 = vsel %vm1980, %v1968, 0
        %v1991 = vsel %vm1980, %v1969, 0
        %v1994 = vsel %vm1980, %v1970, 0
        %v1997 = vsel %vm1980, %v1971, 0
        %v2000 = vsel %vm1980, %v1972, 0
        %v2003 = vsel %vm1980, %v1973, 0
        %vm2005 = vcmask 1043456
        %v2007 = vsel %vm2005, %v1975, 0
        %2009 = vmatpush.msra.mxu0 0.0
        %2010 = vmatpush.msra.mxu0 0.0
        %2011 = vmatpush.msra.mxu0 0.0
        %2012 = vmatpush.msra.mxu0 0.0
        %2013 = vmatpush.msra.mxu0 0.0
        %2014 = vmatpush.msra.mxu0 0.0
        %2015 = vmatpush.msra.mxu0 0.0
        %2016 = vmatpush.msra.mxu0 0.0
        %2017 = vmatpush.msra.mxu0 0.0
        %2018 = vmatpush.msra.mxu0 0.0
        %2019 = vmatpush.msra.mxu0 0.0
        %2020 = vmatpush.msra.mxu0 0.0
        %2021 = vmatpush.msra.mxu0 0.0
        %2022 = vmatpush.msra.mxu0 0.0
        %2023 = vmatpush.msra.mxu0 %v2007
        %2024 = vmatpush.msra.mxu0 %v1974
        %2025 = vmatmul.f32.gmra.mxu0 %v1982
        %v2026 = vpop.f32.mrf.mxu0
        %v2027 = vadd.f32 %v1978, %v2026
        %2028 = vmatmul.f32.gmra.mxu0 %v1985
        %v2029 = vpop.f32.mrf.mxu0
        %v2030 = vadd.f32 %v1978, %v2029
        %2031 = vmatmul.f32.gmra.mxu0 %v1988
        %v2032 = vpop.f32.mrf.mxu0
        %v2033 = vadd.f32 %v1978, %v2032
        %2034 = vmatmul.f32.gmra.mxu0 %v1991
        %v2035 = vpop.f32.mrf.mxu0
        %v2036 = vadd.f32 %v1978, %v2035
        %2037 = vmatmul.f32.gmra.mxu0 %v1994
        %v2038 = vpop.f32.mrf.mxu0
        %v2039 = vadd.f32 %v1978, %v2038
        %2040 = vmatmul.f32.gmra.mxu0 %v1997
        %v2041 = vpop.f32.mrf.mxu0
        %v2042 = vadd.f32 %v1978, %v2041
        %2043 = vmatmul.f32.gmra.mxu0 %v2000
        %v2044 = vpop.f32.mrf.mxu0
        %v2045 = vadd.f32 %v1978, %v2044
        %2046 = vmatmul.f32.gmra.mxu0 %v2003
        %v2047 = vpop.f32.mrf.mxu0
        %v2048 = vadd.f32 %v1978, %v2047
        %2049 = vdwg.mxu0
        %v2050 = vmax.f32 %v2027, 0.0
        %v2051 = vmax.f32 %v2030, 0.0
        %v2052 = vmax.f32 %v2033, 0.0
        %v2053 = vmax.f32 %v2036, 0.0
        %v2054 = vmax.f32 %v2039, 0.0
        %v2055 = vmax.f32 %v2042, 0.0
        %v2056 = vmax.f32 %v2045, 0.0
        %v2057 = vmax.f32 %v2048, 0.0
        %v2058 = vlaneseq
        %v2059 = vshrl.u32 %v2058, 7
        %v2060 = vadd.s32 %v2059, 8
        %v2061 = vadd.s32 %v2059, 16
        %v2062 = vadd.s32 %v2059, 24
        %v2063 = vlaneseq
        %v2064 = vand.u32 %v2063, 127
        %v2065 = vmul.u32 %v2059, 2
        %v2066 = vmul.u32 %v2060, 2
        %v2067 = vmul.u32 %v2061, 2
        %v2068 = vmul.u32 %v2062, 2
        %vm2069 = vcmp.eq.s32.totalorder %v2064, %v2065
        %vm2070 = vcmp.eq.s32.totalorder %v2064, %v2066
        %vm2071 = vcmp.eq.s32.totalorder %v2064, %v2067
        %vm2072 = vcmp.eq.s32.totalorder %v2064, %v2068
        %v2073 = vsel %vm2069, 1, 0
        %v2074 = vsel %vm2070, 1, 0
        %v2075 = vsel %vm2071, 1, 0
        %v2076 = vsel %vm2072, 1, 0
        %v2077 = vcvt.s32.f32 %v2073
        %v2078 = vcvt.s32.f32 %v2074
        %v2079 = vcvt.s32.f32 %v2075
        %v2080 = vcvt.s32.f32 %v2076
        %vm2081 = vcmask 523264
        %v2083 = vsel %vm2081, %v2077, 0
        %v2086 = vsel %vm2081, %v2078, 0
        %v2089 = vsel %vm2081, %v2079, 0
        %v2092 = vsel %vm2081, %v2080, 0
        %2094 = vmatpush.msra.mxu0 0.0
        %2095 = vmatpush.msra.mxu0 0.0
        %2096 = vmatpush.msra.mxu0 0.0
        %2097 = vmatpush.msra.mxu0 0.0
        %2098 = vmatpush.msra.mxu0 0.0
        %2099 = vmatpush.msra.mxu0 0.0
        %2100 = vmatpush.msra.mxu0 0.0
        %2101 = vmatpush.msra.mxu0 0.0
        %2102 = vmatpush.msra.mxu0 %v2057
        %2103 = vmatpush.msra.mxu0 %v2056
        %2104 = vmatpush.msra.mxu0 %v2055
        %2105 = vmatpush.msra.mxu0 %v2054
        %2106 = vmatpush.msra.mxu0 %v2053
        %2107 = vmatpush.msra.mxu0 %v2052
        %2108 = vmatpush.msra.mxu0 %v2051
        %2109 = vmatpush.msra.mxu0 %v2050
        %2110 = vmatmul.f32.gmra.mxu0 %v2083
        %v2111 = vpop.f32.mrf.mxu0
        %v2112 = vadd.f32 0.0, %v2111
        %2113 = vmatmul.f32.gmra.mxu0 %v2086
        %v2114 = vpop.f32.mrf.mxu0
        %v2115 = vadd.f32 0.0, %v2114
        %2116 = vmatmul.f32.gmra.mxu0 %v2089
        %v2117 = vpop.f32.mrf.mxu0
        %v2118 = vadd.f32 0.0, %v2117
        %2119 = vmatmul.f32.gmra.mxu0 %v2092
        %v2120 = vpop.f32.mrf.mxu0
        %v2121 = vadd.f32 0.0, %v2120
        %2122 = vdwg.mxu0
        %vm2127 = vcmask 1040384
        %v2128 = vrot.slane %v2112, 7
        %v2129 = vrot.slane %v2115, 7
        %v2130 = vsel %vm2127, %v2128, %v2129
        %v2131 = vrot.slane %v2118, 7
        %v2132 = vsel %vm2127, %v2129, %v2131
        %v2133 = vrot.slane %v2121, 7
        %v2134 = vsel %vm2127, %v2131, %v2133
        %v2139 = vsel %vm2127, 0.0, %v2128
        %v2140 = vld [vmem:[#allocation5] sm:$0x1]
        %v2142 = vperm.slane %v2140, 0
        %v2144 = vmul.f32 %v2139, %v2142
        %v2145 = vmul.f32 %v2130, %v2142
        %v2146 = vmul.f32 %v2132, %v2142
        %v2147 = vmul.f32 %v2134, %v2142
        %s2148 = scalar_lea.vmem [#allocation5], 1
        %v2149 = vld [vmem:[%s2148] sm:$0x1]
        %v2151 = vperm.slane %v2149, 0
        %v2153 = vmul.f32 %v2112, %v2151
        %v2154 = vmul.f32 %v2115, %v2151
        %v2155 = vmul.f32 %v2118, %v2151
        %v2156 = vmul.f32 %v2121, %v2151
        %v2157 = vadd.f32 %v2144, %v2153
        %v2158 = vadd.f32 %v2145, %v2154
        %v2159 = vadd.f32 %v2146, %v2155
        %v2160 = vadd.f32 %v2147, %v2156
        %vm2161 = vcmask 1046528
        %v2162 = vrot.slane %v2112, 1
        %v2163 = vrot.slane %v2115, 1
        %v2164 = vsel %vm2161, %v2162, %v2163
        %v2165 = vrot.slane %v2118, 1
        %v2166 = vsel %vm2161, %v2163, %v2165
        %v2167 = vrot.slane %v2121, 1
        %v2168 = vsel %vm2161, %v2165, %v2167
        %v2173 = vsel %vm2161, %v2167, 0.0
        %s2174 = scalar_lea.vmem [#allocation5], 2
        %v2175 = vld [vmem:[%s2174] sm:$0x1]
        %v2177 = vperm.slane %v2175, 0
        %v2179 = vmul.f32 %v2164, %v2177
        %v2180 = vmul.f32 %v2166, %v2177
        %v2181 = vmul.f32 %v2168, %v2177
        %v2182 = vmul.f32 %v2173, %v2177
        %v2183 = vadd.f32 %v2157, %v2179
        %v2184 = vadd.f32 %v2158, %v2180
        %v2185 = vadd.f32 %v2159, %v2181
        %v2186 = vadd.f32 %v2160, %v2182
        %v2187 = vld [vmem:[#allocation7] sm:$0x1]
        %v2189 = vperm.slane %v2187, 0
        %v2191 = vadd.f32 %v2183, %v2189
        %v2192 = vadd.f32 %v2184, %v2189
        %v2193 = vadd.f32 %v2185, %v2189
        %v2194 = vadd.f32 %v2186, %v2189
        %vm2195 = vcmask 261120
        %v2196 = vsel %vm2195, %v2077, 0
        %v2198 = vsel %vm2195, %v2078, 0
        %2200 = vmatpush.msra.mxu0 0.0
        %2201 = vmatpush.msra.mxu0 0.0
        %2202 = vmatpush.msra.mxu0 0.0
        %2203 = vmatpush.msra.mxu0 0.0
        %2204 = vmatpush.msra.mxu0 0.0
        %2205 = vmatpush.msra.mxu0 0.0
        %2206 = vmatpush.msra.mxu0 0.0
        %2207 = vmatpush.msra.mxu0 0.0
        %2208 = vmatpush.msra.mxu0 0.0
        %2209 = vmatpush.msra.mxu0 0.0
        %2210 = vmatpush.msra.mxu0 0.0
        %2211 = vmatpush.msra.mxu0 0.0
        %2212 = vmatpush.msra.mxu0 %v2194
        %2213 = vmatpush.msra.mxu0 %v2193
        %2214 = vmatpush.msra.mxu0 %v2192
        %2215 = vmatpush.msra.mxu0 %v2191
        %2216 = vmatmul.f32.gmra.mxu0 %v2196
        %v2217 = vpop.f32.mrf.mxu0
        %v2218 = vadd.f32 0.0, %v2217
        %2219 = vmatmul.f32.gmra.mxu0 %v2198
        %v2220 = vpop.f32.mrf.mxu0
        %v2221 = vadd.f32 0.0, %v2220
        %2222 = vdwg.mxu0
        %v2223 = vld [vmem:[%s11] sm:$0xff]
        %v2224 = vld [vmem:[#allocation8] sm:$0x1]
        %v2226 = vperm.slane %v2224, 0
        %vm2228 = vcmask 64512
        %v2230 = vsel %vm2228, %v2218, 0
        %v2233 = vsel %vm2228, %v2221, 0
        %2235 = vmatpush.msra.mxu0 0.0
        %2236 = vmatpush.msra.mxu0 0.0
        %2237 = vmatpush.msra.mxu0 0.0
        %2238 = vmatpush.msra.mxu0 0.0
        %2239 = vmatpush.msra.mxu0 0.0
        %2240 = vmatpush.msra.mxu0 0.0
        %2241 = vmatpush.msra.mxu0 0.0
        %2242 = vmatpush.msra.mxu0 0.0
        %2243 = vmatpush.msra.mxu0 0.0
        %2244 = vmatpush.msra.mxu0 0.0
        %2245 = vmatpush.msra.mxu0 0.0
        %2246 = vmatpush.msra.mxu0 0.0
        %2247 = vmatpush.msra.mxu0 0.0
        %2248 = vmatpush.msra.mxu0 0.0
        %2249 = vmatpush.msra.mxu0 0.0
        %2250 = vmatpush.msra.mxu0 %v2223
        %2251 = vmatmul.f32.gmra.mxu0 %v2230
        %v2252 = vpop.f32.mrf.mxu0
        %v2253 = vadd.f32 %v2226, %v2252
        %2254 = vmatmul.f32.gmra.mxu0 %v2233
        %v2255 = vpop.f32.mrf.mxu0
        %v2256 = vadd.f32 %v2226, %v2255
        %2257 = vdwg.mxu0
        %v2258 = vmax.f32 %v2253, 0.0
        %v2259 = vmax.f32 %v2256, 0.0
        %v2262 = vrot.slane %v2258, 7
        %v2263 = vrot.slane %v2259, 7
        %v2264 = vsel %vm2127, %v2262, %v2263
        %v2267 = vsel %vm2127, 0.0, %v2262
        %v2268 = vld [vmem:[%s15] sm:$0x1]
        %v2270 = vperm.slane %v2268, 0
        %v2272 = vmul.f32 %v2267, %v2270
        %v2273 = vmul.f32 %v2264, %v2270
        %s2274 = scalar_lea.vmem %s15, 1
        %v2275 = vld [vmem:[%s2274] sm:$0x1]
        %v2277 = vperm.slane %v2275, 0
        %v2279 = vmul.f32 %v2258, %v2277
        %v2280 = vmul.f32 %v2259, %v2277
        %v2281 = vadd.f32 %v2272, %v2279
        %v2282 = vadd.f32 %v2273, %v2280
        %v2283 = vrot.slane %v2258, 1
        %v2284 = vrot.slane %v2259, 1
        %v2285 = vsel %vm2161, %v2283, %v2284
        %v2288 = vsel %vm2161, %v2284, 0.0
        %s2289 = scalar_lea.vmem %s15, 2
        %v2290 = vld [vmem:[%s2289] sm:$0x1]
        %v2292 = vperm.slane %v2290, 0
        %v2294 = vmul.f32 %v2285, %v2292
        %v2295 = vmul.f32 %v2288, %v2292
        %v2296 = vadd.f32 %v2281, %v2294
        %v2297 = vadd.f32 %v2282, %v2295
        %v2298 = vld [vmem:[#allocation10] sm:$0x1]
        %v2300 = vperm.slane %v2298, 0
        %v2302 = vadd.f32 %v2296, %v2300
        %v2303 = vadd.f32 %v2297, %v2300
        %v2304 = vld [vmem:[%s19] sm:$0xff]
        %v2305 = vld [vmem:[%s19 + $0x8] sm:$0xff]
        %v2306 = vld [vmem:[#allocation11] sm:$0x1]
        %v2308 = vperm.slane %v2306, 0
        %vm2310 = vcmask 130048
        %v2312 = vsel %vm2310, %v2302, 0
        %v2315 = vsel %vm2310, %v2303, 0
        %2317 = vmatpush.msra.mxu0 0.0
        %2318 = vmatpush.msra.mxu0 0.0
        %2319 = vmatpush.msra.mxu0 0.0
        %2320 = vmatpush.msra.mxu0 0.0
        %2321 = vmatpush.msra.mxu0 0.0
        %2322 = vmatpush.msra.mxu0 0.0
        %2323 = vmatpush.msra.mxu0 0.0
        %2324 = vmatpush.msra.mxu0 0.0
        %2325 = vmatpush.msra.mxu0 0.0
        %2326 = vmatpush.msra.mxu0 0.0
        %2327 = vmatpush.msra.mxu0 0.0
        %2328 = vmatpush.msra.mxu0 0.0
        %2329 = vmatpush.msra.mxu0 0.0
        %2330 = vmatpush.msra.mxu0 0.0
        %2331 = vmatpush.msra.mxu0 %v2305
        %2332 = vmatpush.msra.mxu0 %v2304
        %2333 = vmatmul.f32.gmra.mxu0 %v2312
        %v2334 = vpop.f32.mrf.mxu0
        %v2335 = vadd.f32 %v2308, %v2334
        %2336 = vmatmul.f32.gmra.mxu0 %v2315
        %v2337 = vpop.f32.mrf.mxu0
        %v2338 = vadd.f32 %v2308, %v2337
        %2339 = vdwg.mxu0
        %v2340 = vmax.f32 %v2335, 0.0
        %v2341 = vmax.f32 %v2338, 0.0
        %v2344 = vrot.slane %v2340, 7
        %v2345 = vrot.slane %v2341, 7
        %v2346 = vsel %vm2127, %v2344, %v2345
        %v2349 = vsel %vm2127, 0.0, %v2344
        %v2350 = vld [vmem:[%s23] sm:$0x1]
        %v2352 = vperm.slane %v2350, 0
        %v2354 = vmul.f32 %v2349, %v2352
        %v2355 = vmul.f32 %v2346, %v2352
        %s2356 = scalar_lea.vmem %s23, 1
        %v2357 = vld [vmem:[%s2356] sm:$0x1]
        %v2359 = vperm.slane %v2357, 0
        %v2361 = vmul.f32 %v2340, %v2359
        %v2362 = vmul.f32 %v2341, %v2359
        %v2363 = vadd.f32 %v2354, %v2361
        %v2364 = vadd.f32 %v2355, %v2362
        %v2365 = vrot.slane %v2340, 1
        %v2366 = vrot.slane %v2341, 1
        %v2367 = vsel %vm2161, %v2365, %v2366
        %v2370 = vsel %vm2161, %v2366, 0.0
        %s2371 = scalar_lea.vmem %s23, 2
        %v2372 = vld [vmem:[%s2371] sm:$0x1]
        %v2374 = vperm.slane %v2372, 0
        %v2376 = vmul.f32 %v2367, %v2374
        %v2377 = vmul.f32 %v2370, %v2374
        %v2378 = vadd.f32 %v2363, %v2376
        %v2379 = vadd.f32 %v2364, %v2377
        %v2380 = vld [vmem:[#allocation13] sm:$0x1]
        %v2382 = vperm.slane %v2380, 0
        %v2384 = vadd.f32 %v2378, %v2382
        %v2385 = vadd.f32 %v2379, %v2382
        %v2386 = vld [vmem:[#allocation14] sm:$0xff]
        %v2387 = vld [vmem:[#allocation14 + $0x8] sm:$0xff]
        %v2388 = vld [vmem:[#allocation16] sm:$0x1]
        %v2390 = vperm.slane %v2388, 0
        %v2393 = vsel %vm2310, %v2384, 0
        %v2396 = vsel %vm2310, %v2385, 0
        %2398 = vmatpush.msra.mxu0 0.0
        %2399 = vmatpush.msra.mxu0 0.0
        %2400 = vmatpush.msra.mxu0 0.0
        %2401 = vmatpush.msra.mxu0 0.0
        %2402 = vmatpush.msra.mxu0 0.0
        %2403 = vmatpush.msra.mxu0 0.0
        %2404 = vmatpush.msra.mxu0 0.0
        %2405 = vmatpush.msra.mxu0 0.0
        %2406 = vmatpush.msra.mxu0 0.0
        %2407 = vmatpush.msra.mxu0 0.0
        %2408 = vmatpush.msra.mxu0 0.0
        %2409 = vmatpush.msra.mxu0 0.0
        %2410 = vmatpush.msra.mxu0 0.0
        %2411 = vmatpush.msra.mxu0 0.0
        %2412 = vmatpush.msra.mxu0 %v2387
        %2413 = vmatpush.msra.mxu0 %v2386
        %2414 = vmatmul.f32.gmra.mxu0 %v2393
        %v2415 = vpop.f32.mrf.mxu0
        %v2416 = vadd.f32 %v2390, %v2415
        %2417 = vmatmul.f32.gmra.mxu0 %v2396
        %v2418 = vpop.f32.mrf.mxu0
        %v2419 = vadd.f32 %v2390, %v2418
        %2420 = vdwg.mxu0
        %v2421 = vmax.f32 %v2416, 0.0
        %v2422 = vmax.f32 %v2419, 0.0
        %v2425 = vrot.slane %v2421, 7
        %v2426 = vrot.slane %v2422, 7
        %v2427 = vsel %vm2127, %v2425, %v2426
        %v2430 = vsel %vm2127, 0.0, %v2425
        %v2431 = vld [vmem:[%s31] sm:$0x1]
        %v2433 = vperm.slane %v2431, 0
        %v2435 = vmul.f32 %v2430, %v2433
        %v2436 = vmul.f32 %v2427, %v2433
        %s2437 = scalar_lea.vmem %s31, 1
        %v2438 = vld [vmem:[%s2437] sm:$0x1]
        %v2440 = vperm.slane %v2438, 0
        %v2442 = vmul.f32 %v2421, %v2440
        %v2443 = vmul.f32 %v2422, %v2440
        %v2444 = vadd.f32 %v2435, %v2442
        %v2445 = vadd.f32 %v2436, %v2443
        %v2446 = vrot.slane %v2421, 1
        %v2447 = vrot.slane %v2422, 1
        %v2448 = vsel %vm2161, %v2446, %v2447
        %v2451 = vsel %vm2161, %v2447, 0.0
        %s2452 = scalar_lea.vmem %s31, 2
        %v2453 = vld [vmem:[%s2452] sm:$0x1]
        %v2455 = vperm.slane %v2453, 0
        %v2457 = vmul.f32 %v2448, %v2455
        %v2458 = vmul.f32 %v2451, %v2455
        %v2459 = vadd.f32 %v2444, %v2457
        %v2460 = vadd.f32 %v2445, %v2458
        %v2461 = vld [vmem:[#allocation17] sm:$0x1]
        %v2463 = vperm.slane %v2461, 0
        %v2465 = vadd.f32 %v2459, %v2463
        %v2466 = vadd.f32 %v2460, %v2463
        %v2467 = vld [vmem:[#allocation19] sm:$0xff]
        %v2468 = vld [vmem:[#allocation19 + $0x8] sm:$0xff]
        %v2469 = vld [vmem:[#allocation19 + $0x10] sm:$0xff]
        %v2470 = vld [vmem:[#allocation19 + $0x18] sm:$0xff]
        %v2471 = vld [vmem:[#allocation20] sm:$0x1]
        %v2473 = vperm.slane %v2471, 0
        %v2476 = vsel %vm2195, %v2465, 0
        %v2479 = vsel %vm2195, %v2466, 0
        %2481 = vmatpush.msra.mxu0 0.0
        %2482 = vmatpush.msra.mxu0 0.0
        %2483 = vmatpush.msra.mxu0 0.0
        %2484 = vmatpush.msra.mxu0 0.0
        %2485 = vmatpush.msra.mxu0 0.0
        %2486 = vmatpush.msra.mxu0 0.0
        %2487 = vmatpush.msra.mxu0 0.0
        %2488 = vmatpush.msra.mxu0 0.0
        %2489 = vmatpush.msra.mxu0 0.0
        %2490 = vmatpush.msra.mxu0 0.0
        %2491 = vmatpush.msra.mxu0 0.0
        %2492 = vmatpush.msra.mxu0 0.0
        %2493 = vmatpush.msra.mxu0 %v2470
        %2494 = vmatpush.msra.mxu0 %v2469
        %2495 = vmatpush.msra.mxu0 %v2468
        %2496 = vmatpush.msra.mxu0 %v2467
        %2497 = vmatmul.f32.gmra.mxu0 %v2476
        %v2498 = vpop.f32.mrf.mxu0
        %v2499 = vadd.f32 %v2473, %v2498
        %2500 = vmatmul.f32.gmra.mxu0 %v2479
        %v2501 = vpop.f32.mrf.mxu0
        %v2502 = vadd.f32 %v2473, %v2501
        %2503 = vdwg.mxu0
        %v2504 = vmax.f32 %v2499, 0.0
        %v2505 = vmax.f32 %v2502, 0.0
        %v2508 = vrot.slane %v2504, 7
        %v2509 = vrot.slane %v2505, 7
        %v2510 = vsel %vm2127, %v2508, %v2509
        %v2513 = vsel %vm2127, 0.0, %v2508
        %v2514 = vld [vmem:[%s39] sm:$0x1]
        %v2516 = vperm.slane %v2514, 0
        %v2518 = vmul.f32 %v2513, %v2516
        %v2519 = vmul.f32 %v2510, %v2516
        %s2520 = scalar_lea.vmem %s39, 1
        %v2521 = vld [vmem:[%s2520] sm:$0x1]
        %v2523 = vperm.slane %v2521, 0
        %v2525 = vmul.f32 %v2504, %v2523
        %v2526 = vmul.f32 %v2505, %v2523
        %v2527 = vadd.f32 %v2518, %v2525
        %v2528 = vadd.f32 %v2519, %v2526
        %v2529 = vrot.slane %v2504, 1
        %v2530 = vrot.slane %v2505, 1
        %v2531 = vsel %vm2161, %v2529, %v2530
        %v2534 = vsel %vm2161, %v2530, 0.0
        %s2535 = scalar_lea.vmem %s39, 2
        %v2536 = vld [vmem:[%s2535] sm:$0x1]
        %v2538 = vperm.slane %v2536, 0
        %v2540 = vmul.f32 %v2531, %v2538
        %v2541 = vmul.f32 %v2534, %v2538
        %v2542 = vadd.f32 %v2527, %v2540
        %v2543 = vadd.f32 %v2528, %v2541
        %v2544 = vld [vmem:[#allocation22] sm:$0x1]
        %v2546 = vperm.slane %v2544, 0
        %v2548 = vadd.f32 %v2542, %v2546
        %v2549 = vadd.f32 %v2543, %v2546
        %v2550 = vld [vmem:[#allocation23] sm:$0xff]
        %v2551 = vld [vmem:[#allocation23 + $0x8] sm:$0xff]
        %v2552 = vld [vmem:[#allocation23 + $0x10] sm:$0xff]
        %v2553 = vld [vmem:[#allocation23 + $0x18] sm:$0xff]
        %v2554 = vld [vmem:[#allocation25] sm:$0x1]
        %v2556 = vperm.slane %v2554, 0
        %v2559 = vsel %vm2195, %v2548, 0
        %v2562 = vsel %vm2195, %v2549, 0
        %2564 = vmatpush.msra.mxu0 0.0
        %2565 = vmatpush.msra.mxu0 0.0
        %2566 = vmatpush.msra.mxu0 0.0
        %2567 = vmatpush.msra.mxu0 0.0
        %2568 = vmatpush.msra.mxu0 0.0
        %2569 = vmatpush.msra.mxu0 0.0
        %2570 = vmatpush.msra.mxu0 0.0
        %2571 = vmatpush.msra.mxu0 0.0
        %2572 = vmatpush.msra.mxu0 0.0
        %2573 = vmatpush.msra.mxu0 0.0
        %2574 = vmatpush.msra.mxu0 0.0
        %2575 = vmatpush.msra.mxu0 0.0
        %2576 = vmatpush.msra.mxu0 %v2553
        %2577 = vmatpush.msra.mxu0 %v2552
        %2578 = vmatpush.msra.mxu0 %v2551
        %2579 = vmatpush.msra.mxu0 %v2550
        %2580 = vmatmul.f32.gmra.mxu0 %v2559
        %v2581 = vpop.f32.mrf.mxu0
        %v2582 = vadd.f32 %v2556, %v2581
        %2583 = vmatmul.f32.gmra.mxu0 %v2562
        %v2584 = vpop.f32.mrf.mxu0
        %v2585 = vadd.f32 %v2556, %v2584
        %2586 = vdwg.mxu0
        %v2587 = vmax.f32 %v2582, 0.0
        %v2588 = vmax.f32 %v2585, 0.0
        %v2591 = vrot.slane %v2587, 7
        %v2592 = vrot.slane %v2588, 7
        %v2593 = vsel %vm2127, %v2591, %v2592
        %v2596 = vsel %vm2127, 0.0, %v2591
        %v2597 = vld [vmem:[%s47] sm:$0x1]
        %v2599 = vperm.slane %v2597, 0
        %v2601 = vmul.f32 %v2596, %v2599
        %v2602 = vmul.f32 %v2593, %v2599
        %s2603 = scalar_lea.vmem %s47, 1
        %v2604 = vld [vmem:[%s2603] sm:$0x1]
        %v2606 = vperm.slane %v2604, 0
        %v2608 = vmul.f32 %v2587, %v2606
        %v2609 = vmul.f32 %v2588, %v2606
        %v2610 = vadd.f32 %v2601, %v2608
        %v2611 = vadd.f32 %v2602, %v2609
        %v2612 = vrot.slane %v2587, 1
        %v2613 = vrot.slane %v2588, 1
        %v2614 = vsel %vm2161, %v2612, %v2613
        %v2617 = vsel %vm2161, %v2613, 0.0
        %s2618 = scalar_lea.vmem %s47, 2
        %v2619 = vld [vmem:[%s2618] sm:$0x1]
        %v2621 = vperm.slane %v2619, 0
        %v2623 = vmul.f32 %v2614, %v2621
        %v2624 = vmul.f32 %v2617, %v2621
        %v2625 = vadd.f32 %v2610, %v2623
        %v2626 = vadd.f32 %v2611, %v2624
        %v2627 = vld [vmem:[#allocation26] sm:$0x1]
        %v2629 = vperm.slane %v2627, 0
        %v2631 = vadd.f32 %v2625, %v2629
        %v2632 = vadd.f32 %v2626, %v2629
        %v2633 = vld [vmem:[#allocation28] sm:$0xff]
        %v2634 = vld [vmem:[#allocation28 + $0x8] sm:$0xff]
        %v2635 = vld [vmem:[#allocation28 + $0x10] sm:$0xff]
        %v2636 = vld [vmem:[#allocation28 + $0x18] sm:$0xff]
        %v2637 = vld [vmem:[#allocation29] sm:$0x1]
        %v2639 = vperm.slane %v2637, 0
        %v2642 = vsel %vm2195, %v2631, 0
        %v2645 = vsel %vm2195, %v2632, 0
        %2647 = vmatpush.msra.mxu0 0.0
        %2648 = vmatpush.msra.mxu0 0.0
        %2649 = vmatpush.msra.mxu0 0.0
        %2650 = vmatpush.msra.mxu0 0.0
        %2651 = vmatpush.msra.mxu0 0.0
        %2652 = vmatpush.msra.mxu0 0.0
        %2653 = vmatpush.msra.mxu0 0.0
        %2654 = vmatpush.msra.mxu0 0.0
        %2655 = vmatpush.msra.mxu0 0.0
        %2656 = vmatpush.msra.mxu0 0.0
        %2657 = vmatpush.msra.mxu0 0.0
        %2658 = vmatpush.msra.mxu0 0.0
        %2659 = vmatpush.msra.mxu0 %v2636
        %2660 = vmatpush.msra.mxu0 %v2635
        %2661 = vmatpush.msra.mxu0 %v2634
        %2662 = vmatpush.msra.mxu0 %v2633
        %2663 = vmatmul.f32.gmra.mxu0 %v2642
        %v2664 = vpop.f32.mrf.mxu0
        %v2665 = vadd.f32 %v2639, %v2664
        %2666 = vmatmul.f32.gmra.mxu0 %v2645
        %v2667 = vpop.f32.mrf.mxu0
        %v2668 = vadd.f32 %v2639, %v2667
        %2669 = vdwg.mxu0
        %v2670 = vmax.f32 %v2665, 0.0
        %v2671 = vmax.f32 %v2668, 0.0
        %v2674 = vrot.slane %v2670, 7
        %v2675 = vrot.slane %v2671, 7
        %v2676 = vsel %vm2127, %v2674, %v2675
        %v2679 = vsel %vm2127, 0.0, %v2674
        %v2680 = vld [vmem:[%s55] sm:$0x1]
        %v2682 = vperm.slane %v2680, 0
        %v2684 = vmul.f32 %v2679, %v2682
        %v2685 = vmul.f32 %v2676, %v2682
        %s2686 = scalar_lea.vmem %s55, 1
        %v2687 = vld [vmem:[%s2686] sm:$0x1]
        %v2689 = vperm.slane %v2687, 0
        %v2691 = vmul.f32 %v2670, %v2689
        %v2692 = vmul.f32 %v2671, %v2689
        %v2693 = vadd.f32 %v2684, %v2691
        %v2694 = vadd.f32 %v2685, %v2692
        %v2695 = vrot.slane %v2670, 1
        %v2696 = vrot.slane %v2671, 1
        %v2697 = vsel %vm2161, %v2695, %v2696
        %v2700 = vsel %vm2161, %v2696, 0.0
        %s2701 = scalar_lea.vmem %s55, 2
        %v2702 = vld [vmem:[%s2701] sm:$0x1]
        %v2704 = vperm.slane %v2702, 0
        %v2706 = vmul.f32 %v2697, %v2704
        %v2707 = vmul.f32 %v2700, %v2704
        %v2708 = vadd.f32 %v2693, %v2706
        %v2709 = vadd.f32 %v2694, %v2707
        %v2710 = vld [vmem:[#allocation31] sm:$0x1]
        %v2712 = vperm.slane %v2710, 0
        %v2714 = vadd.f32 %v2708, %v2712
        %v2715 = vadd.f32 %v2709, %v2712
        %v2716 = vld [vmem:[#allocation32] sm:$0xff]
        %v2717 = vld [vmem:[#allocation32 + $0x8] sm:$0xff]
        %v2718 = vld [vmem:[#allocation32 + $0x10] sm:$0xff]
        %v2719 = vld [vmem:[#allocation32 + $0x18] sm:$0xff]
        %v2720 = vld [vmem:[#allocation34] sm:$0x1]
        %v2722 = vperm.slane %v2720, 0
        %v2725 = vsel %vm2195, %v2714, 0
        %v2728 = vsel %vm2195, %v2715, 0
        %2730 = vmatpush.msra.mxu0 0.0
        %2731 = vmatpush.msra.mxu0 0.0
        %2732 = vmatpush.msra.mxu0 0.0
        %2733 = vmatpush.msra.mxu0 0.0
        %2734 = vmatpush.msra.mxu0 0.0
        %2735 = vmatpush.msra.mxu0 0.0
        %2736 = vmatpush.msra.mxu0 0.0
        %2737 = vmatpush.msra.mxu0 0.0
        %2738 = vmatpush.msra.mxu0 0.0
        %2739 = vmatpush.msra.mxu0 0.0
        %2740 = vmatpush.msra.mxu0 0.0
        %2741 = vmatpush.msra.mxu0 0.0
        %2742 = vmatpush.msra.mxu0 %v2719
        %2743 = vmatpush.msra.mxu0 %v2718
        %2744 = vmatpush.msra.mxu0 %v2717
        %2745 = vmatpush.msra.mxu0 %v2716
        %2746 = vmatmul.f32.gmra.mxu0 %v2725
        %v2747 = vpop.f32.mrf.mxu0
        %v2748 = vadd.f32 %v2722, %v2747
        %2749 = vmatmul.f32.gmra.mxu0 %v2728
        %v2750 = vpop.f32.mrf.mxu0
        %v2751 = vadd.f32 %v2722, %v2750
        %2752 = vdwg.mxu0
        %v2753 = vmax.f32 %v2748, 0.0
        %v2754 = vmax.f32 %v2751, 0.0
        %v2757 = vrot.slane %v2753, 7
        %v2758 = vrot.slane %v2754, 7
        %v2759 = vsel %vm2127, %v2757, %v2758
        %v2762 = vsel %vm2127, 0.0, %v2757
        %v2763 = vld [vmem:[%s63] sm:$0x1]
        %v2765 = vperm.slane %v2763, 0
        %v2767 = vmul.f32 %v2762, %v2765
        %v2768 = vmul.f32 %v2759, %v2765
        %s2769 = scalar_lea.vmem %s63, 1
        %v2770 = vld [vmem:[%s2769] sm:$0x1]
        %v2772 = vperm.slane %v2770, 0
        %v2774 = vmul.f32 %v2753, %v2772
        %v2775 = vmul.f32 %v2754, %v2772
        %v2776 = vadd.f32 %v2767, %v2774
        %v2777 = vadd.f32 %v2768, %v2775
        %v2778 = vrot.slane %v2753, 1
        %v2779 = vrot.slane %v2754, 1
        %v2780 = vsel %vm2161, %v2778, %v2779
        %v2783 = vsel %vm2161, %v2779, 0.0
        %s2784 = scalar_lea.vmem %s63, 2
        %v2785 = vld [vmem:[%s2784] sm:$0x1]
        %v2787 = vperm.slane %v2785, 0
        %v2789 = vmul.f32 %v2780, %v2787
        %v2790 = vmul.f32 %v2783, %v2787
        %v2791 = vadd.f32 %v2776, %v2789
        %v2792 = vadd.f32 %v2777, %v2790
        %v2793 = vld [vmem:[#allocation35] sm:$0x1]
        %v2795 = vperm.slane %v2793, 0
        %v2797 = vadd.f32 %v2791, %v2795
        %v2798 = vadd.f32 %v2792, %v2795
        %v2799 = vld [vmem:[%s67] sm:$0xff]
        %v2800 = vld [vmem:[%s67 + $0x8] sm:$0xff]
        %v2801 = vld [vmem:[%s67 + $0x10] sm:$0xff]
        %v2802 = vld [vmem:[%s67 + $0x18] sm:$0xff]
        %v2803 = vld [vmem:[%s67 + $0x20] sm:$0xff]
        %v2804 = vld [vmem:[%s67 + $0x28] sm:$0xff]
        %v2805 = vld [vmem:[%s67 + $0x30] sm:$0xff]
        %v2806 = vld [vmem:[%s67 + $0x38] sm:$0xff]
        %v2807 = vld [vmem:[#allocation37] sm:$0x1]
        %v2809 = vperm.slane %v2807, 0
        %v2812 = vsel %vm2081, %v2797, 0
        %v2815 = vsel %vm2081, %v2798, 0
        %2817 = vmatpush.msra.mxu0 0.0
        %2818 = vmatpush.msra.mxu0 0.0
        %2819 = vmatpush.msra.mxu0 0.0
        %2820 = vmatpush.msra.mxu0 0.0
        %2821 = vmatpush.msra.mxu0 0.0
        %2822 = vmatpush.msra.mxu0 0.0
        %2823 = vmatpush.msra.mxu0 0.0
        %2824 = vmatpush.msra.mxu0 0.0
        %2825 = vmatpush.msra.mxu0 %v2806
        %2826 = vmatpush.msra.mxu0 %v2805
        %2827 = vmatpush.msra.mxu0 %v2804
        %2828 = vmatpush.msra.mxu0 %v2803
        %2829 = vmatpush.msra.mxu0 %v2802
        %2830 = vmatpush.msra.mxu0 %v2801
        %2831 = vmatpush.msra.mxu0 %v2800
        %2832 = vmatpush.msra.mxu0 %v2799
        %2833 = vmatmul.f32.gmra.mxu0 %v2812
        %v2834 = vpop.f32.mrf.mxu0
        %v2835 = vadd.f32 %v2809, %v2834
        %2836 = vmatmul.f32.gmra.mxu0 %v2815
        %v2837 = vpop.f32.mrf.mxu0
        %v2838 = vadd.f32 %v2809, %v2837
        %2839 = vdwg.mxu0
        %v2840 = vmax.f32 %v2835, 0.0
        %v2841 = vmax.f32 %v2838, 0.0
        %v2844 = vrot.slane %v2840, 7
        %v2845 = vrot.slane %v2841, 7
        %v2846 = vsel %vm2127, %v2844, %v2845
        %v2849 = vsel %vm2127, 0.0, %v2844
        %v2850 = vld [vmem:[%s71] sm:$0x1]
        %v2852 = vperm.slane %v2850, 0
        %v2854 = vmul.f32 %v2849, %v2852
        %v2855 = vmul.f32 %v2846, %v2852
        %s2856 = scalar_lea.vmem %s71, 1
        %v2857 = vld [vmem:[%s2856] sm:$0x1]
        %v2859 = vperm.slane %v2857, 0
        %v2861 = vmul.f32 %v2840, %v2859
        %v2862 = vmul.f32 %v2841, %v2859
        %v2863 = vadd.f32 %v2854, %v2861
        %v2864 = vadd.f32 %v2855, %v2862
        %v2865 = vrot.slane %v2840, 1
        %v2866 = vrot.slane %v2841, 1
        %v2867 = vsel %vm2161, %v2865, %v2866
        %v2870 = vsel %vm2161, %v2866, 0.0
        %s2871 = scalar_lea.vmem %s71, 2
        %v2872 = vld [vmem:[%s2871] sm:$0x1]
        %v2874 = vperm.slane %v2872, 0
        %v2876 = vmul.f32 %v2867, %v2874
        %v2877 = vmul.f32 %v2870, %v2874
        %v2878 = vadd.f32 %v2863, %v2876
        %v2879 = vadd.f32 %v2864, %v2877
        %v2880 = vld [vmem:[%s73] sm:$0x1]
        %v2882 = vperm.slane %v2880, 0
        %v2884 = vadd.f32 %v2878, %v2882
        %v2885 = vadd.f32 %v2879, %v2882
        %v2886 = vld [vmem:[%s75] sm:$0xff]
        %v2887 = vld [vmem:[%s75 + $0x8] sm:$0xff]
        %v2888 = vld [vmem:[%s75 + $0x10] sm:$0xff]
        %v2889 = vld [vmem:[%s75 + $0x18] sm:$0xff]
        %v2890 = vld [vmem:[%s75 + $0x20] sm:$0xff]
        %v2891 = vld [vmem:[%s75 + $0x28] sm:$0xff]
        %v2892 = vld [vmem:[%s75 + $0x30] sm:$0xff]
        %v2893 = vld [vmem:[%s75 + $0x38] sm:$0xff]
        %v2894 = vld [vmem:[#allocation38] sm:$0x1]
        %v2896 = vperm.slane %v2894, 0
        %v2899 = vsel %vm2081, %v2884, 0
        %v2902 = vsel %vm2081, %v2885, 0
        %2904 = vmatpush.msra.mxu0 0.0
        %2905 = vmatpush.msra.mxu0 0.0
        %2906 = vmatpush.msra.mxu0 0.0
        %2907 = vmatpush.msra.mxu0 0.0
        %2908 = vmatpush.msra.mxu0 0.0
        %2909 = vmatpush.msra.mxu0 0.0
        %2910 = vmatpush.msra.mxu0 0.0
        %2911 = vmatpush.msra.mxu0 0.0
        %2912 = vmatpush.msra.mxu0 %v2893
        %2913 = vmatpush.msra.mxu0 %v2892
        %2914 = vmatpush.msra.mxu0 %v2891
        %2915 = vmatpush.msra.mxu0 %v2890
        %2916 = vmatpush.msra.mxu0 %v2889
        %2917 = vmatpush.msra.mxu0 %v2888
        %2918 = vmatpush.msra.mxu0 %v2887
        %2919 = vmatpush.msra.mxu0 %v2886
        %2920 = vmatmul.f32.gmra.mxu0 %v2899
        %v2921 = vpop.f32.mrf.mxu0
        %v2922 = vadd.f32 %v2896, %v2921
        %2923 = vmatmul.f32.gmra.mxu0 %v2902
        %v2924 = vpop.f32.mrf.mxu0
        %v2925 = vadd.f32 %v2896, %v2924
        %2926 = vdwg.mxu0
        %v2927 = vmax.f32 %v2922, 0.0
        %v2928 = vmax.f32 %v2925, 0.0
        %v2931 = vrot.slane %v2927, 7
        %v2932 = vrot.slane %v2928, 7
        %v2933 = vsel %vm2127, %v2931, %v2932
        %v2936 = vsel %vm2127, 0.0, %v2931
        %v2937 = vld [vmem:[%s79] sm:$0x1]
        %v2939 = vperm.slane %v2937, 0
        %v2941 = vmul.f32 %v2936, %v2939
        %v2942 = vmul.f32 %v2933, %v2939
        %s2943 = scalar_lea.vmem %s79, 1
        %v2944 = vld [vmem:[%s2943] sm:$0x1]
        %v2946 = vperm.slane %v2944, 0
        %v2948 = vmul.f32 %v2927, %v2946
        %v2949 = vmul.f32 %v2928, %v2946
        %v2950 = vadd.f32 %v2941, %v2948
        %v2951 = vadd.f32 %v2942, %v2949
        %v2952 = vrot.slane %v2927, 1
        %v2953 = vrot.slane %v2928, 1
        %v2954 = vsel %vm2161, %v2952, %v2953
        %v2957 = vsel %vm2161, %v2953, 0.0
        %s2958 = scalar_lea.vmem %s79, 2
        %v2959 = vld [vmem:[%s2958] sm:$0x1]
        %v2961 = vperm.slane %v2959, 0
        %v2963 = vmul.f32 %v2954, %v2961
        %v2964 = vmul.f32 %v2957, %v2961
        %v2965 = vadd.f32 %v2950, %v2963
        %v2966 = vadd.f32 %v2951, %v2964
        %v2967 = vld [vmem:[%s81] sm:$0x1]
        %v2969 = vperm.slane %v2967, 0
        %v2971 = vadd.f32 %v2965, %v2969
        %v2972 = vadd.f32 %v2966, %v2969
        %v2973 = vld [vmem:[#allocation40] sm:$0xff]
        %v2974 = vld [vmem:[#allocation40 + $0x8] sm:$0xff]
        %v2975 = vld [vmem:[#allocation40 + $0x10] sm:$0xff]
        %v2976 = vld [vmem:[#allocation40 + $0x18] sm:$0xff]
        %v2977 = vld [vmem:[#allocation40 + $0x20] sm:$0xff]
        %v2978 = vld [vmem:[#allocation40 + $0x28] sm:$0xff]
        %v2979 = vld [vmem:[#allocation40 + $0x30] sm:$0xff]
        %v2980 = vld [vmem:[#allocation40 + $0x38] sm:$0xff]
        %v2981 = vld [vmem:[%s85] sm:$0x1]
        %v2983 = vperm.slane %v2981, 0
        %v2986 = vsel %vm2081, %v2971, 0
        %v2989 = vsel %vm2081, %v2972, 0
        %2991 = vmatpush.msra.mxu0 0.0
        %2992 = vmatpush.msra.mxu0 0.0
        %2993 = vmatpush.msra.mxu0 0.0
        %2994 = vmatpush.msra.mxu0 0.0
        %2995 = vmatpush.msra.mxu0 0.0
        %2996 = vmatpush.msra.mxu0 0.0
        %2997 = vmatpush.msra.mxu0 0.0
        %2998 = vmatpush.msra.mxu0 0.0
        %2999 = vmatpush.msra.mxu0 %v2980
        %3000 = vmatpush.msra.mxu0 %v2979
        %3001 = vmatpush.msra.mxu0 %v2978
        %3002 = vmatpush.msra.mxu0 %v2977
        %3003 = vmatpush.msra.mxu0 %v2976
        %3004 = vmatpush.msra.mxu0 %v2975
        %3005 = vmatpush.msra.mxu0 %v2974
        %3006 = vmatpush.msra.mxu0 %v2973
        %3007 = vmatmul.f32.gmra.mxu0 %v2986
        %v3008 = vpop.f32.mrf.mxu0
        %v3009 = vadd.f32 %v2983, %v3008
        %3010 = vmatmul.f32.gmra.mxu0 %v2989
        %v3011 = vpop.f32.mrf.mxu0
        %v3012 = vadd.f32 %v2983, %v3011
        %3013 = vdwg.mxu0
        %v3014 = vmax.f32 %v3009, 0.0
        %v3015 = vmax.f32 %v3012, 0.0
        %v3018 = vrot.slane %v3014, 7
        %v3019 = vrot.slane %v3015, 7
        %v3020 = vsel %vm2127, %v3018, %v3019
        %v3023 = vsel %vm2127, 0.0, %v3018
        %v3024 = vld [vmem:[%s87] sm:$0x1]
        %v3026 = vperm.slane %v3024, 0
        %v3028 = vmul.f32 %v3023, %v3026
        %v3029 = vmul.f32 %v3020, %v3026
        %s3030 = scalar_lea.vmem %s87, 1
        %v3031 = vld [vmem:[%s3030] sm:$0x1]
        %v3033 = vperm.slane %v3031, 0
        %v3035 = vmul.f32 %v3014, %v3033
        %v3036 = vmul.f32 %v3015, %v3033
        %v3037 = vadd.f32 %v3028, %v3035
        %v3038 = vadd.f32 %v3029, %v3036
        %v3039 = vrot.slane %v3014, 1
        %v3040 = vrot.slane %v3015, 1
        %v3041 = vsel %vm2161, %v3039, %v3040
        %v3044 = vsel %vm2161, %v3040, 0.0
        %s3045 = scalar_lea.vmem %s87, 2
        %v3046 = vld [vmem:[%s3045] sm:$0x1]
        %v3048 = vperm.slane %v3046, 0
        %v3050 = vmul.f32 %v3041, %v3048
        %v3051 = vmul.f32 %v3044, %v3048
        %v3052 = vadd.f32 %v3037, %v3050
        %v3053 = vadd.f32 %v3038, %v3051
        %v3054 = vld [vmem:[%s89] sm:$0x1]
        %v3056 = vperm.slane %v3054, 0
        %v3058 = vadd.f32 %v3052, %v3056
        %v3059 = vadd.f32 %v3053, %v3056
        %v3060 = vld [vmem:[#allocation41] sm:$0xff]
        %v3061 = vld [vmem:[#allocation41 + $0x8] sm:$0xff]
        %v3062 = vld [vmem:[#allocation41 + $0x10] sm:$0xff]
        %v3063 = vld [vmem:[#allocation41 + $0x18] sm:$0xff]
        %v3064 = vld [vmem:[#allocation41 + $0x20] sm:$0xff]
        %v3065 = vld [vmem:[#allocation41 + $0x28] sm:$0xff]
        %v3066 = vld [vmem:[#allocation41 + $0x30] sm:$0xff]
        %v3067 = vld [vmem:[#allocation41 + $0x38] sm:$0xff]
        %v3068 = vld [vmem:[%s93] sm:$0x1]
        %v3070 = vperm.slane %v3068, 0
        %v3073 = vsel %vm2081, %v3058, 0
        %v3076 = vsel %vm2081, %v3059, 0
        %3078 = vmatpush.msra.mxu0 0.0
        %3079 = vmatpush.msra.mxu0 0.0
        %3080 = vmatpush.msra.mxu0 0.0
        %3081 = vmatpush.msra.mxu0 0.0
        %3082 = vmatpush.msra.mxu0 0.0
        %3083 = vmatpush.msra.mxu0 0.0
        %3084 = vmatpush.msra.mxu0 0.0
        %3085 = vmatpush.msra.mxu0 0.0
        %3086 = vmatpush.msra.mxu0 %v3067
        %3087 = vmatpush.msra.mxu0 %v3066
        %3088 = vmatpush.msra.mxu0 %v3065
        %3089 = vmatpush.msra.mxu0 %v3064
        %3090 = vmatpush.msra.mxu0 %v3063
        %3091 = vmatpush.msra.mxu0 %v3062
        %3092 = vmatpush.msra.mxu0 %v3061
        %3093 = vmatpush.msra.mxu0 %v3060
        %3094 = vmatmul.f32.gmra.mxu0 %v3073
        %v3095 = vpop.f32.mrf.mxu0
        %v3096 = vadd.f32 %v3070, %v3095
        %3097 = vmatmul.f32.gmra.mxu0 %v3076
        %v3098 = vpop.f32.mrf.mxu0
        %v3099 = vadd.f32 %v3070, %v3098
        %3100 = vdwg.mxu0
        %v3101 = vmax.f32 %v3096, 0.0
        %v3102 = vmax.f32 %v3099, 0.0
        %v3105 = vrot.slane %v3101, 7
        %v3106 = vrot.slane %v3102, 7
        %v3107 = vsel %vm2127, %v3105, %v3106
        %v3110 = vsel %vm2127, 0.0, %v3105
        %v3111 = vld [vmem:[%s95] sm:$0x1]
        %v3113 = vperm.slane %v3111, 0
        %v3115 = vmul.f32 %v3110, %v3113
        %v3116 = vmul.f32 %v3107, %v3113
        %s3117 = scalar_lea.vmem %s95, 1
        %v3118 = vld [vmem:[%s3117] sm:$0x1]
        %v3120 = vperm.slane %v3118, 0
        %v3122 = vmul.f32 %v3101, %v3120
        %v3123 = vmul.f32 %v3102, %v3120
        %v3124 = vadd.f32 %v3115, %v3122
        %v3125 = vadd.f32 %v3116, %v3123
        %v3126 = vrot.slane %v3101, 1
        %v3127 = vrot.slane %v3102, 1
        %v3128 = vsel %vm2161, %v3126, %v3127
        %v3131 = vsel %vm2161, %v3127, 0.0
        %s3132 = scalar_lea.vmem %s95, 2
        %v3133 = vld [vmem:[%s3132] sm:$0x1]
        %v3135 = vperm.slane %v3133, 0
        %v3137 = vmul.f32 %v3128, %v3135
        %v3138 = vmul.f32 %v3131, %v3135
        %v3139 = vadd.f32 %v3124, %v3137
        %v3140 = vadd.f32 %v3125, %v3138
        %v3141 = vld [vmem:[%s97] sm:$0x1]
        %v3143 = vperm.slane %v3141, 0
        %v3145 = vadd.f32 %v3139, %v3143
        %v3146 = vadd.f32 %v3140, %v3143
        %v3147 = vld [vmem:[%s99] sm:$0xff]
        %v3148 = vld [vmem:[%s99 + $0x8] sm:$0xff]
        %v3149 = vld [vmem:[%s99 + $0x10] sm:$0xff]
        %v3150 = vld [vmem:[%s99 + $0x18] sm:$0xff]
        %v3151 = vld [vmem:[%s99 + $0x20] sm:$0xff]
        %v3152 = vld [vmem:[%s99 + $0x28] sm:$0xff]
        %v3153 = vld [vmem:[%s99 + $0x30] sm:$0xff]
        %v3154 = vld [vmem:[%s99 + $0x38] sm:$0xff]
        %v3155 = vld [vmem:[%s99 + $0x40] sm:$0xff]
        %v3156 = vld [vmem:[%s99 + $0x48] sm:$0xff]
        %v3157 = vld [vmem:[%s99 + $0x50] sm:$0xff]
        %v3158 = vld [vmem:[%s99 + $0x58] sm:$0xff]
        %v3159 = vld [vmem:[%s99 + $0x60] sm:$0xff]
        %v3160 = vld [vmem:[%s99 + $0x68] sm:$0xff]
        %v3161 = vld [vmem:[%s99 + $0x70] sm:$0xff]
        %v3162 = vld [vmem:[%s99 + $0x78] sm:$0xff]
        %v3163 = vld [vmem:[%s101] sm:$0x1]
        %v3165 = vperm.slane %v3163, 0
        %3167 = vmatpush.msra.mxu0 %v3162
        %3168 = vmatpush.msra.mxu0 %v3161
        %3169 = vmatpush.msra.mxu0 %v3160
        %3170 = vmatpush.msra.mxu0 %v3159
        %3171 = vmatpush.msra.mxu0 %v3158
        %3172 = vmatpush.msra.mxu0 %v3157
        %3173 = vmatpush.msra.mxu0 %v3156
        %3174 = vmatpush.msra.mxu0 %v3155
        %3175 = vmatpush.msra.mxu0 %v3154
        %3176 = vmatpush.msra.mxu0 %v3153
        %3177 = vmatpush.msra.mxu0 %v3152
        %3178 = vmatpush.msra.mxu0 %v3151
        %3179 = vmatpush.msra.mxu0 %v3150
        %3180 = vmatpush.msra.mxu0 %v3149
        %3181 = vmatpush.msra.mxu0 %v3148
        %3182 = vmatpush.msra.mxu0 %v3147
        %3183 = vmatmul.f32.gmra.mxu0 %v3145
        %v3184 = vpop.f32.mrf.mxu0
        %v3185 = vadd.f32 %v3165, %v3184
        %3186 = vmatmul.f32.gmra.mxu0 %v3146
        %v3187 = vpop.f32.mrf.mxu0
        %v3188 = vadd.f32 %v3165, %v3187
        %3189 = vdwg.mxu0
        %v3190 = vmax.f32 %v3185, 0.0
        %v3191 = vmax.f32 %v3188, 0.0
        %v3192 = vadd.f32 %v3190, %v3191
        %v3193 = vrot.slane %v3192, 4
        %v3194 = vadd.f32 %v3192, %v3193
        %v3195 = vrot.slane %v3194, 2
        %v3196 = vadd.f32 %v3194, %v3195
        %v3197 = vrot.slane %v3196, 1
        %v3198 = vadd.f32 %v3196, %v3197
        %v3199 = vrcp.pop 16.0
        %v3200 = vmul.f32 16.0, %v3199
        %v3201 = vsub.f32 1.0, %v3200
        %v3202 = vmul.f32 %v3199, %v3201
        %v3203 = vadd.f32 %v3199, %v3202
        %vm3204 = vweird.f32 %v3199
        %v3205 = vsel %vm3204, %v3199, %v3203
        %v3206 = vmul.f32 %v3198, %v3205
        %v3207 = vld [vmem:[%s103] sm:$0xff]
        %v3208 = vld [vmem:[%s103 + $0x8] sm:$0xff]
        %v3209 = vld [vmem:[%s103 + $0x10] sm:$0xff]
        %v3210 = vld [vmem:[%s103 + $0x18] sm:$0xff]
        %v3211 = vld [vmem:[%s103 + $0x20] sm:$0xff]
        %v3212 = vld [vmem:[%s103 + $0x28] sm:$0xff]
        %v3213 = vld [vmem:[%s103 + $0x30] sm:$0xff]
        %v3214 = vld [vmem:[%s103 + $0x38] sm:$0xff]
        %v3215 = vld [vmem:[%s103 + $0x40] sm:$0xff]
        %v3216 = vld [vmem:[%s103 + $0x48] sm:$0xff]
        %v3217 = vld [vmem:[%s103 + $0x50] sm:$0xff]
        %v3218 = vld [vmem:[%s103 + $0x58] sm:$0xff]
        %v3219 = vld [vmem:[%s103 + $0x60] sm:$0xff]
        %v3220 = vld [vmem:[%s103 + $0x68] sm:$0xff]
        %v3221 = vld [vmem:[%s103 + $0x70] sm:$0xff]
        %v3222 = vld [vmem:[%s103 + $0x78] sm:$0xff]
        %v3223 = vld [vmem:[%s105] sm:$0x1]
        %3224 = vmatpush.msra.mxu0 %v3222
        %3225 = vmatpush.msra.mxu0 %v3221
        %3226 = vmatpush.msra.mxu0 %v3220
        %3227 = vmatpush.msra.mxu0 %v3219
        %3228 = vmatpush.msra.mxu0 %v3218
        %3229 = vmatpush.msra.mxu0 %v3217
        %3230 = vmatpush.msra.mxu0 %v3216
        %3231 = vmatpush.msra.mxu0 %v3215
        %3232 = vmatpush.msra.mxu0 %v3214
        %3233 = vmatpush.msra.mxu0 %v3213
        %3234 = vmatpush.msra.mxu0 %v3212
        %3235 = vmatpush.msra.mxu0 %v3211
        %3236 = vmatpush.msra.mxu0 %v3210
        %3237 = vmatpush.msra.mxu0 %v3209
        %3238 = vmatpush.msra.mxu0 %v3208
        %3239 = vmatpush.msra.mxu0 %v3207
        %3240 = vmatmul.f32.gmra.mxu0 %v3206
        %v3241 = vpop.f32.mrf.mxu0
        %v3242 = vadd.f32 %v3223, %v3241
        %3243 = vdwg.mxu0
        %vm3244 = vcmask 122880
        %3245 = vst.msk [vmem:[%s1960] sm:$0x1] %vm3244, %v3242
        %s3246 = sand.u32 %s1261, 1
        %s3247 = scalar_lea.sflag [#allocation4], %s3246
        %s3248 = sand.u32 %s1261, 1
        %s3249 = scalar_lea.vmem [#allocation43], %s3248
        // Predicated region
        $region337: #{tpu_custom_call.1} parent=231 // pred_check
          %p3250 = pneg %p1271
        $region338: #{tpu_custom_call.1} parent=231 // pred_check_branch
          %3252 = sbr.rel (%p3250) target = $region340
        $region339: #{tpu_custom_call.1} parent=231 // pred_region
          %3254 = vsyncadd %s3247, 0
          %s3255 = scalar_lea.hbm %s107, %s135
          %s3257 = sshll.u32 %s3249, 4
          %s3258 = int_to_ptr.vmem [resolvable:$true] %s3257
          %s3259 = sshll.u32 %s3255, 4
          %s3260 = int_to_ptr.hbm [resolvable:$true] %s3259
          %3262 = dma.vmem_to_hbm [thread:$0]  %s3258, 16, %s3260, %s3247
        $region340: #{tpu_custom_call.1} parent=231 // pred_fallthru
          _
      $region232: #{tpu_custom_call.1} parent=5 // pred_fallthru
        _
      %p3263 = scmp.le.s32.totalorder 2, %s130
      // Predicated region
      $region341: #{tpu_custom_call.1} parent=5 // pred_check
        %p3264 = pneg %p3263
      $region342: #{tpu_custom_call.1} parent=5 // pred_check_branch
        %3266 = sbr.rel (%p3264) target = $region344
      $region343: #{tpu_custom_call.1} parent=5 // pred_region
        %s3267 = ssub.s32 %s130, 2
        // Predicated region
        $region345: #{tpu_custom_call.1} parent=343 // pred_check
          %p3268 = pneg %p1277
        $region346: #{tpu_custom_call.1} parent=343 // pred_check_branch
          %3270 = sbr.rel (%p3268) target = $region348
        $region347: #{tpu_custom_call.1} parent=343 // pred_region
          %s3271 = sand.u32 %s1262, 1
          %s3272 = scalar_lea.sflag [#allocation4], %s3271
          %s3273 = sand.u32 %s1262, 1
          %s3274 = scalar_lea.vmem [#allocation43], %s3273
          %3276 = dma.done %s3272, 16
        $region348: #{tpu_custom_call.1} parent=343 // pred_fallthru
          _
      $region344: #{tpu_custom_call.1} parent=5 // pred_fallthru
        _
    $region6: #{tpu_custom_call.1} parent=1 // loop_footer
      %s134 = sadd.s32 1, %s130
    $region7: #{tpu_custom_call.1} parent=1 // loop_footer_branch
      %129 = sbr.rel target = $region3
    $region8: #{tpu_custom_call.1} parent=1 // loop_exit
      _
    %3277 = vsyncpa [#allocation3], 1
    %s3278 = scalar_lea.sflag [#allocation3], 1
    %3279 = vsyncpa %s3278, 1
    %3280 = vsyncpa [#allocation6], 1
    %3281 = vsyncpa [#allocation9], 1
    %3282 = vsyncpa [#allocation12], 1
    %3283 = vsyncpa [#allocation15], 1
    %3284 = vsyncpa [#allocation18], 1
    %3285 = vsyncpa [#allocation21], 1
    %3286 = vsyncpa [#allocation24], 1
    %3287 = vsyncpa [#allocation27], 1
    %3288 = vsyncpa [#allocation30], 1
    %3289 = vsyncpa [#allocation33], 1
    %3290 = vsyncpa [#allocation36], 1
    %3291 = vsyncpa [#allocation39], 1
    %3292 = vsyncpa [#allocation42], 1
    %3293 = vsyncpa [#allocation4], 1
    %s3294 = scalar_lea.sflag [#allocation4], 1
    %3295 = vsyncpa %s3294, 1

</llo_original>
